<compile_context>
chip_gen: v7x
topology: tpu7x:2x2x1
jax: 0.10.0
libtpu: 0.0.40
codegen_flags: <defaults>
</compile_context>

<pallas_src>
import functools

import jax
import jax.numpy as jnp
import numpy as np
from jax import lax
from jax.experimental import pallas as pl
from jax.experimental.pallas import tpu as pltpu


# ---------------------------------------------------------------------------
# Fused kernel: conv1+BN1+ReLU -> conv2+BN2+ReLU -> conv3+BN3 (+ shortcut) -> ReLU
# ---------------------------------------------------------------------------
def _conv_block_kernel(x_ref, ypos_ref, xpos_ref, w1_ref, wsc_ref, w2_ref,
                       w3_ref, b1_ref, bsc_ref, b2_ref, b3_ref, o_ref,
                       *, k, pad, H, W):
    rows = x_ref.shape[0]               # G * H * W flattened output pixels
    f2 = w2_ref.shape[-1]
    cdtype = w2_ref.dtype               # MXU compute dtype (bf16 or f32)

    x = x_ref[...]

    # conv1 (1x1, BN1 scale pre-folded into w1) + shift + ReLU; stays in f32/VMEM.
    h1 = jnp.maximum(
        jnp.dot(x, w1_ref[...], preferred_element_type=jnp.float32) + b1_ref[...],
        0.0)

    # conv2 (k x k, stride 1, "same") as k*k tap matmuls.  Tap (dy,dx) of the
    # row-flattened image is the flat slab rolled by (dy-pad)*W + (dx-pad) rows
    # (XLU roll, no sublane-offset relayout copies) with out-of-image rows
    # masked to zero via precomputed per-row (y,x) positions.
    if k > 1:
        y_pos = ypos_ref[...]           # (rows, 1) int32 position inside image
        x_pos = xpos_ref[...]
    acc = jnp.zeros((rows, f2), jnp.float32)
    for dy in range(k):                 # static, unrolled
        for dx in range(k):
            oy, ox = dy - pad, dx - pad
            delta = oy * W + ox
            tap = pltpu.roll(h1, shift=(-delta) % rows, axis=0) if delta else h1
            conds = []
            if oy > 0:
                conds.append(y_pos < H - oy)
            elif oy < 0:
                conds.append(y_pos >= -oy)
            if ox > 0:
                conds.append(x_pos < W - ox)
            elif ox < 0:
                conds.append(x_pos >= -ox)
            if conds:
                valid = functools.reduce(lambda a, b: a & b, conds)
                tap = jnp.where(valid, tap, 0.0)
            acc = acc + jnp.dot(tap.astype(cdtype), w2_ref[dy * k + dx],
                                preferred_element_type=jnp.float32)
    h2 = jnp.maximum(acc + b2_ref[...], 0.0)          # BN2 (scale folded) + ReLU

    # conv3 (1x1) + BN3, shortcut conv (1x1) + BN_sc from the SAME streamed x
    # tile, residual add, final ReLU.  Nothing intermediate leaves VMEM.
    y = jnp.dot(h2.astype(cdtype), w3_ref[...], preferred_element_type=jnp.float32)
    sc = jnp.dot(x, wsc_ref[...], preferred_element_type=jnp.float32)
    o_ref[...] = jnp.maximum(y + b3_ref[...] + sc + bsc_ref[...],
                             0.0).astype(o_ref.dtype)


# ---------------------------------------------------------------------------
# Tiling helper: tile over whole images (no conv2 halo across tile boundaries).
# ---------------------------------------------------------------------------
def _images_per_step(n, hw, bytes_per_row, budget_bytes=8 << 20):
    """Largest divisor g of n whose g*hw-row tile fits a soft VMEM budget and is
    sublane (8) aligned; fall back to the whole batch (full-dim block is always
    a legal BlockSpec)."""
    row_cap = max(hw, budget_bytes // max(bytes_per_row, 1))
    for g in range(n, 0, -1):
        if n % g:
            continue
        rows = g * hw
        if rows <= row_cap and (rows % 8 == 0 or g == n):
            return g
    return n


# ---------------------------------------------------------------------------
# ConvBlock forward (NCHW in / NCHW out, like the PyTorch module)
# ---------------------------------------------------------------------------
def conv_block_forward(x_nchw, p, *, compute_dtype=jnp.bfloat16, out_dtype=None):
    stride = p["stride"]
    k = p["kernel_size"]
    pad = (k - 1) // 2
    out_dtype = compute_dtype if out_dtype is None else out_dtype

    x = jnp.transpose(x_nchw, (0, 2, 3, 1))            # NCHW -> NHWC
    xs = x[:, ::stride, ::stride, :]                   # 1x1 stride-s conv == subsample + matmul
    n, ho, wo, cin = xs.shape
    hw = ho * wo
    m = n * hw

    f1 = p["w1"].shape[-1]
    f2 = p["w2"].shape[-1]
    f3 = p["w3"].shape[-1]

    # Fold BN scale into the conv weights at trace time; the kernel adds only shift.
    w1 = (p["w1"].reshape(cin, f1) * p["scale1"][None, :]).astype(compute_dtype)
    wsc = (p["w_sc"].reshape(cin, f3) * p["scale_sc"][None, :]).astype(compute_dtype)
    w2 = (p["w2"] * p["scale2"][None, None, None, :]).reshape(k * k, f1, f2).astype(compute_dtype)
    w3 = (p["w3"].reshape(f2, f3) * p["scale3"][None, :]).astype(compute_dtype)
    b1 = p["shift1"].reshape(1, f1).astype(jnp.float32)
    bsc = p["shift_sc"].reshape(1, f3).astype(jnp.float32)
    b2 = p["shift2"].reshape(1, f2).astype(jnp.float32)
    b3 = p["shift3"].reshape(1, f3).astype(jnp.float32)

    xs_flat = xs.reshape(m, cin).astype(compute_dtype)

    # Per-pixel (y, x) position inside its image (drives the conv2 edge masks;
    # avoids in-kernel integer div/mod for arbitrary H, W).
    pix = jnp.arange(hw, dtype=jnp.int32)
    ypos = jnp.tile((pix // wo)[None, :], (n, 1)).reshape(m, 1)
    xpos = jnp.tile((pix % wo)[None, :], (n, 1)).reshape(m, 1)

    itemsize = jnp.dtype(compute_dtype).itemsize
    bytes_per_row = (cin + f3) * itemsize + 4 * (2 * f1 + 2 * f2 + f3) + 8
    g_imgs = _images_per_step(n, hw, bytes_per_row)
    tile_m = g_imgs * hw
    grid = (m // tile_m,)                               # always exact: g_imgs | n

    out_flat = pl.pallas_call(
        functools.partial(_conv_block_kernel, k=k, pad=pad, H=ho, W=wo),
        grid=grid,
        out_shape=jax.ShapeDtypeStruct((m, f3), out_dtype),
        in_specs=[
            pl.BlockSpec((tile_m, cin), lambda i: (i, 0)),       # x tile walks M
            pl.BlockSpec((tile_m, 1), lambda i: (i, 0)),         # y positions
            pl.BlockSpec((tile_m, 1), lambda i: (i, 0)),         # x positions
            pl.BlockSpec((cin, f1), lambda i: (0, 0)),           # w1   (resident)
            pl.BlockSpec((cin, f3), lambda i: (0, 0)),           # w_sc (resident)
            pl.BlockSpec((k * k, f1, f2), lambda i: (0, 0, 0)),  # w2   (resident)
            pl.BlockSpec((f2, f3), lambda i: (0, 0)),            # w3   (resident)
            pl.BlockSpec((1, f1), lambda i: (0, 0)),             # shift1
            pl.BlockSpec((1, f3), lambda i: (0, 0)),             # shift_sc
            pl.BlockSpec((1, f2), lambda i: (0, 0)),             # shift2
            pl.BlockSpec((1, f3), lambda i: (0, 0)),             # shift3
        ],
        out_specs=pl.BlockSpec((tile_m, f3), lambda i: (i, 0)),
        compiler_params=pltpu.CompilerParams(
            dimension_semantics=("parallel",),
            vmem_limit_bytes=32 * 1024 * 1024),
    )(xs_flat, ypos, xpos, w1, wsc, w2, w3, b1, bsc, b2, b3)

    out = out_flat.reshape(n, ho, wo, f3)
    return jnp.transpose(out, (0, 3, 1, 2))             # NHWC -> NCHW


# ---------------------------------------------------------------------------
# Deterministic parameter init (shapes per the PyTorch module __init__)
# ---------------------------------------------------------------------------
def init_params(key, in_channels, filters, kernel_size, stride):
    f1, f2, f3 = filters
    ks = jax.random.split(key, 8)

    def conv_w(kk, kh, kw, cin, cout):                 # HWIO
        return 0.1 * jax.random.normal(kk, (kh, kw, cin, cout), jnp.float32)

    def bn_fold(kk, c):
        k1, k2, k3, k4 = jax.random.split(kk, 4)
        gamma = 1.0 + 0.1 * jax.random.normal(k1, (c,), jnp.float32)
        beta = 0.1 * jax.random.normal(k2, (c,), jnp.float32)
        mean = 0.05 * jax.random.normal(k3, (c,), jnp.float32)
        var = 0.5 + jax.random.uniform(k4, (c,), jnp.float32)
        eps = 1e-5
        scale = gamma * lax.rsqrt(var + eps)
        shift = beta - mean * scale
        return scale, shift

    p = dict(stride=stride, kernel_size=kernel_size)
    p["w1"] = conv_w(ks[0], 1, 1, in_channels, f1)
    p["w2"] = conv_w(ks[1], kernel_size, kernel_size, f1, f2)
    p["w3"] = conv_w(ks[2], 1, 1, f2, f3)
    p["w_sc"] = conv_w(ks[3], 1, 1, in_channels, f3)
    p["scale1"], p["shift1"] = bn_fold(ks[4], f1)
    p["scale2"], p["shift2"] = bn_fold(ks[5], f2)
    p["scale3"], p["shift3"] = bn_fold(ks[6], f3)
    p["scale_sc"], p["shift_sc"] = bn_fold(ks[7], f3)
    return p


# ---------------------------------------------------------------------------
# Pure-JAX reference (XLA convs, f32) for validation
# ---------------------------------------------------------------------------
def reference(x_nchw, p):
    x = jnp.transpose(x_nchw, (0, 2, 3, 1))
    s, k = p["stride"], p["kernel_size"]

    def conv(v, w, stride, pad):
        return lax.conv_general_dilated(
            v, w, (stride, stride), [(pad, pad), (pad, pad)],
            dimension_numbers=("NHWC", "HWIO", "NHWC"))

    sc = conv(x, p["w_sc"], s, 0) * p["scale_sc"] + p["shift_sc"]
    h = jnp.maximum(conv(x, p["w1"], s, 0) * p["scale1"] + p["shift1"], 0.0)
    h = jnp.maximum(conv(h, p["w2"], 1, (k - 1) // 2) * p["scale2"] + p["shift2"], 0.0)
    h = conv(h, p["w3"], 1, 0) * p["scale3"] + p["shift3"]
    out = jnp.maximum(h + sc, 0.0)
    return jnp.transpose(out, (0, 3, 1, 2))


if __name__ == "__main__":
    key = jax.random.PRNGKey(0)
    kx, kp = jax.random.split(key)

    in_channels, filters, kernel_size, stride = 4, (4, 4, 8), 3, 2
    x = jax.random.normal(kx, (2, in_channels, 16, 16), jnp.float32)   # NCHW
    params = init_params(kp, in_channels, filters, kernel_size, stride)

    ref = jax.block_until_ready(reference(x, params))

    # f32 compute path: tight check of the fused roll/mask conv structure.
    out_f32 = jax.block_until_ready(
        conv_block_forward(x, params, compute_dtype=jnp.float32))
    assert out_f32.shape == (2, filters[2], 8, 8), out_f32.shape
    np.testing.assert_allclose(np.asarray(out_f32), np.asarray(ref),
                               rtol=1e-3, atol=1e-4)

    # bf16 compute path (default): bf16 MXU matmuls, f32 accumulation, bf16 out.
    out_bf16 = jax.block_until_ready(conv_block_forward(x, params))
    assert out_bf16.shape == (2, filters[2], 8, 8), out_bf16.shape
    np.testing.assert_allclose(np.asarray(out_bf16.astype(jnp.float32)),
                               np.asarray(ref), rtol=5e-2, atol=2e-2)

    print("KERNEL_OK")
</pallas_src>

<mosaic_0001>
module attributes {stable_mosaic.version = 11 : i64} {
  func.func @_conv_block_kernel(%arg0: i32, %arg1: memref<128x4xf32, #tpu.memory_space<vmem>>, %arg2: memref<128x1xi32, #tpu.memory_space<vmem>>, %arg3: memref<128x1xi32, #tpu.memory_space<vmem>>, %arg4: memref<4x4xf32, #tpu.memory_space<vmem>>, %arg5: memref<4x8xf32, #tpu.memory_space<vmem>>, %arg6: memref<9x4x4xf32, #tpu.memory_space<vmem>>, %arg7: memref<4x8xf32, #tpu.memory_space<vmem>>, %arg8: memref<1x4xf32, #tpu.memory_space<vmem>>, %arg9: memref<1x8xf32, #tpu.memory_space<vmem>>, %arg10: memref<1x4xf32, #tpu.memory_space<vmem>>, %arg11: memref<1x8xf32, #tpu.memory_space<vmem>>, %arg12: memref<128x8xf32, #tpu.memory_space<vmem>>) attributes {dimension_semantics = [#tpu.dimension_semantics<parallel>], iteration_bounds = array<i64: 1>, scalar_prefetch = 0 : i64, scratch_operands = 0 : i64, tpu.core_type = #tpu.core_type<tc>, window_params = [{transform_indices = @transform_0, window_bounds = array<i64: 128, 4>}, {transform_indices = @transform_1, window_bounds = array<i64: 128, 1>}, {transform_indices = @transform_2, window_bounds = array<i64: 128, 1>}, {pipeline_mode = #tpu.pipeline_mode<synchronous>, transform_indices = @transform_3, window_bounds = array<i64: 4, 4>}, {pipeline_mode = #tpu.pipeline_mode<synchronous>, transform_indices = @transform_4, window_bounds = array<i64: 4, 8>}, {pipeline_mode = #tpu.pipeline_mode<synchronous>, transform_indices = @transform_5, window_bounds = array<i64: 9, 4, 4>}, {pipeline_mode = #tpu.pipeline_mode<synchronous>, transform_indices = @transform_6, window_bounds = array<i64: 4, 8>}, {pipeline_mode = #tpu.pipeline_mode<synchronous>, transform_indices = @transform_7, window_bounds = array<i64: 1, 4>}, {pipeline_mode = #tpu.pipeline_mode<synchronous>, transform_indices = @transform_8, window_bounds = array<i64: 1, 8>}, {pipeline_mode = #tpu.pipeline_mode<synchronous>, transform_indices = @transform_9, window_bounds = array<i64: 1, 4>}, {pipeline_mode = #tpu.pipeline_mode<synchronous>, transform_indices = @transform_10, window_bounds = array<i64: 1, 8>}, {transform_indices = @transform_11, window_bounds = array<i64: 128, 8>}]} {
    %c0 = arith.constant 0 : index
    %c0_0 = arith.constant 0 : index
    %0 = vector.load %arg1[%c0, %c0_0] : memref<128x4xf32, #tpu.memory_space<vmem>>, vector<128x4xf32>
    %c0_1 = arith.constant 0 : index
    %c0_2 = arith.constant 0 : index
    %1 = vector.load %arg4[%c0_1, %c0_2] : memref<4x4xf32, #tpu.memory_space<vmem>>, vector<4x4xf32>
    %cst = arith.constant dense<0.000000e+00> : vector<128x4xf32>
    %2 = tpu.matmul %0, %1, %cst {dimension_numbers = #tpu.dot_dimension_numbers<[1], [0], [0], [1], [0, 0, 1, 1], [], []>} : vector<128x4xf32>, vector<4x4xf32>, vector<128x4xf32> -> vector<128x4xf32>
    %c0_3 = arith.constant 0 : index
    %c0_4 = arith.constant 0 : index
    %3 = vector.load %arg8[%c0_3, %c0_4] : memref<1x4xf32, #tpu.memory_space<vmem>>, vector<1x4xf32>
    %4 = vector.broadcast %3 : vector<1x4xf32> to vector<128x4xf32>
    %5 = arith.addf %2, %4 : vector<128x4xf32>
    %cst_5 = arith.constant 0.000000e+00 : f32
    %6 = vector.broadcast %cst_5 : f32 to vector<128x4xf32>
    %7 = arith.maximumf %5, %6 : vector<128x4xf32>
    %c0_6 = arith.constant 0 : index
    %c0_7 = arith.constant 0 : index
    %8 = vector.load %arg2[%c0_6, %c0_7] : memref<128x1xi32, #tpu.memory_space<vmem>>, vector<128x1xi32>
    %c0_8 = arith.constant 0 : index
    %c0_9 = arith.constant 0 : index
    %9 = vector.load %arg3[%c0_8, %c0_9] : memref<128x1xi32, #tpu.memory_space<vmem>>, vector<128x1xi32>
    %cst_10 = arith.constant 0.000000e+00 : f32
    %10 = vector.broadcast %cst_10 : f32 to vector<128x4xf32>
    %c9_i32 = arith.constant 9 : i32
    %11 = tpu.dynamic_rotate %7 by %c9_i32 dim 0 : vector<128x4xf32>, i32 -> vector<128x4xf32>
    %c1_i32 = arith.constant 1 : i32
    %12 = vector.broadcast %c1_i32 : i32 to vector<128x1xi32>
    %13 = arith.cmpi sge, %8, %12 : vector<128x1xi32>
    %c1_i32_11 = arith.constant 1 : i32
    %14 = vector.broadcast %c1_i32_11 : i32 to vector<128x1xi32>
    %15 = arith.cmpi sge, %9, %14 : vector<128x1xi32>
    %16 = arith.andi %13, %15 : vector<128x1xi1>
    %cst_12 = arith.constant 0.000000e+00 : f32
    %17 = vector.shape_cast %16 : vector<128x1xi1> to vector<128x1xi1>
    %18 = vector.broadcast %17 : vector<128x1xi1> to vector<128x4xi1>
    %19 = vector.broadcast %cst_12 : f32 to vector<128x4xf32>
    %20 = arith.select %18, %11, %19 : vector<128x4xi1>, vector<128x4xf32>
    %c0_13 = arith.constant 0 : index
    %c0_14 = arith.constant 0 : index
    %c0_15 = arith.constant 0 : index
    %21 = vector.load %arg6[%c0_13, %c0_14, %c0_15] : memref<9x4x4xf32, #tpu.memory_space<vmem>>, vector<1x4x4xf32>
    %22 = vector.shape_cast %21 : vector<1x4x4xf32> to vector<4x4xf32>
    %cst_16 = arith.constant dense<0.000000e+00> : vector<128x4xf32>
    %23 = tpu.matmul %20, %22, %cst_16 {dimension_numbers = #tpu.dot_dimension_numbers<[1], [0], [0], [1], [0, 0, 1, 1], [], []>} : vector<128x4xf32>, vector<4x4xf32>, vector<128x4xf32> -> vector<128x4xf32>
    %24 = arith.addf %10, %23 : vector<128x4xf32>
    %c8_i32 = arith.constant 8 : i32
    %25 = tpu.dynamic_rotate %7 by %c8_i32 dim 0 : vector<128x4xf32>, i32 -> vector<128x4xf32>
    %c1_i32_17 = arith.constant 1 : i32
    %26 = vector.broadcast %c1_i32_17 : i32 to vector<128x1xi32>
    %27 = arith.cmpi sge, %8, %26 : vector<128x1xi32>
    %cst_18 = arith.constant 0.000000e+00 : f32
    %28 = vector.shape_cast %27 : vector<128x1xi1> to vector<128x1xi1>
    %29 = vector.broadcast %28 : vector<128x1xi1> to vector<128x4xi1>
    %30 = vector.broadcast %cst_18 : f32 to vector<128x4xf32>
    %31 = arith.select %29, %25, %30 : vector<128x4xi1>, vector<128x4xf32>
    %c1 = arith.constant 1 : index
    %c0_19 = arith.constant 0 : index
    %c0_20 = arith.constant 0 : index
    %32 = vector.load %arg6[%c1, %c0_19, %c0_20] : memref<9x4x4xf32, #tpu.memory_space<vmem>>, vector<1x4x4xf32>
    %33 = vector.shape_cast %32 : vector<1x4x4xf32> to vector<4x4xf32>
    %cst_21 = arith.constant dense<0.000000e+00> : vector<128x4xf32>
    %34 = tpu.matmul %31, %33, %cst_21 {dimension_numbers = #tpu.dot_dimension_numbers<[1], [0], [0], [1], [0, 0, 1, 1], [], []>} : vector<128x4xf32>, vector<4x4xf32>, vector<128x4xf32> -> vector<128x4xf32>
    %35 = arith.addf %24, %34 : vector<128x4xf32>
    %c7_i32 = arith.constant 7 : i32
    %36 = tpu.dynamic_rotate %7 by %c7_i32 dim 0 : vector<128x4xf32>, i32 -> vector<128x4xf32>
    %c1_i32_22 = arith.constant 1 : i32
    %37 = vector.broadcast %c1_i32_22 : i32 to vector<128x1xi32>
    %38 = arith.cmpi sge, %8, %37 : vector<128x1xi32>
    %c7_i32_23 = arith.constant 7 : i32
    %39 = vector.broadcast %c7_i32_23 : i32 to vector<128x1xi32>
    %40 = arith.cmpi slt, %9, %39 : vector<128x1xi32>
    %41 = arith.andi %38, %40 : vector<128x1xi1>
    %cst_24 = arith.constant 0.000000e+00 : f32
    %42 = vector.shape_cast %41 : vector<128x1xi1> to vector<128x1xi1>
    %43 = vector.broadcast %42 : vector<128x1xi1> to vector<128x4xi1>
    %44 = vector.broadcast %cst_24 : f32 to vector<128x4xf32>
    %45 = arith.select %43, %36, %44 : vector<128x4xi1>, vector<128x4xf32>
    %c2 = arith.constant 2 : index
    %c0_25 = arith.constant 0 : index
    %c0_26 = arith.constant 0 : index
    %46 = vector.load %arg6[%c2, %c0_25, %c0_26] : memref<9x4x4xf32, #tpu.memory_space<vmem>>, vector<1x4x4xf32>
    %47 = vector.shape_cast %46 : vector<1x4x4xf32> to vector<4x4xf32>
    %cst_27 = arith.constant dense<0.000000e+00> : vector<128x4xf32>
    %48 = tpu.matmul %45, %47, %cst_27 {dimension_numbers = #tpu.dot_dimension_numbers<[1], [0], [0], [1], [0, 0, 1, 1], [], []>} : vector<128x4xf32>, vector<4x4xf32>, vector<128x4xf32> -> vector<128x4xf32>
    %49 = arith.addf %35, %48 : vector<128x4xf32>
    %c1_i32_28 = arith.constant 1 : i32
    %50 = tpu.dynamic_rotate %7 by %c1_i32_28 dim 0 : vector<128x4xf32>, i32 -> vector<128x4xf32>
    %c1_i32_29 = arith.constant 1 : i32
    %51 = vector.broadcast %c1_i32_29 : i32 to vector<128x1xi32>
    %52 = arith.cmpi sge, %9, %51 : vector<128x1xi32>
    %cst_30 = arith.constant 0.000000e+00 : f32
    %53 = vector.shape_cast %52 : vector<128x1xi1> to vector<128x1xi1>
    %54 = vector.broadcast %53 : vector<128x1xi1> to vector<128x4xi1>
    %55 = vector.broadcast %cst_30 : f32 to vector<128x4xf32>
    %56 = arith.select %54, %50, %55 : vector<128x4xi1>, vector<128x4xf32>
    %c3 = arith.constant 3 : index
    %c0_31 = arith.constant 0 : index
    %c0_32 = arith.constant 0 : index
    %57 = vector.load %arg6[%c3, %c0_31, %c0_32] : memref<9x4x4xf32, #tpu.memory_space<vmem>>, vector<1x4x4xf32>
    %58 = vector.shape_cast %57 : vector<1x4x4xf32> to vector<4x4xf32>
    %cst_33 = arith.constant dense<0.000000e+00> : vector<128x4xf32>
    %59 = tpu.matmul %56, %58, %cst_33 {dimension_numbers = #tpu.dot_dimension_numbers<[1], [0], [0], [1], [0, 0, 1, 1], [], []>} : vector<128x4xf32>, vector<4x4xf32>, vector<128x4xf32> -> vector<128x4xf32>
    %60 = arith.addf %49, %59 : vector<128x4xf32>
    %c4 = arith.constant 4 : index
    %c0_34 = arith.constant 0 : index
    %c0_35 = arith.constant 0 : index
    %61 = vector.load %arg6[%c4, %c0_34, %c0_35] : memref<9x4x4xf32, #tpu.memory_space<vmem>>, vector<1x4x4xf32>
    %62 = vector.shape_cast %61 : vector<1x4x4xf32> to vector<4x4xf32>
    %cst_36 = arith.constant dense<0.000000e+00> : vector<128x4xf32>
    %63 = tpu.matmul %7, %62, %cst_36 {dimension_numbers = #tpu.dot_dimension_numbers<[1], [0], [0], [1], [0, 0, 1, 1], [], []>} : vector<128x4xf32>, vector<4x4xf32>, vector<128x4xf32> -> vector<128x4xf32>
    %64 = arith.addf %60, %63 : vector<128x4xf32>
    %c127_i32 = arith.constant 127 : i32
    %65 = tpu.dynamic_rotate %7 by %c127_i32 dim 0 : vector<128x4xf32>, i32 -> vector<128x4xf32>
    %c7_i32_37 = arith.constant 7 : i32
    %66 = vector.broadcast %c7_i32_37 : i32 to vector<128x1xi32>
    %67 = arith.cmpi slt, %9, %66 : vector<128x1xi32>
    %cst_38 = arith.constant 0.000000e+00 : f32
    %68 = vector.shape_cast %67 : vector<128x1xi1> to vector<128x1xi1>
    %69 = vector.broadcast %68 : vector<128x1xi1> to vector<128x4xi1>
    %70 = vector.broadcast %cst_38 : f32 to vector<128x4xf32>
    %71 = arith.select %69, %65, %70 : vector<128x4xi1>, vector<128x4xf32>
    %c5 = arith.constant 5 : index
    %c0_39 = arith.constant 0 : index
    %c0_40 = arith.constant 0 : index
    %72 = vector.load %arg6[%c5, %c0_39, %c0_40] : memref<9x4x4xf32, #tpu.memory_space<vmem>>, vector<1x4x4xf32>
    %73 = vector.shape_cast %72 : vector<1x4x4xf32> to vector<4x4xf32>
    %cst_41 = arith.constant dense<0.000000e+00> : vector<128x4xf32>
    %74 = tpu.matmul %71, %73, %cst_41 {dimension_numbers = #tpu.dot_dimension_numbers<[1], [0], [0], [1], [0, 0, 1, 1], [], []>} : vector<128x4xf32>, vector<4x4xf32>, vector<128x4xf32> -> vector<128x4xf32>
    %75 = arith.addf %64, %74 : vector<128x4xf32>
    %c121_i32 = arith.constant 121 : i32
    %76 = tpu.dynamic_rotate %7 by %c121_i32 dim 0 : vector<128x4xf32>, i32 -> vector<128x4xf32>
    %c7_i32_42 = arith.constant 7 : i32
    %77 = vector.broadcast %c7_i32_42 : i32 to vector<128x1xi32>
    %78 = arith.cmpi slt, %8, %77 : vector<128x1xi32>
    %c1_i32_43 = arith.constant 1 : i32
    %79 = vector.broadcast %c1_i32_43 : i32 to vector<128x1xi32>
    %80 = arith.cmpi sge, %9, %79 : vector<128x1xi32>
    %81 = arith.andi %78, %80 : vector<128x1xi1>
    %cst_44 = arith.constant 0.000000e+00 : f32
    %82 = vector.shape_cast %81 : vector<128x1xi1> to vector<128x1xi1>
    %83 = vector.broadcast %82 : vector<128x1xi1> to vector<128x4xi1>
    %84 = vector.broadcast %cst_44 : f32 to vector<128x4xf32>
    %85 = arith.select %83, %76, %84 : vector<128x4xi1>, vector<128x4xf32>
    %c6 = arith.constant 6 : index
    %c0_45 = arith.constant 0 : index
    %c0_46 = arith.constant 0 : index
    %86 = vector.load %arg6[%c6, %c0_45, %c0_46] : memref<9x4x4xf32, #tpu.memory_space<vmem>>, vector<1x4x4xf32>
    %87 = vector.shape_cast %86 : vector<1x4x4xf32> to vector<4x4xf32>
    %cst_47 = arith.constant dense<0.000000e+00> : vector<128x4xf32>
    %88 = tpu.matmul %85, %87, %cst_47 {dimension_numbers = #tpu.dot_dimension_numbers<[1], [0], [0], [1], [0, 0, 1, 1], [], []>} : vector<128x4xf32>, vector<4x4xf32>, vector<128x4xf32> -> vector<128x4xf32>
    %89 = arith.addf %75, %88 : vector<128x4xf32>
    %c120_i32 = arith.constant 120 : i32
    %90 = tpu.dynamic_rotate %7 by %c120_i32 dim 0 : vector<128x4xf32>, i32 -> vector<128x4xf32>
    %c7_i32_48 = arith.constant 7 : i32
    %91 = vector.broadcast %c7_i32_48 : i32 to vector<128x1xi32>
    %92 = arith.cmpi slt, %8, %91 : vector<128x1xi32>
    %cst_49 = arith.constant 0.000000e+00 : f32
    %93 = vector.shape_cast %92 : vector<128x1xi1> to vector<128x1xi1>
    %94 = vector.broadcast %93 : vector<128x1xi1> to vector<128x4xi1>
    %95 = vector.broadcast %cst_49 : f32 to vector<128x4xf32>
    %96 = arith.select %94, %90, %95 : vector<128x4xi1>, vector<128x4xf32>
    %c7 = arith.constant 7 : index
    %c0_50 = arith.constant 0 : index
    %c0_51 = arith.constant 0 : index
    %97 = vector.load %arg6[%c7, %c0_50, %c0_51] : memref<9x4x4xf32, #tpu.memory_space<vmem>>, vector<1x4x4xf32>
    %98 = vector.shape_cast %97 : vector<1x4x4xf32> to vector<4x4xf32>
    %cst_52 = arith.constant dense<0.000000e+00> : vector<128x4xf32>
    %99 = tpu.matmul %96, %98, %cst_52 {dimension_numbers = #tpu.dot_dimension_numbers<[1], [0], [0], [1], [0, 0, 1, 1], [], []>} : vector<128x4xf32>, vector<4x4xf32>, vector<128x4xf32> -> vector<128x4xf32>
    %100 = arith.addf %89, %99 : vector<128x4xf32>
    %c119_i32 = arith.constant 119 : i32
    %101 = tpu.dynamic_rotate %7 by %c119_i32 dim 0 : vector<128x4xf32>, i32 -> vector<128x4xf32>
    %c7_i32_53 = arith.constant 7 : i32
    %102 = vector.broadcast %c7_i32_53 : i32 to vector<128x1xi32>
    %103 = arith.cmpi slt, %8, %102 : vector<128x1xi32>
    %c7_i32_54 = arith.constant 7 : i32
    %104 = vector.broadcast %c7_i32_54 : i32 to vector<128x1xi32>
    %105 = arith.cmpi slt, %9, %104 : vector<128x1xi32>
    %106 = arith.andi %103, %105 : vector<128x1xi1>
    %cst_55 = arith.constant 0.000000e+00 : f32
    %107 = vector.shape_cast %106 : vector<128x1xi1> to vector<128x1xi1>
    %108 = vector.broadcast %107 : vector<128x1xi1> to vector<128x4xi1>
    %109 = vector.broadcast %cst_55 : f32 to vector<128x4xf32>
    %110 = arith.select %108, %101, %109 : vector<128x4xi1>, vector<128x4xf32>
    %c8 = arith.constant 8 : index
    %c0_56 = arith.constant 0 : index
    %c0_57 = arith.constant 0 : index
    %111 = vector.load %arg6[%c8, %c0_56, %c0_57] : memref<9x4x4xf32, #tpu.memory_space<vmem>>, vector<1x4x4xf32>
    %112 = vector.shape_cast %111 : vector<1x4x4xf32> to vector<4x4xf32>
    %cst_58 = arith.constant dense<0.000000e+00> : vector<128x4xf32>
    %113 = tpu.matmul %110, %112, %cst_58 {dimension_numbers = #tpu.dot_dimension_numbers<[1], [0], [0], [1], [0, 0, 1, 1], [], []>} : vector<128x4xf32>, vector<4x4xf32>, vector<128x4xf32> -> vector<128x4xf32>
    %114 = arith.addf %100, %113 : vector<128x4xf32>
    %c0_59 = arith.constant 0 : index
    %c0_60 = arith.constant 0 : index
    %115 = vector.load %arg10[%c0_59, %c0_60] : memref<1x4xf32, #tpu.memory_space<vmem>>, vector<1x4xf32>
    %116 = vector.broadcast %115 : vector<1x4xf32> to vector<128x4xf32>
    %117 = arith.addf %114, %116 : vector<128x4xf32>
    %cst_61 = arith.constant 0.000000e+00 : f32
    %118 = vector.broadcast %cst_61 : f32 to vector<128x4xf32>
    %119 = arith.maximumf %117, %118 : vector<128x4xf32>
    %c0_62 = arith.constant 0 : index
    %c0_63 = arith.constant 0 : index
    %120 = vector.load %arg7[%c0_62, %c0_63] : memref<4x8xf32, #tpu.memory_space<vmem>>, vector<4x8xf32>
    %cst_64 = arith.constant dense<0.000000e+00> : vector<128x8xf32>
    %121 = tpu.matmul %119, %120, %cst_64 {dimension_numbers = #tpu.dot_dimension_numbers<[1], [0], [0], [1], [0, 0, 1, 1], [], []>} : vector<128x4xf32>, vector<4x8xf32>, vector<128x8xf32> -> vector<128x8xf32>
    %c0_65 = arith.constant 0 : index
    %c0_66 = arith.constant 0 : index
    %122 = vector.load %arg5[%c0_65, %c0_66] : memref<4x8xf32, #tpu.memory_space<vmem>>, vector<4x8xf32>
    %cst_67 = arith.constant dense<0.000000e+00> : vector<128x8xf32>
    %123 = tpu.matmul %0, %122, %cst_67 {dimension_numbers = #tpu.dot_dimension_numbers<[1], [0], [0], [1], [0, 0, 1, 1], [], []>} : vector<128x4xf32>, vector<4x8xf32>, vector<128x8xf32> -> vector<128x8xf32>
    %c0_68 = arith.constant 0 : index
    %c0_69 = arith.constant 0 : index
    %124 = vector.load %arg11[%c0_68, %c0_69] : memref<1x8xf32, #tpu.memory_space<vmem>>, vector<1x8xf32>
    %125 = vector.broadcast %124 : vector<1x8xf32> to vector<128x8xf32>
    %126 = arith.addf %121, %125 : vector<128x8xf32>
    %127 = arith.addf %126, %123 : vector<128x8xf32>
    %c0_70 = arith.constant 0 : index
    %c0_71 = arith.constant 0 : index
    %128 = vector.load %arg9[%c0_70, %c0_71] : memref<1x8xf32, #tpu.memory_space<vmem>>, vector<1x8xf32>
    %129 = vector.broadcast %128 : vector<1x8xf32> to vector<128x8xf32>
    %130 = arith.addf %127, %129 : vector<128x8xf32>
    %cst_72 = arith.constant 0.000000e+00 : f32
    %131 = vector.broadcast %cst_72 : f32 to vector<128x8xf32>
    %132 = arith.maximumf %130, %131 : vector<128x8xf32>
    %c0_73 = arith.constant 0 : index
    %c0_74 = arith.constant 0 : index
    %133 = vector.load %arg12[%c0_73, %c0_74] : memref<128x8xf32, #tpu.memory_space<vmem>>, vector<128x8xf32>
    tpu.vector_store %arg12[%c0_73, %c0_74], %132 {strides = array<i32>} : memref<128x8xf32, #tpu.memory_space<vmem>>, vector<128x8xf32>,
    return
  }
  func.func @transform_0(%arg0: i32) -> (i32, i32) {
    %c0_i32 = arith.constant 0 : i32
    %c0_i32_0 = arith.constant 0 : i32
    return %arg0, %c0_i32 : i32, i32
  }
  func.func @transform_1(%arg0: i32) -> (i32, i32) {
    %c0_i32 = arith.constant 0 : i32
    %c0_i32_0 = arith.constant 0 : i32
    return %arg0, %c0_i32 : i32, i32
  }
  func.func @transform_2(%arg0: i32) -> (i32, i32) {
    %c0_i32 = arith.constant 0 : i32
    %c0_i32_0 = arith.constant 0 : i32
    return %arg0, %c0_i32 : i32, i32
  }
  func.func @transform_3(%arg0: i32) -> (i32, i32) {
    %c0_i32 = arith.constant 0 : i32
    %c0_i32_0 = arith.constant 0 : i32
    %c0_i32_1 = arith.constant 0 : i32
    return %c0_i32, %c0_i32_0 : i32, i32
  }
  func.func @transform_4(%arg0: i32) -> (i32, i32) {
    %c0_i32 = arith.constant 0 : i32
    %c0_i32_0 = arith.constant 0 : i32
    %c0_i32_1 = arith.constant 0 : i32
    return %c0_i32, %c0_i32_0 : i32, i32
  }
  func.func @transform_5(%arg0: i32) -> (i32, i32, i32) {
    %c0_i32 = arith.constant 0 : i32
    %c0_i32_0 = arith.constant 0 : i32
    %c0_i32_1 = arith.constant 0 : i32
    %c0_i32_2 = arith.constant 0 : i32
    return %c0_i32, %c0_i32_0, %c0_i32_1 : i32, i32, i32
  }
  func.func @transform_6(%arg0: i32) -> (i32, i32) {
    %c0_i32 = arith.constant 0 : i32
    %c0_i32_0 = arith.constant 0 : i32
    %c0_i32_1 = arith.constant 0 : i32
    return %c0_i32, %c0_i32_0 : i32, i32
  }
  func.func @transform_7(%arg0: i32) -> (i32, i32) {
    %c0_i32 = arith.constant 0 : i32
    %c0_i32_0 = arith.constant 0 : i32
    %c0_i32_1 = arith.constant 0 : i32
    return %c0_i32, %c0_i32_0 : i32, i32
  }
  func.func @transform_8(%arg0: i32) -> (i32, i32) {
    %c0_i32 = arith.constant 0 : i32
    %c0_i32_0 = arith.constant 0 : i32
    %c0_i32_1 = arith.constant 0 : i32
    return %c0_i32, %c0_i32_0 : i32, i32
  }
  func.func @transform_9(%arg0: i32) -> (i32, i32) {
    %c0_i32 = arith.constant 0 : i32
    %c0_i32_0 = arith.constant 0 : i32
    %c0_i32_1 = arith.constant 0 : i32
    return %c0_i32, %c0_i32_0 : i32, i32
  }
  func.func @transform_10(%arg0: i32) -> (i32, i32) {
    %c0_i32 = arith.constant 0 : i32
    %c0_i32_0 = arith.constant 0 : i32
    %c0_i32_1 = arith.constant 0 : i32
    return %c0_i32, %c0_i32_0 : i32, i32
  }
  func.func @transform_11(%arg0: i32) -> (i32, i32) {
    %c0_i32 = arith.constant 0 : i32
    %c0_i32_0 = arith.constant 0 : i32
    return %arg0, %c0_i32 : i32, i32
  }
}

</mosaic_0001>

<llo_original>
// kernel: tpu_custom_call.1
$region0: #{tpu_custom_call.1}
  #allocation0 [shape = 'u32[]', space=smem, size = 0x4, offset = 0x4, fixed_abs, tag = 'smem constant byte address 0x4 - core index']
  #allocation1 [shape = 'u32[144,128]{1,0:T(1,128)}', space=vmem, size = 0x12000, scoped, tag = 'internal scratch']
  %s0 = inlined_call_operand.vmem [shape: f32[128,4], index: 0, kind: input, shape index: {}]
  %s1 = inlined_call_operand.vmem [shape: s32[128,1], index: 1, kind: input, shape index: {}]
  %s2 = inlined_call_operand.vmem [shape: s32[128,1], index: 2, kind: input, shape index: {}]
  %s3 = inlined_call_operand.vmem [shape: f32[4,4], index: 3, kind: input, shape index: {}]
  %s4 = inlined_call_operand.vmem [shape: f32[4,8], index: 4, kind: input, shape index: {}]
  %s5 = inlined_call_operand.vmem [shape: f32[9,4,4], index: 5, kind: input, shape index: {}]
  %s6 = inlined_call_operand.vmem [shape: f32[4,8], index: 6, kind: input, shape index: {}]
  %s7 = inlined_call_operand.vmem [shape: f32[1,4], index: 7, kind: input, shape index: {}]
  %s8 = inlined_call_operand.vmem [shape: f32[1,8], index: 8, kind: input, shape index: {}]
  %s9 = inlined_call_operand.vmem [shape: f32[1,4], index: 9, kind: input, shape index: {}]
  %s10 = inlined_call_operand.vmem [shape: f32[1,8], index: 10, kind: input, shape index: {}]
  %s11 = inlined_call_operand.vmem [shape: f32[128,8], index: 11, kind: output, shape index: {}]
  %s12 = sld [smem:[#allocation0]]
  $region54: #{tpu_custom_call.1} parent=0
    _
  %s14 = ssub.s32 1, %s12
  %s15 = scalar_select 0, %s14, %s12
  // Predicated region
  $region2: #{tpu_custom_call.1} parent=0 // pred_check
    _
  $region3: #{tpu_custom_call.1} parent=0 // pred_check_branch
    %17 = sbr.rel (0) target = $region5
  $region4: #{tpu_custom_call.1} parent=0 // pred_region
    _
  $region5: #{tpu_custom_call.1} parent=0 // pred_fallthru
    _
  // Predicated region
  $region6: #{tpu_custom_call.1} parent=0 // pred_check
    _
  $region7: #{tpu_custom_call.1} parent=0 // pred_check_branch
    %19 = sbr.rel (0) target = $region9
  $region8: #{tpu_custom_call.1} parent=0 // pred_region
    _
  $region9: #{tpu_custom_call.1} parent=0 // pred_fallthru
    _
  // Predicated region
  $region10: #{tpu_custom_call.1} parent=0 // pred_check
    _
  $region11: #{tpu_custom_call.1} parent=0 // pred_check_branch
    %21 = sbr.rel (0) target = $region13
  $region12: #{tpu_custom_call.1} parent=0 // pred_region
    _
  $region13: #{tpu_custom_call.1} parent=0 // pred_fallthru
    _
  // Predicated region
  $region14: #{tpu_custom_call.1} parent=0 // pred_check
    _
  $region15: #{tpu_custom_call.1} parent=0 // pred_check_branch
    %23 = sbr.rel (0) target = $region17
  $region16: #{tpu_custom_call.1} parent=0 // pred_region
    _
  $region17: #{tpu_custom_call.1} parent=0 // pred_fallthru
    _
  // Predicated region
  $region18: #{tpu_custom_call.1} parent=0 // pred_check
    _
  $region19: #{tpu_custom_call.1} parent=0 // pred_check_branch
    %25 = sbr.rel (0) target = $region21
  $region20: #{tpu_custom_call.1} parent=0 // pred_region
    _
  $region21: #{tpu_custom_call.1} parent=0 // pred_fallthru
    _
  // Predicated region
  $region22: #{tpu_custom_call.1} parent=0 // pred_check
    _
  $region23: #{tpu_custom_call.1} parent=0 // pred_check_branch
    %27 = sbr.rel (0) target = $region25
  $region24: #{tpu_custom_call.1} parent=0 // pred_region
    _
  $region25: #{tpu_custom_call.1} parent=0 // pred_fallthru
    _
  // Predicated region
  $region26: #{tpu_custom_call.1} parent=0 // pred_check
    _
  $region27: #{tpu_custom_call.1} parent=0 // pred_check_branch
    %29 = sbr.rel (0) target = $region29
  $region28: #{tpu_custom_call.1} parent=0 // pred_region
    _
  $region29: #{tpu_custom_call.1} parent=0 // pred_fallthru
    _
  // Predicated region
  $region30: #{tpu_custom_call.1} parent=0 // pred_check
    _
  $region31: #{tpu_custom_call.1} parent=0 // pred_check_branch
    %31 = sbr.rel (0) target = $region33
  $region32: #{tpu_custom_call.1} parent=0 // pred_region
    _
  $region33: #{tpu_custom_call.1} parent=0 // pred_fallthru
    _
  // Predicated region
  $region34: #{tpu_custom_call.1} parent=0 // pred_check
    _
  $region35: #{tpu_custom_call.1} parent=0 // pred_check_branch
    %33 = sbr.rel (0) target = $region37
  $region36: #{tpu_custom_call.1} parent=0 // pred_region
    _
  $region37: #{tpu_custom_call.1} parent=0 // pred_fallthru
    _
  // Predicated region
  $region38: #{tpu_custom_call.1} parent=0 // pred_check
    _
  $region39: #{tpu_custom_call.1} parent=0 // pred_check_branch
    %35 = sbr.rel (0) target = $region41
  $region40: #{tpu_custom_call.1} parent=0 // pred_region
    _
  $region41: #{tpu_custom_call.1} parent=0 // pred_fallthru
    _
  // Predicated region
  $region42: #{tpu_custom_call.1} parent=0 // pred_check
    _
  $region43: #{tpu_custom_call.1} parent=0 // pred_check_branch
    %37 = sbr.rel (0) target = $region45
  $region44: #{tpu_custom_call.1} parent=0 // pred_region
    _
  $region45: #{tpu_custom_call.1} parent=0 // pred_fallthru
    _
  %v38 = vld [vmem:[%s0] sm:$0xff]
  %v39 = vld [vmem:[%s0 + $0x8] sm:$0xff]
  %v40 = vld [vmem:[%s0 + $0x10] sm:$0xff]
  %v41 = vld [vmem:[%s0 + $0x18] sm:$0xff]
  %v42 = vld [vmem:[%s0 + $0x20] sm:$0xff]
  %v43 = vld [vmem:[%s0 + $0x28] sm:$0xff]
  %v44 = vld [vmem:[%s0 + $0x30] sm:$0xff]
  %v45 = vld [vmem:[%s0 + $0x38] sm:$0xff]
  %v46 = vld [vmem:[%s0 + $0x40] sm:$0xff]
  %v47 = vld [vmem:[%s0 + $0x48] sm:$0xff]
  %v48 = vld [vmem:[%s0 + $0x50] sm:$0xff]
  %v49 = vld [vmem:[%s0 + $0x58] sm:$0xff]
  %v50 = vld [vmem:[%s0 + $0x60] sm:$0xff]
  %v51 = vld [vmem:[%s0 + $0x68] sm:$0xff]
  %v52 = vld [vmem:[%s0 + $0x70] sm:$0xff]
  %v53 = vld [vmem:[%s0 + $0x78] sm:$0xff]
  %v54 = vld [vmem:[%s3] sm:$0xf]
  %v55 = vld [vmem:[%s7] sm:$0x1]
  %v57 = vlaneseq
  %v58 = vshrl.u32 %v57, 7
  %v59 = vsub.s32 0, %v58
  %v60 = vrot.slane %v55, %v59
  %vm62 = vcmask 31744
  %v64 = vsel %vm62, %v38, 0
  %v67 = vsel %vm62, %v39, 0
  %v70 = vsel %vm62, %v40, 0
  %v73 = vsel %vm62, %v41, 0
  %v76 = vsel %vm62, %v42, 0
  %v79 = vsel %vm62, %v43, 0
  %v82 = vsel %vm62, %v44, 0
  %v85 = vsel %vm62, %v45, 0
  %v88 = vsel %vm62, %v46, 0
  %v91 = vsel %vm62, %v47, 0
  %v94 = vsel %vm62, %v48, 0
  %v97 = vsel %vm62, %v49, 0
  %v100 = vsel %vm62, %v50, 0
  %v103 = vsel %vm62, %v51, 0
  %v106 = vsel %vm62, %v52, 0
  %v109 = vsel %vm62, %v53, 0
  %vm111 = vcmask 1043456
  %v113 = vsel %vm111, %v54, 0
  %115 = vmatprep.subr.mxu0 0.0
  %116 = vmatpush1.msra.mxu0 %v113
  %117 = vmatprep.subr.mxu0 0.0
  %118 = vmatpush1.msra.mxu0 0.0
  %119 = vmatprep.subr.mxu0 0.0
  %120 = vmatpush1.msra.mxu0 0.0
  %121 = vmatprep.subr.mxu0 0.0
  %122 = vmatpush1.msra.mxu0 0.0
  %123 = vmatprep.subr.mxu0 0.0
  %124 = vmatpush1.msra.mxu0 0.0
  %125 = vmatprep.subr.mxu0 0.0
  %126 = vmatpush1.msra.mxu0 0.0
  %127 = vmatprep.subr.mxu0 0.0
  %128 = vmatpush1.msra.mxu0 0.0
  %129 = vmatprep.subr.mxu0 0.0
  %130 = vmatpush1.msra.mxu0 0.0
  %131 = vmatprep.subr.mxu0 0.0
  %132 = vmatpush1.msra.mxu0 0.0
  %133 = vmatprep.subr.mxu0 0.0
  %134 = vmatpush1.msra.mxu0 0.0
  %135 = vmatprep.subr.mxu0 0.0
  %136 = vmatpush1.msra.mxu0 0.0
  %137 = vmatprep.subr.mxu0 0.0
  %138 = vmatpush1.msra.mxu0 0.0
  %139 = vmatprep.subr.mxu0 0.0
  %140 = vmatpush1.msra.mxu0 0.0
  %141 = vmatprep.subr.mxu0 0.0
  %142 = vmatpush1.msra.mxu0 0.0
  %143 = vmatprep.subr.mxu0 0.0
  %144 = vmatpush1.msra.mxu0 0.0
  %145 = vmatprep.subr.mxu0 0.0
  %146 = vmatpush1.msra.mxu0 0.0
  %147 = vmatprep.subr.mxu0 0.0
  %148 = vmatpush1.msra.mxu0 0.0
  %149 = vmatprep.subr.mxu0 0.0
  %150 = vmatpush1.msra.mxu0 0.0
  %151 = vmatprep.subr.mxu0 0.0
  %152 = vmatpush1.msra.mxu0 0.0
  %153 = vmatprep.subr.mxu0 0.0
  %154 = vmatpush1.msra.mxu0 0.0
  %155 = vmatprep.subr.mxu0 0.0
  %156 = vmatpush1.msra.mxu0 0.0
  %157 = vmatprep.subr.mxu0 0.0
  %158 = vmatpush1.msra.mxu0 0.0
  %159 = vmatprep.subr.mxu0 0.0
  %160 = vmatpush1.msra.mxu0 0.0
  %161 = vmatprep.subr.mxu0 0.0
  %162 = vmatpush1.msra.mxu0 0.0
  %163 = vmatprep.subr.mxu0 0.0
  %164 = vmatpush1.msra.mxu0 0.0
  %165 = vmatprep.subr.mxu0 0.0
  %166 = vmatpush1.msra.mxu0 0.0
  %167 = vmatprep.subr.mxu0 0.0
  %168 = vmatpush1.msra.mxu0 0.0
  %169 = vmatprep.subr.mxu0 0.0
  %170 = vmatpush1.msra.mxu0 0.0
  %171 = vmatprep.subr.mxu0 0.0
  %172 = vmatpush1.msra.mxu0 0.0
  %173 = vmatprep.subr.mxu0 0.0
  %174 = vmatpush1.msra.mxu0 0.0
  %175 = vmatprep.subr.mxu0 0.0
  %176 = vmatpush1.msra.mxu0 0.0
  %177 = vmatprep.subr.mxu0 0.0
  %178 = vmatpush1.msra.mxu0 0.0
  %179 = vmatprep.mubr.f32.mxu0 0.0
  %180 = vmatmul.mubr.f32.gmra.mrb[0].mxu0 %v64
  %v181 = vpop.f32.mrb[0].mxu0
  %v182 = vadd.f32 %v60, %v181
  %v183 = vpop.f32.mrb[0].mxu0
  %184 = vmatprep.mubr.f32.mxu0 0.0
  %185 = vmatmul.mubr.f32.gmra.mrb[0].mxu0 %v67
  %v186 = vpop.f32.mrb[0].mxu0
  %v187 = vadd.f32 %v60, %v186
  %v188 = vpop.f32.mrb[0].mxu0
  %189 = vmatprep.mubr.f32.mxu0 0.0
  %190 = vmatmul.mubr.f32.gmra.mrb[0].mxu0 %v70
  %v191 = vpop.f32.mrb[0].mxu0
  %v192 = vadd.f32 %v60, %v191
  %v193 = vpop.f32.mrb[0].mxu0
  %194 = vmatprep.mubr.f32.mxu0 0.0
  %195 = vmatmul.mubr.f32.gmra.mrb[0].mxu0 %v73
  %v196 = vpop.f32.mrb[0].mxu0
  %v197 = vadd.f32 %v60, %v196
  %v198 = vpop.f32.mrb[0].mxu0
  %199 = vmatprep.mubr.f32.mxu0 0.0
  %200 = vmatmul.mubr.f32.gmra.mrb[0].mxu0 %v76
  %v201 = vpop.f32.mrb[0].mxu0
  %v202 = vadd.f32 %v60, %v201
  %v203 = vpop.f32.mrb[0].mxu0
  %204 = vmatprep.mubr.f32.mxu0 0.0
  %205 = vmatmul.mubr.f32.gmra.mrb[0].mxu0 %v79
  %v206 = vpop.f32.mrb[0].mxu0
  %v207 = vadd.f32 %v60, %v206
  %v208 = vpop.f32.mrb[0].mxu0
  %209 = vmatprep.mubr.f32.mxu0 0.0
  %210 = vmatmul.mubr.f32.gmra.mrb[0].mxu0 %v82
  %v211 = vpop.f32.mrb[0].mxu0
  %v212 = vadd.f32 %v60, %v211
  %v213 = vpop.f32.mrb[0].mxu0
  %214 = vmatprep.mubr.f32.mxu0 0.0
  %215 = vmatmul.mubr.f32.gmra.mrb[0].mxu0 %v85
  %v216 = vpop.f32.mrb[0].mxu0
  %v217 = vadd.f32 %v60, %v216
  %v218 = vpop.f32.mrb[0].mxu0
  %219 = vmatprep.mubr.f32.mxu0 0.0
  %220 = vmatmul.mubr.f32.gmra.mrb[0].mxu0 %v88
  %v221 = vpop.f32.mrb[0].mxu0
  %v222 = vadd.f32 %v60, %v221
  %v223 = vpop.f32.mrb[0].mxu0
  %224 = vmatprep.mubr.f32.mxu0 0.0
  %225 = vmatmul.mubr.f32.gmra.mrb[0].mxu0 %v91
  %v226 = vpop.f32.mrb[0].mxu0
  %v227 = vadd.f32 %v60, %v226
  %v228 = vpop.f32.mrb[0].mxu0
  %229 = vmatprep.mubr.f32.mxu0 0.0
  %230 = vmatmul.mubr.f32.gmra.mrb[0].mxu0 %v94
  %v231 = vpop.f32.mrb[0].mxu0
  %v232 = vadd.f32 %v60, %v231
  %v233 = vpop.f32.mrb[0].mxu0
  %234 = vmatprep.mubr.f32.mxu0 0.0
  %235 = vmatmul.mubr.f32.gmra.mrb[0].mxu0 %v97
  %v236 = vpop.f32.mrb[0].mxu0
  %v237 = vadd.f32 %v60, %v236
  %v238 = vpop.f32.mrb[0].mxu0
  %239 = vmatprep.mubr.f32.mxu0 0.0
  %240 = vmatmul.mubr.f32.gmra.mrb[0].mxu0 %v100
  %v241 = vpop.f32.mrb[0].mxu0
  %v242 = vadd.f32 %v60, %v241
  %v243 = vpop.f32.mrb[0].mxu0
  %244 = vmatprep.mubr.f32.mxu0 0.0
  %245 = vmatmul.mubr.f32.gmra.mrb[0].mxu0 %v103
  %v246 = vpop.f32.mrb[0].mxu0
  %v247 = vadd.f32 %v60, %v246
  %v248 = vpop.f32.mrb[0].mxu0
  %249 = vmatprep.mubr.f32.mxu0 0.0
  %250 = vmatmul.mubr.f32.gmra.mrb[0].mxu0 %v106
  %v251 = vpop.f32.mrb[0].mxu0
  %v252 = vadd.f32 %v60, %v251
  %v253 = vpop.f32.mrb[0].mxu0
  %254 = vmatprep.mubr.f32.mxu0 0.0
  %255 = vmatmul.mubr.f32.gmra.mrb[0].mxu0 %v109
  %v256 = vpop.f32.mrb[0].mxu0
  %v257 = vadd.f32 %v60, %v256
  %v258 = vpop.f32.mrb[0].mxu0
  %259 = vdwg.mxu0
  %v260 = vmax.f32 %v182, 0.0
  %v261 = vmax.f32 %v187, 0.0
  %v262 = vmax.f32 %v192, 0.0
  %v263 = vmax.f32 %v197, 0.0
  %v264 = vmax.f32 %v202, 0.0
  %v265 = vmax.f32 %v207, 0.0
  %v266 = vmax.f32 %v212, 0.0
  %v267 = vmax.f32 %v217, 0.0
  %v268 = vmax.f32 %v222, 0.0
  %v269 = vmax.f32 %v227, 0.0
  %v270 = vmax.f32 %v232, 0.0
  %v271 = vmax.f32 %v237, 0.0
  %v272 = vmax.f32 %v242, 0.0
  %v273 = vmax.f32 %v247, 0.0
  %v274 = vmax.f32 %v252, 0.0
  %v275 = vmax.f32 %v257, 0.0
  %v276 = vld [vmem:[%s1] sm:$0xff]
  %v277 = vld [vmem:[%s1 + $0x8] sm:$0xff]
  %v278 = vld [vmem:[%s1 + $0x10] sm:$0xff]
  %v279 = vld [vmem:[%s1 + $0x18] sm:$0xff]
  %v280 = vld [vmem:[%s1 + $0x20] sm:$0xff]
  %v281 = vld [vmem:[%s1 + $0x28] sm:$0xff]
  %v282 = vld [vmem:[%s1 + $0x30] sm:$0xff]
  %v283 = vld [vmem:[%s1 + $0x38] sm:$0xff]
  %v284 = vld [vmem:[%s1 + $0x40] sm:$0xff]
  %v285 = vld [vmem:[%s1 + $0x48] sm:$0xff]
  %v286 = vld [vmem:[%s1 + $0x50] sm:$0xff]
  %v287 = vld [vmem:[%s1 + $0x58] sm:$0xff]
  %v288 = vld [vmem:[%s1 + $0x60] sm:$0xff]
  %v289 = vld [vmem:[%s1 + $0x68] sm:$0xff]
  %v290 = vld [vmem:[%s1 + $0x70] sm:$0xff]
  %v291 = vld [vmem:[%s1 + $0x78] sm:$0xff]
  %v292 = vld [vmem:[%s2] sm:$0xff]
  %v293 = vld [vmem:[%s2 + $0x8] sm:$0xff]
  %v294 = vld [vmem:[%s2 + $0x10] sm:$0xff]
  %v295 = vld [vmem:[%s2 + $0x18] sm:$0xff]
  %v296 = vld [vmem:[%s2 + $0x20] sm:$0xff]
  %v297 = vld [vmem:[%s2 + $0x28] sm:$0xff]
  %v298 = vld [vmem:[%s2 + $0x30] sm:$0xff]
  %v299 = vld [vmem:[%s2 + $0x38] sm:$0xff]
  %v300 = vld [vmem:[%s2 + $0x40] sm:$0xff]
  %v301 = vld [vmem:[%s2 + $0x48] sm:$0xff]
  %v302 = vld [vmem:[%s2 + $0x50] sm:$0xff]
  %v303 = vld [vmem:[%s2 + $0x58] sm:$0xff]
  %v304 = vld [vmem:[%s2 + $0x60] sm:$0xff]
  %v305 = vld [vmem:[%s2 + $0x68] sm:$0xff]
  %v306 = vld [vmem:[%s2 + $0x70] sm:$0xff]
  %v307 = vld [vmem:[%s2 + $0x78] sm:$0xff]
  %v308 = vrot.slane %v260, 7
  %v309 = vrot.slane %v261, 7
  %v310 = vrot.slane %v262, 7
  %v311 = vrot.slane %v263, 7
  %v312 = vrot.slane %v264, 7
  %v313 = vrot.slane %v265, 7
  %v314 = vrot.slane %v266, 7
  %v315 = vrot.slane %v267, 7
  %v316 = vrot.slane %v268, 7
  %v317 = vrot.slane %v269, 7
  %v318 = vrot.slane %v270, 7
  %v319 = vrot.slane %v271, 7
  %v320 = vrot.slane %v272, 7
  %v321 = vrot.slane %v273, 7
  %v322 = vrot.slane %v274, 7
  %v323 = vrot.slane %v275, 7
  %v324 = vlaneseq
  %v325 = vshrl.u32 %v324, 7
  %vm326 = vcmp.lt.s32.totalorder %v325, 1
  %v327 = vsel %vm326, %v322, %v323
  %v328 = vsel %vm326, %v321, %v322
  %v329 = vsel %vm326, %v320, %v321
  %v330 = vsel %vm326, %v319, %v320
  %v331 = vsel %vm326, %v318, %v319
  %v332 = vsel %vm326, %v317, %v318
  %v333 = vsel %vm326, %v316, %v317
  %v334 = vsel %vm326, %v315, %v316
  %v335 = vsel %vm326, %v314, %v315
  %v336 = vsel %vm326, %v313, %v314
  %v337 = vsel %vm326, %v312, %v313
  %v338 = vsel %vm326, %v311, %v312
  %v339 = vsel %vm326, %v310, %v311
  %v340 = vsel %vm326, %v309, %v310
  %v341 = vsel %vm326, %v308, %v309
  %v342 = vsel %vm326, %v323, %v308
  %vm343 = vcmp.ge.s32.totalorder %v276, 1
  %vm344 = vcmp.ge.s32.totalorder %v277, 1
  %vm345 = vcmp.ge.s32.totalorder %v278, 1
  %vm346 = vcmp.ge.s32.totalorder %v279, 1
  %vm347 = vcmp.ge.s32.totalorder %v280, 1
  %vm348 = vcmp.ge.s32.totalorder %v281, 1
  %vm349 = vcmp.ge.s32.totalorder %v282, 1
  %vm350 = vcmp.ge.s32.totalorder %v283, 1
  %vm351 = vcmp.ge.s32.totalorder %v284, 1
  %vm352 = vcmp.ge.s32.totalorder %v285, 1
  %vm353 = vcmp.ge.s32.totalorder %v286, 1
  %vm354 = vcmp.ge.s32.totalorder %v287, 1
  %vm355 = vcmp.ge.s32.totalorder %v288, 1
  %vm356 = vcmp.ge.s32.totalorder %v289, 1
  %vm357 = vcmp.ge.s32.totalorder %v290, 1
  %vm358 = vcmp.ge.s32.totalorder %v291, 1
  %vm359 = vcmp.ge.s32.totalorder %v292, 1
  %vm360 = vcmp.ge.s32.totalorder %v293, 1
  %vm361 = vcmp.ge.s32.totalorder %v294, 1
  %vm362 = vcmp.ge.s32.totalorder %v295, 1
  %vm363 = vcmp.ge.s32.totalorder %v296, 1
  %vm364 = vcmp.ge.s32.totalorder %v297, 1
  %vm365 = vcmp.ge.s32.totalorder %v298, 1
  %vm366 = vcmp.ge.s32.totalorder %v299, 1
  %vm367 = vcmp.ge.s32.totalorder %v300, 1
  %vm368 = vcmp.ge.s32.totalorder %v301, 1
  %vm369 = vcmp.ge.s32.totalorder %v302, 1
  %vm370 = vcmp.ge.s32.totalorder %v303, 1
  %vm371 = vcmp.ge.s32.totalorder %v304, 1
  %vm372 = vcmp.ge.s32.totalorder %v305, 1
  %vm373 = vcmp.ge.s32.totalorder %v306, 1
  %vm374 = vcmp.ge.s32.totalorder %v307, 1
  %vm375 = vmand %vm343, %vm359
  %vm376 = vmand %vm344, %vm360
  %vm377 = vmand %vm345, %vm361
  %vm378 = vmand %vm346, %vm362
  %vm379 = vmand %vm347, %vm363
  %vm380 = vmand %vm348, %vm364
  %vm381 = vmand %vm349, %vm365
  %vm382 = vmand %vm350, %vm366
  %vm383 = vmand %vm351, %vm367
  %vm384 = vmand %vm352, %vm368
  %vm385 = vmand %vm353, %vm369
  %vm386 = vmand %vm354, %vm370
  %vm387 = vmand %vm355, %vm371
  %vm388 = vmand %vm356, %vm372
  %vm389 = vmand %vm357, %vm373
  %vm390 = vmand %vm358, %vm374
  %v391 = vsel %vm375, 1, 0
  %v392 = vsel %vm376, 1, 0
  %v393 = vsel %vm377, 1, 0
  %v394 = vsel %vm378, 1, 0
  %v395 = vsel %vm379, 1, 0
  %v396 = vsel %vm380, 1, 0
  %v397 = vsel %vm381, 1, 0
  %v398 = vsel %vm382, 1, 0
  %v399 = vsel %vm383, 1, 0
  %v400 = vsel %vm384, 1, 0
  %v401 = vsel %vm385, 1, 0
  %v402 = vsel %vm386, 1, 0
  %v403 = vsel %vm387, 1, 0
  %v404 = vsel %vm388, 1, 0
  %v405 = vsel %vm389, 1, 0
  %v406 = vsel %vm390, 1, 0
  %407 = vset.pattern.permute.xlu0 0
  %408 = vperm.xlu0 %407, %v391
  %v409 = vpop.permute.xlu0 %408
  %410 = vset.pattern.permute.xlu0 0
  %411 = vperm.xlu0 %410, %v392
  %v412 = vpop.permute.xlu0 %411
  %413 = vset.pattern.permute.xlu0 0
  %414 = vperm.xlu0 %413, %v393
  %v415 = vpop.permute.xlu0 %414
  %416 = vset.pattern.permute.xlu0 0
  %417 = vperm.xlu0 %416, %v394
  %v418 = vpop.permute.xlu0 %417
  %419 = vset.pattern.permute.xlu0 0
  %420 = vperm.xlu0 %419, %v395
  %v421 = vpop.permute.xlu0 %420
  %422 = vset.pattern.permute.xlu0 0
  %423 = vperm.xlu0 %422, %v396
  %v424 = vpop.permute.xlu0 %423
  %425 = vset.pattern.permute.xlu0 0
  %426 = vperm.xlu0 %425, %v397
  %v427 = vpop.permute.xlu0 %426
  %428 = vset.pattern.permute.xlu0 0
  %429 = vperm.xlu0 %428, %v398
  %v430 = vpop.permute.xlu0 %429
  %431 = vset.pattern.permute.xlu0 0
  %432 = vperm.xlu0 %431, %v399
  %v433 = vpop.permute.xlu0 %432
  %434 = vset.pattern.permute.xlu0 0
  %435 = vperm.xlu0 %434, %v400
  %v436 = vpop.permute.xlu0 %435
  %437 = vset.pattern.permute.xlu0 0
  %438 = vperm.xlu0 %437, %v401
  %v439 = vpop.permute.xlu0 %438
  %440 = vset.pattern.permute.xlu0 0
  %441 = vperm.xlu0 %440, %v402
  %v442 = vpop.permute.xlu0 %441
  %443 = vset.pattern.permute.xlu0 0
  %444 = vperm.xlu0 %443, %v403
  %v445 = vpop.permute.xlu0 %444
  %446 = vset.pattern.permute.xlu0 0
  %447 = vperm.xlu0 %446, %v404
  %v448 = vpop.permute.xlu0 %447
  %449 = vset.pattern.permute.xlu0 0
  %450 = vperm.xlu0 %449, %v405
  %v451 = vpop.permute.xlu0 %450
  %452 = vset.pattern.permute.xlu0 0
  %453 = vperm.xlu0 %452, %v406
  %v454 = vpop.permute.xlu0 %453
  %vm455 = vcmp.eq.s32.totalorder %v409, 1
  %vm456 = vcmp.eq.s32.totalorder %v412, 1
  %vm457 = vcmp.eq.s32.totalorder %v415, 1
  %vm458 = vcmp.eq.s32.totalorder %v418, 1
  %vm459 = vcmp.eq.s32.totalorder %v421, 1
  %vm460 = vcmp.eq.s32.totalorder %v424, 1
  %vm461 = vcmp.eq.s32.totalorder %v427, 1
  %vm462 = vcmp.eq.s32.totalorder %v430, 1
  %vm463 = vcmp.eq.s32.totalorder %v433, 1
  %vm464 = vcmp.eq.s32.totalorder %v436, 1
  %vm465 = vcmp.eq.s32.totalorder %v439, 1
  %vm466 = vcmp.eq.s32.totalorder %v442, 1
  %vm467 = vcmp.eq.s32.totalorder %v445, 1
  %vm468 = vcmp.eq.s32.totalorder %v448, 1
  %vm469 = vcmp.eq.s32.totalorder %v451, 1
  %vm470 = vcmp.eq.s32.totalorder %v454, 1
  %v471 = vsel %vm455, %v327, 0.0
  %v472 = vsel %vm456, %v342, 0.0
  %v473 = vsel %vm457, %v341, 0.0
  %v474 = vsel %vm458, %v340, 0.0
  %v475 = vsel %vm459, %v339, 0.0
  %v476 = vsel %vm460, %v338, 0.0
  %v477 = vsel %vm461, %v337, 0.0
  %v478 = vsel %vm462, %v336, 0.0
  %v479 = vsel %vm463, %v335, 0.0
  %v480 = vsel %vm464, %v334, 0.0
  %v481 = vsel %vm465, %v333, 0.0
  %v482 = vsel %vm466, %v332, 0.0
  %v483 = vsel %vm467, %v331, 0.0
  %v484 = vsel %vm468, %v330, 0.0
  %v485 = vsel %vm469, %v329, 0.0
  %v486 = vsel %vm470, %v328, 0.0
  %v487 = vld [vmem:[%s5] sm:$0xf]
  %v488 = vsel %vm343, 1, 0
  %v489 = vsel %vm344, 1, 0
  %v490 = vsel %vm345, 1, 0
  %v491 = vsel %vm346, 1, 0
  %v492 = vsel %vm347, 1, 0
  %v493 = vsel %vm348, 1, 0
  %v494 = vsel %vm349, 1, 0
  %v495 = vsel %vm350, 1, 0
  %v496 = vsel %vm351, 1, 0
  %v497 = vsel %vm352, 1, 0
  %v498 = vsel %vm353, 1, 0
  %v499 = vsel %vm354, 1, 0
  %v500 = vsel %vm355, 1, 0
  %v501 = vsel %vm356, 1, 0
  %v502 = vsel %vm357, 1, 0
  %v503 = vsel %vm358, 1, 0
  %504 = vset.pattern.permute.xlu0 0
  %505 = vperm.xlu0 %504, %v488
  %v506 = vpop.permute.xlu0 %505
  %507 = vset.pattern.permute.xlu0 0
  %508 = vperm.xlu0 %507, %v489
  %v509 = vpop.permute.xlu0 %508
  %510 = vset.pattern.permute.xlu0 0
  %511 = vperm.xlu0 %510, %v490
  %v512 = vpop.permute.xlu0 %511
  %513 = vset.pattern.permute.xlu0 0
  %514 = vperm.xlu0 %513, %v491
  %v515 = vpop.permute.xlu0 %514
  %516 = vset.pattern.permute.xlu0 0
  %517 = vperm.xlu0 %516, %v492
  %v518 = vpop.permute.xlu0 %517
  %519 = vset.pattern.permute.xlu0 0
  %520 = vperm.xlu0 %519, %v493
  %v521 = vpop.permute.xlu0 %520
  %522 = vset.pattern.permute.xlu0 0
  %523 = vperm.xlu0 %522, %v494
  %v524 = vpop.permute.xlu0 %523
  %525 = vset.pattern.permute.xlu0 0
  %526 = vperm.xlu0 %525, %v495
  %v527 = vpop.permute.xlu0 %526
  %528 = vset.pattern.permute.xlu0 0
  %529 = vperm.xlu0 %528, %v496
  %v530 = vpop.permute.xlu0 %529
  %531 = vset.pattern.permute.xlu0 0
  %532 = vperm.xlu0 %531, %v497
  %v533 = vpop.permute.xlu0 %532
  %534 = vset.pattern.permute.xlu0 0
  %535 = vperm.xlu0 %534, %v498
  %v536 = vpop.permute.xlu0 %535
  %537 = vset.pattern.permute.xlu0 0
  %538 = vperm.xlu0 %537, %v499
  %v539 = vpop.permute.xlu0 %538
  %540 = vset.pattern.permute.xlu0 0
  %541 = vperm.xlu0 %540, %v500
  %v542 = vpop.permute.xlu0 %541
  %543 = vset.pattern.permute.xlu0 0
  %544 = vperm.xlu0 %543, %v501
  %v545 = vpop.permute.xlu0 %544
  %546 = vset.pattern.permute.xlu0 0
  %547 = vperm.xlu0 %546, %v502
  %v548 = vpop.permute.xlu0 %547
  %549 = vset.pattern.permute.xlu0 0
  %550 = vperm.xlu0 %549, %v503
  %v551 = vpop.permute.xlu0 %550
  %vm552 = vcmp.eq.s32.totalorder %v506, 1
  %vm553 = vcmp.eq.s32.totalorder %v509, 1
  %vm554 = vcmp.eq.s32.totalorder %v512, 1
  %vm555 = vcmp.eq.s32.totalorder %v515, 1
  %vm556 = vcmp.eq.s32.totalorder %v518, 1
  %vm557 = vcmp.eq.s32.totalorder %v521, 1
  %vm558 = vcmp.eq.s32.totalorder %v524, 1
  %vm559 = vcmp.eq.s32.totalorder %v527, 1
  %vm560 = vcmp.eq.s32.totalorder %v530, 1
  %vm561 = vcmp.eq.s32.totalorder %v533, 1
  %vm562 = vcmp.eq.s32.totalorder %v536, 1
  %vm563 = vcmp.eq.s32.totalorder %v539, 1
  %vm564 = vcmp.eq.s32.totalorder %v542, 1
  %vm565 = vcmp.eq.s32.totalorder %v545, 1
  %vm566 = vcmp.eq.s32.totalorder %v548, 1
  %vm567 = vcmp.eq.s32.totalorder %v551, 1
  %v568 = vsel %vm552, %v275, 0.0
  %v569 = vsel %vm553, %v260, 0.0
  %v570 = vsel %vm554, %v261, 0.0
  %v571 = vsel %vm555, %v262, 0.0
  %v572 = vsel %vm556, %v263, 0.0
  %v573 = vsel %vm557, %v264, 0.0
  %v574 = vsel %vm558, %v265, 0.0
  %v575 = vsel %vm559, %v266, 0.0
  %v576 = vsel %vm560, %v267, 0.0
  %v577 = vsel %vm561, %v268, 0.0
  %v578 = vsel %vm562, %v269, 0.0
  %v579 = vsel %vm563, %v270, 0.0
  %v580 = vsel %vm564, %v271, 0.0
  %v581 = vsel %vm565, %v272, 0.0
  %v582 = vsel %vm566, %v273, 0.0
  %v583 = vsel %vm567, %v274, 0.0
  %s584 = scalar_lea.vmem %s5, 4
  %v585 = vld [vmem:[%s584] sm:$0xf]
  %v587 = vsel %vm62, %v568, 0
  %v590 = vsel %vm62, %v569, 0
  %v593 = vsel %vm62, %v570, 0
  %v596 = vsel %vm62, %v571, 0
  %v599 = vsel %vm62, %v572, 0
  %v602 = vsel %vm62, %v573, 0
  %v605 = vsel %vm62, %v574, 0
  %v608 = vsel %vm62, %v575, 0
  %v611 = vsel %vm62, %v576, 0
  %v614 = vsel %vm62, %v577, 0
  %v617 = vsel %vm62, %v578, 0
  %v620 = vsel %vm62, %v579, 0
  %v623 = vsel %vm62, %v580, 0
  %v626 = vsel %vm62, %v581, 0
  %v629 = vsel %vm62, %v582, 0
  %v632 = vsel %vm62, %v583, 0
  %v635 = vsel %vm111, %v585, 0
  %637 = vmatprep.subr.mxu0 0.0
  %638 = vmatpush1.msra.mxu0 %v635
  %639 = vmatprep.subr.mxu0 0.0
  %640 = vmatpush1.msra.mxu0 0.0
  %641 = vmatprep.subr.mxu0 0.0
  %642 = vmatpush1.msra.mxu0 0.0
  %643 = vmatprep.subr.mxu0 0.0
  %644 = vmatpush1.msra.mxu0 0.0
  %645 = vmatprep.subr.mxu0 0.0
  %646 = vmatpush1.msra.mxu0 0.0
  %647 = vmatprep.subr.mxu0 0.0
  %648 = vmatpush1.msra.mxu0 0.0
  %649 = vmatprep.subr.mxu0 0.0
  %650 = vmatpush1.msra.mxu0 0.0
  %651 = vmatprep.subr.mxu0 0.0
  %652 = vmatpush1.msra.mxu0 0.0
  %653 = vmatprep.subr.mxu0 0.0
  %654 = vmatpush1.msra.mxu0 0.0
  %655 = vmatprep.subr.mxu0 0.0
  %656 = vmatpush1.msra.mxu0 0.0
  %657 = vmatprep.subr.mxu0 0.0
  %658 = vmatpush1.msra.mxu0 0.0
  %659 = vmatprep.subr.mxu0 0.0
  %660 = vmatpush1.msra.mxu0 0.0
  %661 = vmatprep.subr.mxu0 0.0
  %662 = vmatpush1.msra.mxu0 0.0
  %663 = vmatprep.subr.mxu0 0.0
  %664 = vmatpush1.msra.mxu0 0.0
  %665 = vmatprep.subr.mxu0 0.0
  %666 = vmatpush1.msra.mxu0 0.0
  %667 = vmatprep.subr.mxu0 0.0
  %668 = vmatpush1.msra.mxu0 0.0
  %669 = vmatprep.subr.mxu0 0.0
  %670 = vmatpush1.msra.mxu0 0.0
  %671 = vmatprep.subr.mxu0 0.0
  %672 = vmatpush1.msra.mxu0 0.0
  %673 = vmatprep.subr.mxu0 0.0
  %674 = vmatpush1.msra.mxu0 0.0
  %675 = vmatprep.subr.mxu0 0.0
  %676 = vmatpush1.msra.mxu0 0.0
  %677 = vmatprep.subr.mxu0 0.0
  %678 = vmatpush1.msra.mxu0 0.0
  %679 = vmatprep.subr.mxu0 0.0
  %680 = vmatpush1.msra.mxu0 0.0
  %681 = vmatprep.subr.mxu0 0.0
  %682 = vmatpush1.msra.mxu0 0.0
  %683 = vmatprep.subr.mxu0 0.0
  %684 = vmatpush1.msra.mxu0 0.0
  %685 = vmatprep.subr.mxu0 0.0
  %686 = vmatpush1.msra.mxu0 0.0
  %687 = vmatprep.subr.mxu0 0.0
  %688 = vmatpush1.msra.mxu0 0.0
  %689 = vmatprep.subr.mxu0 0.0
  %690 = vmatpush1.msra.mxu0 0.0
  %691 = vmatprep.subr.mxu0 0.0
  %692 = vmatpush1.msra.mxu0 0.0
  %693 = vmatprep.subr.mxu0 0.0
  %694 = vmatpush1.msra.mxu0 0.0
  %695 = vmatprep.subr.mxu0 0.0
  %696 = vmatpush1.msra.mxu0 0.0
  %697 = vmatprep.subr.mxu0 0.0
  %698 = vmatpush1.msra.mxu0 0.0
  %699 = vmatprep.subr.mxu0 0.0
  %700 = vmatpush1.msra.mxu0 0.0
  %701 = vmatprep.mubr.f32.mxu0 0.0
  %702 = vmatmul.mubr.f32.gmra.mrb[0].mxu0 %v587
  %v703 = vpop.f32.mrb[0].mxu0
  %v704 = vadd.f32 0.0, %v703
  %v705 = vpop.f32.mrb[0].mxu0
  %706 = vmatprep.mubr.f32.mxu0 0.0
  %707 = vmatmul.mubr.f32.gmra.mrb[0].mxu0 %v590
  %v708 = vpop.f32.mrb[0].mxu0
  %v709 = vadd.f32 0.0, %v708
  %v710 = vpop.f32.mrb[0].mxu0
  %711 = vmatprep.mubr.f32.mxu0 0.0
  %712 = vmatmul.mubr.f32.gmra.mrb[0].mxu0 %v593
  %v713 = vpop.f32.mrb[0].mxu0
  %v714 = vadd.f32 0.0, %v713
  %v715 = vpop.f32.mrb[0].mxu0
  %716 = vmatprep.mubr.f32.mxu0 0.0
  %717 = vmatmul.mubr.f32.gmra.mrb[0].mxu0 %v596
  %v718 = vpop.f32.mrb[0].mxu0
  %v719 = vadd.f32 0.0, %v718
  %v720 = vpop.f32.mrb[0].mxu0
  %721 = vmatprep.mubr.f32.mxu0 0.0
  %722 = vmatmul.mubr.f32.gmra.mrb[0].mxu0 %v599
  %v723 = vpop.f32.mrb[0].mxu0
  %v724 = vadd.f32 0.0, %v723
  %v725 = vpop.f32.mrb[0].mxu0
  %726 = vmatprep.mubr.f32.mxu0 0.0
  %727 = vmatmul.mubr.f32.gmra.mrb[0].mxu0 %v602
  %v728 = vpop.f32.mrb[0].mxu0
  %v729 = vadd.f32 0.0, %v728
  %v730 = vpop.f32.mrb[0].mxu0
  %731 = vmatprep.mubr.f32.mxu0 0.0
  %732 = vmatmul.mubr.f32.gmra.mrb[0].mxu0 %v605
  %v733 = vpop.f32.mrb[0].mxu0
  %v734 = vadd.f32 0.0, %v733
  %v735 = vpop.f32.mrb[0].mxu0
  %736 = vmatprep.mubr.f32.mxu0 0.0
  %737 = vmatmul.mubr.f32.gmra.mrb[0].mxu0 %v608
  %v738 = vpop.f32.mrb[0].mxu0
  %v739 = vadd.f32 0.0, %v738
  %v740 = vpop.f32.mrb[0].mxu0
  %741 = vmatprep.mubr.f32.mxu0 0.0
  %742 = vmatmul.mubr.f32.gmra.mrb[0].mxu0 %v611
  %v743 = vpop.f32.mrb[0].mxu0
  %v744 = vadd.f32 0.0, %v743
  %v745 = vpop.f32.mrb[0].mxu0
  %746 = vmatprep.mubr.f32.mxu0 0.0
  %747 = vmatmul.mubr.f32.gmra.mrb[0].mxu0 %v614
  %v748 = vpop.f32.mrb[0].mxu0
  %v749 = vadd.f32 0.0, %v748
  %v750 = vpop.f32.mrb[0].mxu0
  %751 = vmatprep.mubr.f32.mxu0 0.0
  %752 = vmatmul.mubr.f32.gmra.mrb[0].mxu0 %v617
  %v753 = vpop.f32.mrb[0].mxu0
  %v754 = vadd.f32 0.0, %v753
  %v755 = vpop.f32.mrb[0].mxu0
  %756 = vmatprep.mubr.f32.mxu0 0.0
  %757 = vmatmul.mubr.f32.gmra.mrb[0].mxu0 %v620
  %v758 = vpop.f32.mrb[0].mxu0
  %v759 = vadd.f32 0.0, %v758
  %v760 = vpop.f32.mrb[0].mxu0
  %761 = vmatprep.mubr.f32.mxu0 0.0
  %762 = vmatmul.mubr.f32.gmra.mrb[0].mxu0 %v623
  %v763 = vpop.f32.mrb[0].mxu0
  %v764 = vadd.f32 0.0, %v763
  %v765 = vpop.f32.mrb[0].mxu0
  %766 = vmatprep.mubr.f32.mxu0 0.0
  %767 = vmatmul.mubr.f32.gmra.mrb[0].mxu0 %v626
  %v768 = vpop.f32.mrb[0].mxu0
  %v769 = vadd.f32 0.0, %v768
  %v770 = vpop.f32.mrb[0].mxu0
  %771 = vmatprep.mubr.f32.mxu0 0.0
  %772 = vmatmul.mubr.f32.gmra.mrb[0].mxu0 %v629
  %v773 = vpop.f32.mrb[0].mxu0
  %v774 = vadd.f32 0.0, %v773
  %v775 = vpop.f32.mrb[0].mxu0
  %776 = vmatprep.mubr.f32.mxu0 0.0
  %777 = vmatmul.mubr.f32.gmra.mrb[0].mxu0 %v632
  %v778 = vpop.f32.mrb[0].mxu0
  %v779 = vadd.f32 0.0, %v778
  %v780 = vpop.f32.mrb[0].mxu0
  %781 = vdwg.mxu0
  %v783 = vsel %vm62, %v471, 0
  %v786 = vsel %vm62, %v472, 0
  %v789 = vsel %vm62, %v473, 0
  %v792 = vsel %vm62, %v474, 0
  %v795 = vsel %vm62, %v475, 0
  %v798 = vsel %vm62, %v476, 0
  %v801 = vsel %vm62, %v477, 0
  %v804 = vsel %vm62, %v478, 0
  %v807 = vsel %vm62, %v479, 0
  %v810 = vsel %vm62, %v480, 0
  %v813 = vsel %vm62, %v481, 0
  %v816 = vsel %vm62, %v482, 0
  %v819 = vsel %vm62, %v483, 0
  %v822 = vsel %vm62, %v484, 0
  %v825 = vsel %vm62, %v485, 0
  %v828 = vsel %vm62, %v486, 0
  %v831 = vsel %vm111, %v487, 0
  %833 = vmatprep.subr.mxu0 0.0
  %834 = vmatpush1.msra.mxu0 %v831
  %835 = vmatprep.subr.mxu0 0.0
  %836 = vmatpush1.msra.mxu0 0.0
  %837 = vmatprep.subr.mxu0 0.0
  %838 = vmatpush1.msra.mxu0 0.0
  %839 = vmatprep.subr.mxu0 0.0
  %840 = vmatpush1.msra.mxu0 0.0
  %841 = vmatprep.subr.mxu0 0.0
  %842 = vmatpush1.msra.mxu0 0.0
  %843 = vmatprep.subr.mxu0 0.0
  %844 = vmatpush1.msra.mxu0 0.0
  %845 = vmatprep.subr.mxu0 0.0
  %846 = vmatpush1.msra.mxu0 0.0
  %847 = vmatprep.subr.mxu0 0.0
  %848 = vmatpush1.msra.mxu0 0.0
  %849 = vmatprep.subr.mxu0 0.0
  %850 = vmatpush1.msra.mxu0 0.0
  %851 = vmatprep.subr.mxu0 0.0
  %852 = vmatpush1.msra.mxu0 0.0
  %853 = vmatprep.subr.mxu0 0.0
  %854 = vmatpush1.msra.mxu0 0.0
  %855 = vmatprep.subr.mxu0 0.0
  %856 = vmatpush1.msra.mxu0 0.0
  %857 = vmatprep.subr.mxu0 0.0
  %858 = vmatpush1.msra.mxu0 0.0
  %859 = vmatprep.subr.mxu0 0.0
  %860 = vmatpush1.msra.mxu0 0.0
  %861 = vmatprep.subr.mxu0 0.0
  %862 = vmatpush1.msra.mxu0 0.0
  %863 = vmatprep.subr.mxu0 0.0
  %864 = vmatpush1.msra.mxu0 0.0
  %865 = vmatprep.subr.mxu0 0.0
  %866 = vmatpush1.msra.mxu0 0.0
  %867 = vmatprep.subr.mxu0 0.0
  %868 = vmatpush1.msra.mxu0 0.0
  %869 = vmatprep.subr.mxu0 0.0
  %870 = vmatpush1.msra.mxu0 0.0
  %871 = vmatprep.subr.mxu0 0.0
  %872 = vmatpush1.msra.mxu0 0.0
  %873 = vmatprep.subr.mxu0 0.0
  %874 = vmatpush1.msra.mxu0 0.0
  %875 = vmatprep.subr.mxu0 0.0
  %876 = vmatpush1.msra.mxu0 0.0
  %877 = vmatprep.subr.mxu0 0.0
  %878 = vmatpush1.msra.mxu0 0.0
  %879 = vmatprep.subr.mxu0 0.0
  %880 = vmatpush1.msra.mxu0 0.0
  %881 = vmatprep.subr.mxu0 0.0
  %882 = vmatpush1.msra.mxu0 0.0
  %883 = vmatprep.subr.mxu0 0.0
  %884 = vmatpush1.msra.mxu0 0.0
  %885 = vmatprep.subr.mxu0 0.0
  %886 = vmatpush1.msra.mxu0 0.0
  %887 = vmatprep.subr.mxu0 0.0
  %888 = vmatpush1.msra.mxu0 0.0
  %889 = vmatprep.subr.mxu0 0.0
  %890 = vmatpush1.msra.mxu0 0.0
  %891 = vmatprep.subr.mxu0 0.0
  %892 = vmatpush1.msra.mxu0 0.0
  %893 = vmatprep.subr.mxu0 0.0
  %894 = vmatpush1.msra.mxu0 0.0
  %895 = vmatprep.subr.mxu0 0.0
  %896 = vmatpush1.msra.mxu0 0.0
  %897 = vmatprep.mubr.f32.mxu0 0.0
  %898 = vmatmul.mubr.f32.gmra.mrb[0].mxu0 %v783
  %v899 = vpop.f32.mrb[0].mxu0
  %v900 = vadd.f32 %v704, %v899
  %v901 = vpop.f32.mrb[0].mxu0
  %902 = vmatprep.mubr.f32.mxu0 0.0
  %903 = vmatmul.mubr.f32.gmra.mrb[0].mxu0 %v786
  %v904 = vpop.f32.mrb[0].mxu0
  %v905 = vadd.f32 %v709, %v904
  %v906 = vpop.f32.mrb[0].mxu0
  %907 = vmatprep.mubr.f32.mxu0 0.0
  %908 = vmatmul.mubr.f32.gmra.mrb[0].mxu0 %v789
  %v909 = vpop.f32.mrb[0].mxu0
  %v910 = vadd.f32 %v714, %v909
  %v911 = vpop.f32.mrb[0].mxu0
  %912 = vmatprep.mubr.f32.mxu0 0.0
  %913 = vmatmul.mubr.f32.gmra.mrb[0].mxu0 %v792
  %v914 = vpop.f32.mrb[0].mxu0
  %v915 = vadd.f32 %v719, %v914
  %v916 = vpop.f32.mrb[0].mxu0
  %917 = vmatprep.mubr.f32.mxu0 0.0
  %918 = vmatmul.mubr.f32.gmra.mrb[0].mxu0 %v795
  %v919 = vpop.f32.mrb[0].mxu0
  %v920 = vadd.f32 %v724, %v919
  %v921 = vpop.f32.mrb[0].mxu0
  %922 = vmatprep.mubr.f32.mxu0 0.0
  %923 = vmatmul.mubr.f32.gmra.mrb[0].mxu0 %v798
  %v924 = vpop.f32.mrb[0].mxu0
  %v925 = vadd.f32 %v729, %v924
  %v926 = vpop.f32.mrb[0].mxu0
  %927 = vmatprep.mubr.f32.mxu0 0.0
  %928 = vmatmul.mubr.f32.gmra.mrb[0].mxu0 %v801
  %v929 = vpop.f32.mrb[0].mxu0
  %v930 = vadd.f32 %v734, %v929
  %v931 = vpop.f32.mrb[0].mxu0
  %932 = vmatprep.mubr.f32.mxu0 0.0
  %933 = vmatmul.mubr.f32.gmra.mrb[0].mxu0 %v804
  %v934 = vpop.f32.mrb[0].mxu0
  %v935 = vadd.f32 %v739, %v934
  %v936 = vpop.f32.mrb[0].mxu0
  %937 = vmatprep.mubr.f32.mxu0 0.0
  %938 = vmatmul.mubr.f32.gmra.mrb[0].mxu0 %v807
  %v939 = vpop.f32.mrb[0].mxu0
  %v940 = vadd.f32 %v744, %v939
  %v941 = vpop.f32.mrb[0].mxu0
  %942 = vmatprep.mubr.f32.mxu0 0.0
  %943 = vmatmul.mubr.f32.gmra.mrb[0].mxu0 %v810
  %v944 = vpop.f32.mrb[0].mxu0
  %v945 = vadd.f32 %v749, %v944
  %v946 = vpop.f32.mrb[0].mxu0
  %947 = vmatprep.mubr.f32.mxu0 0.0
  %948 = vmatmul.mubr.f32.gmra.mrb[0].mxu0 %v813
  %v949 = vpop.f32.mrb[0].mxu0
  %v950 = vadd.f32 %v754, %v949
  %v951 = vpop.f32.mrb[0].mxu0
  %952 = vmatprep.mubr.f32.mxu0 0.0
  %953 = vmatmul.mubr.f32.gmra.mrb[0].mxu0 %v816
  %v954 = vpop.f32.mrb[0].mxu0
  %v955 = vadd.f32 %v759, %v954
  %v956 = vpop.f32.mrb[0].mxu0
  %957 = vmatprep.mubr.f32.mxu0 0.0
  %958 = vmatmul.mubr.f32.gmra.mrb[0].mxu0 %v819
  %v959 = vpop.f32.mrb[0].mxu0
  %v960 = vadd.f32 %v764, %v959
  %v961 = vpop.f32.mrb[0].mxu0
  %962 = vmatprep.mubr.f32.mxu0 0.0
  %963 = vmatmul.mubr.f32.gmra.mrb[0].mxu0 %v822
  %v964 = vpop.f32.mrb[0].mxu0
  %v965 = vadd.f32 %v769, %v964
  %v966 = vpop.f32.mrb[0].mxu0
  %967 = vmatprep.mubr.f32.mxu0 0.0
  %968 = vmatmul.mubr.f32.gmra.mrb[0].mxu0 %v825
  %v969 = vpop.f32.mrb[0].mxu0
  %v970 = vadd.f32 %v774, %v969
  %v971 = vpop.f32.mrb[0].mxu0
  %972 = vmatprep.mubr.f32.mxu0 0.0
  %973 = vmatmul.mubr.f32.gmra.mrb[0].mxu0 %v828
  %v974 = vpop.f32.mrb[0].mxu0
  %v975 = vadd.f32 %v779, %v974
  %v976 = vpop.f32.mrb[0].mxu0
  %977 = vdwg.mxu0
  %v978 = vrot.slane %v260, 1
  %v979 = vrot.slane %v261, 1
  %v980 = vrot.slane %v262, 1
  %v981 = vrot.slane %v263, 1
  %v982 = vrot.slane %v264, 1
  %v983 = vrot.slane %v265, 1
  %v984 = vrot.slane %v266, 1
  %v985 = vrot.slane %v267, 1
  %v986 = vrot.slane %v268, 1
  %v987 = vrot.slane %v269, 1
  %v988 = vrot.slane %v270, 1
  %v989 = vrot.slane %v271, 1
  %v990 = vrot.slane %v272, 1
  %v991 = vrot.slane %v273, 1
  %v992 = vrot.slane %v274, 1
  %v993 = vrot.slane %v275, 1
  %vm994 = vcmp.lt.s32.totalorder %v325, 7
  %v995 = vsel %vm994, %v992, %v993
  %v996 = vsel %vm994, %v991, %v992
  %v997 = vsel %vm994, %v990, %v991
  %v998 = vsel %vm994, %v989, %v990
  %v999 = vsel %vm994, %v988, %v989
  %v1000 = vsel %vm994, %v987, %v988
  %v1001 = vsel %vm994, %v986, %v987
  %v1002 = vsel %vm994, %v985, %v986
  %v1003 = vsel %vm994, %v984, %v985
  %v1004 = vsel %vm994, %v983, %v984
  %v1005 = vsel %vm994, %v982, %v983
  %v1006 = vsel %vm994, %v981, %v982
  %v1007 = vsel %vm994, %v980, %v981
  %v1008 = vsel %vm994, %v979, %v980
  %v1009 = vsel %vm994, %v978, %v979
  %v1010 = vsel %vm994, %v993, %v978
  %vm1011 = vcmp.lt.s32.totalorder %v292, 7
  %vm1012 = vcmp.lt.s32.totalorder %v293, 7
  %vm1013 = vcmp.lt.s32.totalorder %v294, 7
  %vm1014 = vcmp.lt.s32.totalorder %v295, 7
  %vm1015 = vcmp.lt.s32.totalorder %v296, 7
  %vm1016 = vcmp.lt.s32.totalorder %v297, 7
  %vm1017 = vcmp.lt.s32.totalorder %v298, 7
  %vm1018 = vcmp.lt.s32.totalorder %v299, 7
  %vm1019 = vcmp.lt.s32.totalorder %v300, 7
  %vm1020 = vcmp.lt.s32.totalorder %v301, 7
  %vm1021 = vcmp.lt.s32.totalorder %v302, 7
  %vm1022 = vcmp.lt.s32.totalorder %v303, 7
  %vm1023 = vcmp.lt.s32.totalorder %v304, 7
  %vm1024 = vcmp.lt.s32.totalorder %v305, 7
  %vm1025 = vcmp.lt.s32.totalorder %v306, 7
  %vm1026 = vcmp.lt.s32.totalorder %v307, 7
  %vm1027 = vmand %vm343, %vm1011
  %vm1028 = vmand %vm344, %vm1012
  %vm1029 = vmand %vm345, %vm1013
  %vm1030 = vmand %vm346, %vm1014
  %vm1031 = vmand %vm347, %vm1015
  %vm1032 = vmand %vm348, %vm1016
  %vm1033 = vmand %vm349, %vm1017
  %vm1034 = vmand %vm350, %vm1018
  %vm1035 = vmand %vm351, %vm1019
  %vm1036 = vmand %vm352, %vm1020
  %vm1037 = vmand %vm353, %vm1021
  %vm1038 = vmand %vm354, %vm1022
  %vm1039 = vmand %vm355, %vm1023
  %vm1040 = vmand %vm356, %vm1024
  %vm1041 = vmand %vm357, %vm1025
  %vm1042 = vmand %vm358, %vm1026
  %v1043 = vsel %vm1027, 1, 0
  %v1044 = vsel %vm1028, 1, 0
  %v1045 = vsel %vm1029, 1, 0
  %v1046 = vsel %vm1030, 1, 0
  %v1047 = vsel %vm1031, 1, 0
  %v1048 = vsel %vm1032, 1, 0
  %v1049 = vsel %vm1033, 1, 0
  %v1050 = vsel %vm1034, 1, 0
  %v1051 = vsel %vm1035, 1, 0
  %v1052 = vsel %vm1036, 1, 0
  %v1053 = vsel %vm1037, 1, 0
  %v1054 = vsel %vm1038, 1, 0
  %v1055 = vsel %vm1039, 1, 0
  %v1056 = vsel %vm1040, 1, 0
  %v1057 = vsel %vm1041, 1, 0
  %v1058 = vsel %vm1042, 1, 0
  %1059 = vset.pattern.permute.xlu0 0
  %1060 = vperm.xlu0 %1059, %v1043
  %v1061 = vpop.permute.xlu0 %1060
  %1062 = vset.pattern.permute.xlu0 0
  %1063 = vperm.xlu0 %1062, %v1044
  %v1064 = vpop.permute.xlu0 %1063
  %1065 = vset.pattern.permute.xlu0 0
  %1066 = vperm.xlu0 %1065, %v1045
  %v1067 = vpop.permute.xlu0 %1066
  %1068 = vset.pattern.permute.xlu0 0
  %1069 = vperm.xlu0 %1068, %v1046
  %v1070 = vpop.permute.xlu0 %1069
  %1071 = vset.pattern.permute.xlu0 0
  %1072 = vperm.xlu0 %1071, %v1047
  %v1073 = vpop.permute.xlu0 %1072
  %1074 = vset.pattern.permute.xlu0 0
  %1075 = vperm.xlu0 %1074, %v1048
  %v1076 = vpop.permute.xlu0 %1075
  %1077 = vset.pattern.permute.xlu0 0
  %1078 = vperm.xlu0 %1077, %v1049
  %v1079 = vpop.permute.xlu0 %1078
  %1080 = vset.pattern.permute.xlu0 0
  %1081 = vperm.xlu0 %1080, %v1050
  %v1082 = vpop.permute.xlu0 %1081
  %1083 = vset.pattern.permute.xlu0 0
  %1084 = vperm.xlu0 %1083, %v1051
  %v1085 = vpop.permute.xlu0 %1084
  %1086 = vset.pattern.permute.xlu0 0
  %1087 = vperm.xlu0 %1086, %v1052
  %v1088 = vpop.permute.xlu0 %1087
  %1089 = vset.pattern.permute.xlu0 0
  %1090 = vperm.xlu0 %1089, %v1053
  %v1091 = vpop.permute.xlu0 %1090
  %1092 = vset.pattern.permute.xlu0 0
  %1093 = vperm.xlu0 %1092, %v1054
  %v1094 = vpop.permute.xlu0 %1093
  %1095 = vset.pattern.permute.xlu0 0
  %1096 = vperm.xlu0 %1095, %v1055
  %v1097 = vpop.permute.xlu0 %1096
  %1098 = vset.pattern.permute.xlu0 0
  %1099 = vperm.xlu0 %1098, %v1056
  %v1100 = vpop.permute.xlu0 %1099
  %1101 = vset.pattern.permute.xlu0 0
  %1102 = vperm.xlu0 %1101, %v1057
  %v1103 = vpop.permute.xlu0 %1102
  %1104 = vset.pattern.permute.xlu0 0
  %1105 = vperm.xlu0 %1104, %v1058
  %v1106 = vpop.permute.xlu0 %1105
  %vm1107 = vcmp.eq.s32.totalorder %v1061, 1
  %vm1108 = vcmp.eq.s32.totalorder %v1064, 1
  %vm1109 = vcmp.eq.s32.totalorder %v1067, 1
  %vm1110 = vcmp.eq.s32.totalorder %v1070, 1
  %vm1111 = vcmp.eq.s32.totalorder %v1073, 1
  %vm1112 = vcmp.eq.s32.totalorder %v1076, 1
  %vm1113 = vcmp.eq.s32.totalorder %v1079, 1
  %vm1114 = vcmp.eq.s32.totalorder %v1082, 1
  %vm1115 = vcmp.eq.s32.totalorder %v1085, 1
  %vm1116 = vcmp.eq.s32.totalorder %v1088, 1
  %vm1117 = vcmp.eq.s32.totalorder %v1091, 1
  %vm1118 = vcmp.eq.s32.totalorder %v1094, 1
  %vm1119 = vcmp.eq.s32.totalorder %v1097, 1
  %vm1120 = vcmp.eq.s32.totalorder %v1100, 1
  %vm1121 = vcmp.eq.s32.totalorder %v1103, 1
  %vm1122 = vcmp.eq.s32.totalorder %v1106, 1
  %v1123 = vsel %vm1107, %v1010, 0.0
  %v1124 = vsel %vm1108, %v1009, 0.0
  %v1125 = vsel %vm1109, %v1008, 0.0
  %v1126 = vsel %vm1110, %v1007, 0.0
  %v1127 = vsel %vm1111, %v1006, 0.0
  %v1128 = vsel %vm1112, %v1005, 0.0
  %v1129 = vsel %vm1113, %v1004, 0.0
  %v1130 = vsel %vm1114, %v1003, 0.0
  %v1131 = vsel %vm1115, %v1002, 0.0
  %v1132 = vsel %vm1116, %v1001, 0.0
  %v1133 = vsel %vm1117, %v1000, 0.0
  %v1134 = vsel %vm1118, %v999, 0.0
  %v1135 = vsel %vm1119, %v998, 0.0
  %v1136 = vsel %vm1120, %v997, 0.0
  %v1137 = vsel %vm1121, %v996, 0.0
  %v1138 = vsel %vm1122, %v995, 0.0
  %s1139 = scalar_lea.vmem %s5, 8
  %v1140 = vld [vmem:[%s1139] sm:$0xf]
  %v1142 = vsel %vm62, %v1123, 0
  %v1145 = vsel %vm62, %v1124, 0
  %v1148 = vsel %vm62, %v1125, 0
  %v1151 = vsel %vm62, %v1126, 0
  %v1154 = vsel %vm62, %v1127, 0
  %v1157 = vsel %vm62, %v1128, 0
  %v1160 = vsel %vm62, %v1129, 0
  %v1163 = vsel %vm62, %v1130, 0
  %v1166 = vsel %vm62, %v1131, 0
  %v1169 = vsel %vm62, %v1132, 0
  %v1172 = vsel %vm62, %v1133, 0
  %v1175 = vsel %vm62, %v1134, 0
  %v1178 = vsel %vm62, %v1135, 0
  %v1181 = vsel %vm62, %v1136, 0
  %v1184 = vsel %vm62, %v1137, 0
  %v1187 = vsel %vm62, %v1138, 0
  %v1190 = vsel %vm111, %v1140, 0
  %1192 = vmatprep.subr.mxu0 0.0
  %1193 = vmatpush1.msra.mxu0 %v1190
  %1194 = vmatprep.subr.mxu0 0.0
  %1195 = vmatpush1.msra.mxu0 0.0
  %1196 = vmatprep.subr.mxu0 0.0
  %1197 = vmatpush1.msra.mxu0 0.0
  %1198 = vmatprep.subr.mxu0 0.0
  %1199 = vmatpush1.msra.mxu0 0.0
  %1200 = vmatprep.subr.mxu0 0.0
  %1201 = vmatpush1.msra.mxu0 0.0
  %1202 = vmatprep.subr.mxu0 0.0
  %1203 = vmatpush1.msra.mxu0 0.0
  %1204 = vmatprep.subr.mxu0 0.0
  %1205 = vmatpush1.msra.mxu0 0.0
  %1206 = vmatprep.subr.mxu0 0.0
  %1207 = vmatpush1.msra.mxu0 0.0
  %1208 = vmatprep.subr.mxu0 0.0
  %1209 = vmatpush1.msra.mxu0 0.0
  %1210 = vmatprep.subr.mxu0 0.0
  %1211 = vmatpush1.msra.mxu0 0.0
  %1212 = vmatprep.subr.mxu0 0.0
  %1213 = vmatpush1.msra.mxu0 0.0
  %1214 = vmatprep.subr.mxu0 0.0
  %1215 = vmatpush1.msra.mxu0 0.0
  %1216 = vmatprep.subr.mxu0 0.0
  %1217 = vmatpush1.msra.mxu0 0.0
  %1218 = vmatprep.subr.mxu0 0.0
  %1219 = vmatpush1.msra.mxu0 0.0
  %1220 = vmatprep.subr.mxu0 0.0
  %1221 = vmatpush1.msra.mxu0 0.0
  %1222 = vmatprep.subr.mxu0 0.0
  %1223 = vmatpush1.msra.mxu0 0.0
  %1224 = vmatprep.subr.mxu0 0.0
  %1225 = vmatpush1.msra.mxu0 0.0
  %1226 = vmatprep.subr.mxu0 0.0
  %1227 = vmatpush1.msra.mxu0 0.0
  %1228 = vmatprep.subr.mxu0 0.0
  %1229 = vmatpush1.msra.mxu0 0.0
  %1230 = vmatprep.subr.mxu0 0.0
  %1231 = vmatpush1.msra.mxu0 0.0
  %1232 = vmatprep.subr.mxu0 0.0
  %1233 = vmatpush1.msra.mxu0 0.0
  %1234 = vmatprep.subr.mxu0 0.0
  %1235 = vmatpush1.msra.mxu0 0.0
  %1236 = vmatprep.subr.mxu0 0.0
  %1237 = vmatpush1.msra.mxu0 0.0
  %1238 = vmatprep.subr.mxu0 0.0
  %1239 = vmatpush1.msra.mxu0 0.0
  %1240 = vmatprep.subr.mxu0 0.0
  %1241 = vmatpush1.msra.mxu0 0.0
  %1242 = vmatprep.subr.mxu0 0.0
  %1243 = vmatpush1.msra.mxu0 0.0
  %1244 = vmatprep.subr.mxu0 0.0
  %1245 = vmatpush1.msra.mxu0 0.0
  %1246 = vmatprep.subr.mxu0 0.0
  %1247 = vmatpush1.msra.mxu0 0.0
  %1248 = vmatprep.subr.mxu0 0.0
  %1249 = vmatpush1.msra.mxu0 0.0
  %1250 = vmatprep.subr.mxu0 0.0
  %1251 = vmatpush1.msra.mxu0 0.0
  %1252 = vmatprep.subr.mxu0 0.0
  %1253 = vmatpush1.msra.mxu0 0.0
  %1254 = vmatprep.subr.mxu0 0.0
  %1255 = vmatpush1.msra.mxu0 0.0
  %1256 = vmatprep.mubr.f32.mxu0 0.0
  %1257 = vmatmul.mubr.f32.gmra.mrb[0].mxu0 %v1142
  %v1258 = vpop.f32.mrb[0].mxu0
  %v1259 = vadd.f32 0.0, %v1258
  %v1260 = vpop.f32.mrb[0].mxu0
  %1261 = vmatprep.mubr.f32.mxu0 0.0
  %1262 = vmatmul.mubr.f32.gmra.mrb[0].mxu0 %v1145
  %v1263 = vpop.f32.mrb[0].mxu0
  %v1264 = vadd.f32 0.0, %v1263
  %v1265 = vpop.f32.mrb[0].mxu0
  %1266 = vmatprep.mubr.f32.mxu0 0.0
  %1267 = vmatmul.mubr.f32.gmra.mrb[0].mxu0 %v1148
  %v1268 = vpop.f32.mrb[0].mxu0
  %v1269 = vadd.f32 0.0, %v1268
  %v1270 = vpop.f32.mrb[0].mxu0
  %1271 = vmatprep.mubr.f32.mxu0 0.0
  %1272 = vmatmul.mubr.f32.gmra.mrb[0].mxu0 %v1151
  %v1273 = vpop.f32.mrb[0].mxu0
  %v1274 = vadd.f32 0.0, %v1273
  %v1275 = vpop.f32.mrb[0].mxu0
  %1276 = vmatprep.mubr.f32.mxu0 0.0
  %1277 = vmatmul.mubr.f32.gmra.mrb[0].mxu0 %v1154
  %v1278 = vpop.f32.mrb[0].mxu0
  %v1279 = vadd.f32 0.0, %v1278
  %v1280 = vpop.f32.mrb[0].mxu0
  %1281 = vmatprep.mubr.f32.mxu0 0.0
  %1282 = vmatmul.mubr.f32.gmra.mrb[0].mxu0 %v1157
  %v1283 = vpop.f32.mrb[0].mxu0
  %v1284 = vadd.f32 0.0, %v1283
  %v1285 = vpop.f32.mrb[0].mxu0
  %1286 = vmatprep.mubr.f32.mxu0 0.0
  %1287 = vmatmul.mubr.f32.gmra.mrb[0].mxu0 %v1160
  %v1288 = vpop.f32.mrb[0].mxu0
  %v1289 = vadd.f32 0.0, %v1288
  %v1290 = vpop.f32.mrb[0].mxu0
  %1291 = vmatprep.mubr.f32.mxu0 0.0
  %1292 = vmatmul.mubr.f32.gmra.mrb[0].mxu0 %v1163
  %v1293 = vpop.f32.mrb[0].mxu0
  %v1294 = vadd.f32 0.0, %v1293
  %v1295 = vpop.f32.mrb[0].mxu0
  %1296 = vmatprep.mubr.f32.mxu0 0.0
  %1297 = vmatmul.mubr.f32.gmra.mrb[0].mxu0 %v1166
  %v1298 = vpop.f32.mrb[0].mxu0
  %v1299 = vadd.f32 0.0, %v1298
  %v1300 = vpop.f32.mrb[0].mxu0
  %1301 = vmatprep.mubr.f32.mxu0 0.0
  %1302 = vmatmul.mubr.f32.gmra.mrb[0].mxu0 %v1169
  %v1303 = vpop.f32.mrb[0].mxu0
  %v1304 = vadd.f32 0.0, %v1303
  %v1305 = vpop.f32.mrb[0].mxu0
  %1306 = vmatprep.mubr.f32.mxu0 0.0
  %1307 = vmatmul.mubr.f32.gmra.mrb[0].mxu0 %v1172
  %v1308 = vpop.f32.mrb[0].mxu0
  %v1309 = vadd.f32 0.0, %v1308
  %v1310 = vpop.f32.mrb[0].mxu0
  %1311 = vmatprep.mubr.f32.mxu0 0.0
  %1312 = vmatmul.mubr.f32.gmra.mrb[0].mxu0 %v1175
  %v1313 = vpop.f32.mrb[0].mxu0
  %v1314 = vadd.f32 0.0, %v1313
  %v1315 = vpop.f32.mrb[0].mxu0
  %1316 = vmatprep.mubr.f32.mxu0 0.0
  %1317 = vmatmul.mubr.f32.gmra.mrb[0].mxu0 %v1178
  %v1318 = vpop.f32.mrb[0].mxu0
  %v1319 = vadd.f32 0.0, %v1318
  %v1320 = vpop.f32.mrb[0].mxu0
  %1321 = vmatprep.mubr.f32.mxu0 0.0
  %1322 = vmatmul.mubr.f32.gmra.mrb[0].mxu0 %v1181
  %v1323 = vpop.f32.mrb[0].mxu0
  %v1324 = vadd.f32 0.0, %v1323
  %v1325 = vpop.f32.mrb[0].mxu0
  %1326 = vmatprep.mubr.f32.mxu0 0.0
  %1327 = vmatmul.mubr.f32.gmra.mrb[0].mxu0 %v1184
  %v1328 = vpop.f32.mrb[0].mxu0
  %v1329 = vadd.f32 0.0, %v1328
  %v1330 = vpop.f32.mrb[0].mxu0
  %1331 = vmatprep.mubr.f32.mxu0 0.0
  %1332 = vmatmul.mubr.f32.gmra.mrb[0].mxu0 %v1187
  %v1333 = vpop.f32.mrb[0].mxu0
  %v1334 = vadd.f32 0.0, %v1333
  %v1335 = vpop.f32.mrb[0].mxu0
  %1336 = vdwg.mxu0
  %v1337 = vadd.f32 %v900, %v1259
  %v1338 = vadd.f32 %v905, %v1264
  %v1339 = vadd.f32 %v910, %v1269
  %v1340 = vadd.f32 %v915, %v1274
  %v1341 = vadd.f32 %v920, %v1279
  %v1342 = vadd.f32 %v925, %v1284
  %v1343 = vadd.f32 %v930, %v1289
  %v1344 = vadd.f32 %v935, %v1294
  %v1345 = vadd.f32 %v940, %v1299
  %v1346 = vadd.f32 %v945, %v1304
  %v1347 = vadd.f32 %v950, %v1309
  %v1348 = vadd.f32 %v955, %v1314
  %v1349 = vadd.f32 %v960, %v1319
  %v1350 = vadd.f32 %v965, %v1324
  %v1351 = vadd.f32 %v970, %v1329
  %v1352 = vadd.f32 %v975, %v1334
  %v1353 = vsel %vm359, 1, 0
  %v1354 = vsel %vm360, 1, 0
  %v1355 = vsel %vm361, 1, 0
  %v1356 = vsel %vm362, 1, 0
  %v1357 = vsel %vm363, 1, 0
  %v1358 = vsel %vm364, 1, 0
  %v1359 = vsel %vm365, 1, 0
  %v1360 = vsel %vm366, 1, 0
  %v1361 = vsel %vm367, 1, 0
  %v1362 = vsel %vm368, 1, 0
  %v1363 = vsel %vm369, 1, 0
  %v1364 = vsel %vm370, 1, 0
  %v1365 = vsel %vm371, 1, 0
  %v1366 = vsel %vm372, 1, 0
  %v1367 = vsel %vm373, 1, 0
  %v1368 = vsel %vm374, 1, 0
  %1369 = vset.pattern.permute.xlu0 0
  %1370 = vperm.xlu0 %1369, %v1353
  %v1371 = vpop.permute.xlu0 %1370
  %1372 = vset.pattern.permute.xlu0 0
  %1373 = vperm.xlu0 %1372, %v1354
  %v1374 = vpop.permute.xlu0 %1373
  %1375 = vset.pattern.permute.xlu0 0
  %1376 = vperm.xlu0 %1375, %v1355
  %v1377 = vpop.permute.xlu0 %1376
  %1378 = vset.pattern.permute.xlu0 0
  %1379 = vperm.xlu0 %1378, %v1356
  %v1380 = vpop.permute.xlu0 %1379
  %1381 = vset.pattern.permute.xlu0 0
  %1382 = vperm.xlu0 %1381, %v1357
  %v1383 = vpop.permute.xlu0 %1382
  %1384 = vset.pattern.permute.xlu0 0
  %1385 = vperm.xlu0 %1384, %v1358
  %v1386 = vpop.permute.xlu0 %1385
  %1387 = vset.pattern.permute.xlu0 0
  %1388 = vperm.xlu0 %1387, %v1359
  %v1389 = vpop.permute.xlu0 %1388
  %1390 = vset.pattern.permute.xlu0 0
  %1391 = vperm.xlu0 %1390, %v1360
  %v1392 = vpop.permute.xlu0 %1391
  %1393 = vset.pattern.permute.xlu0 0
  %1394 = vperm.xlu0 %1393, %v1361
  %v1395 = vpop.permute.xlu0 %1394
  %1396 = vset.pattern.permute.xlu0 0
  %1397 = vperm.xlu0 %1396, %v1362
  %v1398 = vpop.permute.xlu0 %1397
  %1399 = vset.pattern.permute.xlu0 0
  %1400 = vperm.xlu0 %1399, %v1363
  %v1401 = vpop.permute.xlu0 %1400
  %1402 = vset.pattern.permute.xlu0 0
  %1403 = vperm.xlu0 %1402, %v1364
  %v1404 = vpop.permute.xlu0 %1403
  %1405 = vset.pattern.permute.xlu0 0
  %1406 = vperm.xlu0 %1405, %v1365
  %v1407 = vpop.permute.xlu0 %1406
  %1408 = vset.pattern.permute.xlu0 0
  %1409 = vperm.xlu0 %1408, %v1366
  %v1410 = vpop.permute.xlu0 %1409
  %1411 = vset.pattern.permute.xlu0 0
  %1412 = vperm.xlu0 %1411, %v1367
  %v1413 = vpop.permute.xlu0 %1412
  %1414 = vset.pattern.permute.xlu0 0
  %1415 = vperm.xlu0 %1414, %v1368
  %v1416 = vpop.permute.xlu0 %1415
  %vm1417 = vcmp.eq.s32.totalorder %v1371, 1
  %vm1418 = vcmp.eq.s32.totalorder %v1374, 1
  %vm1419 = vcmp.eq.s32.totalorder %v1377, 1
  %vm1420 = vcmp.eq.s32.totalorder %v1380, 1
  %vm1421 = vcmp.eq.s32.totalorder %v1383, 1
  %vm1422 = vcmp.eq.s32.totalorder %v1386, 1
  %vm1423 = vcmp.eq.s32.totalorder %v1389, 1
  %vm1424 = vcmp.eq.s32.totalorder %v1392, 1
  %vm1425 = vcmp.eq.s32.totalorder %v1395, 1
  %vm1426 = vcmp.eq.s32.totalorder %v1398, 1
  %vm1427 = vcmp.eq.s32.totalorder %v1401, 1
  %vm1428 = vcmp.eq.s32.totalorder %v1404, 1
  %vm1429 = vcmp.eq.s32.totalorder %v1407, 1
  %vm1430 = vcmp.eq.s32.totalorder %v1410, 1
  %vm1431 = vcmp.eq.s32.totalorder %v1413, 1
  %vm1432 = vcmp.eq.s32.totalorder %v1416, 1
  %v1433 = vsel %vm1417, %v342, 0.0
  %v1434 = vsel %vm1418, %v341, 0.0
  %v1435 = vsel %vm1419, %v340, 0.0
  %v1436 = vsel %vm1420, %v339, 0.0
  %v1437 = vsel %vm1421, %v338, 0.0
  %v1438 = vsel %vm1422, %v337, 0.0
  %v1439 = vsel %vm1423, %v336, 0.0
  %v1440 = vsel %vm1424, %v335, 0.0
  %v1441 = vsel %vm1425, %v334, 0.0
  %v1442 = vsel %vm1426, %v333, 0.0
  %v1443 = vsel %vm1427, %v332, 0.0
  %v1444 = vsel %vm1428, %v331, 0.0
  %v1445 = vsel %vm1429, %v330, 0.0
  %v1446 = vsel %vm1430, %v329, 0.0
  %v1447 = vsel %vm1431, %v328, 0.0
  %v1448 = vsel %vm1432, %v327, 0.0
  %s1449 = scalar_lea.vmem %s5, 12
  %v1450 = vld [vmem:[%s1449] sm:$0xf]
  %v1452 = vsel %vm62, %v1433, 0
  %v1455 = vsel %vm62, %v1434, 0
  %v1458 = vsel %vm62, %v1435, 0
  %v1461 = vsel %vm62, %v1436, 0
  %v1464 = vsel %vm62, %v1437, 0
  %v1467 = vsel %vm62, %v1438, 0
  %v1470 = vsel %vm62, %v1439, 0
  %v1473 = vsel %vm62, %v1440, 0
  %v1476 = vsel %vm62, %v1441, 0
  %v1479 = vsel %vm62, %v1442, 0
  %v1482 = vsel %vm62, %v1443, 0
  %v1485 = vsel %vm62, %v1444, 0
  %v1488 = vsel %vm62, %v1445, 0
  %v1491 = vsel %vm62, %v1446, 0
  %v1494 = vsel %vm62, %v1447, 0
  %v1497 = vsel %vm62, %v1448, 0
  %v1500 = vsel %vm111, %v1450, 0
  %1502 = vmatprep.subr.mxu0 0.0
  %1503 = vmatpush1.msra.mxu0 %v1500
  %1504 = vmatprep.subr.mxu0 0.0
  %1505 = vmatpush1.msra.mxu0 0.0
  %1506 = vmatprep.subr.mxu0 0.0
  %1507 = vmatpush1.msra.mxu0 0.0
  %1508 = vmatprep.subr.mxu0 0.0
  %1509 = vmatpush1.msra.mxu0 0.0
  %1510 = vmatprep.subr.mxu0 0.0
  %1511 = vmatpush1.msra.mxu0 0.0
  %1512 = vmatprep.subr.mxu0 0.0
  %1513 = vmatpush1.msra.mxu0 0.0
  %1514 = vmatprep.subr.mxu0 0.0
  %1515 = vmatpush1.msra.mxu0 0.0
  %1516 = vmatprep.subr.mxu0 0.0
  %1517 = vmatpush1.msra.mxu0 0.0
  %1518 = vmatprep.subr.mxu0 0.0
  %1519 = vmatpush1.msra.mxu0 0.0
  %1520 = vmatprep.subr.mxu0 0.0
  %1521 = vmatpush1.msra.mxu0 0.0
  %1522 = vmatprep.subr.mxu0 0.0
  %1523 = vmatpush1.msra.mxu0 0.0
  %1524 = vmatprep.subr.mxu0 0.0
  %1525 = vmatpush1.msra.mxu0 0.0
  %1526 = vmatprep.subr.mxu0 0.0
  %1527 = vmatpush1.msra.mxu0 0.0
  %1528 = vmatprep.subr.mxu0 0.0
  %1529 = vmatpush1.msra.mxu0 0.0
  %1530 = vmatprep.subr.mxu0 0.0
  %1531 = vmatpush1.msra.mxu0 0.0
  %1532 = vmatprep.subr.mxu0 0.0
  %1533 = vmatpush1.msra.mxu0 0.0
  %1534 = vmatprep.subr.mxu0 0.0
  %1535 = vmatpush1.msra.mxu0 0.0
  %1536 = vmatprep.subr.mxu0 0.0
  %1537 = vmatpush1.msra.mxu0 0.0
  %1538 = vmatprep.subr.mxu0 0.0
  %1539 = vmatpush1.msra.mxu0 0.0
  %1540 = vmatprep.subr.mxu0 0.0
  %1541 = vmatpush1.msra.mxu0 0.0
  %1542 = vmatprep.subr.mxu0 0.0
  %1543 = vmatpush1.msra.mxu0 0.0
  %1544 = vmatprep.subr.mxu0 0.0
  %1545 = vmatpush1.msra.mxu0 0.0
  %1546 = vmatprep.subr.mxu0 0.0
  %1547 = vmatpush1.msra.mxu0 0.0
  %1548 = vmatprep.subr.mxu0 0.0
  %1549 = vmatpush1.msra.mxu0 0.0
  %1550 = vmatprep.subr.mxu0 0.0
  %1551 = vmatpush1.msra.mxu0 0.0
  %1552 = vmatprep.subr.mxu0 0.0
  %1553 = vmatpush1.msra.mxu0 0.0
  %1554 = vmatprep.subr.mxu0 0.0
  %1555 = vmatpush1.msra.mxu0 0.0
  %1556 = vmatprep.subr.mxu0 0.0
  %1557 = vmatpush1.msra.mxu0 0.0
  %1558 = vmatprep.subr.mxu0 0.0
  %1559 = vmatpush1.msra.mxu0 0.0
  %1560 = vmatprep.subr.mxu0 0.0
  %1561 = vmatpush1.msra.mxu0 0.0
  %1562 = vmatprep.subr.mxu0 0.0
  %1563 = vmatpush1.msra.mxu0 0.0
  %1564 = vmatprep.subr.mxu0 0.0
  %1565 = vmatpush1.msra.mxu0 0.0
  %1566 = vmatprep.mubr.f32.mxu0 0.0
  %1567 = vmatmul.mubr.f32.gmra.mrb[0].mxu0 %v1452
  %v1568 = vpop.f32.mrb[0].mxu0
  %v1569 = vadd.f32 0.0, %v1568
  %v1570 = vpop.f32.mrb[0].mxu0
  %1571 = vmatprep.mubr.f32.mxu0 0.0
  %1572 = vmatmul.mubr.f32.gmra.mrb[0].mxu0 %v1455
  %v1573 = vpop.f32.mrb[0].mxu0
  %v1574 = vadd.f32 0.0, %v1573
  %v1575 = vpop.f32.mrb[0].mxu0
  %1576 = vmatprep.mubr.f32.mxu0 0.0
  %1577 = vmatmul.mubr.f32.gmra.mrb[0].mxu0 %v1458
  %v1578 = vpop.f32.mrb[0].mxu0
  %v1579 = vadd.f32 0.0, %v1578
  %v1580 = vpop.f32.mrb[0].mxu0
  %1581 = vmatprep.mubr.f32.mxu0 0.0
  %1582 = vmatmul.mubr.f32.gmra.mrb[0].mxu0 %v1461
  %v1583 = vpop.f32.mrb[0].mxu0
  %v1584 = vadd.f32 0.0, %v1583
  %v1585 = vpop.f32.mrb[0].mxu0
  %1586 = vmatprep.mubr.f32.mxu0 0.0
  %1587 = vmatmul.mubr.f32.gmra.mrb[0].mxu0 %v1464
  %v1588 = vpop.f32.mrb[0].mxu0
  %v1589 = vadd.f32 0.0, %v1588
  %v1590 = vpop.f32.mrb[0].mxu0
  %1591 = vmatprep.mubr.f32.mxu0 0.0
  %1592 = vmatmul.mubr.f32.gmra.mrb[0].mxu0 %v1467
  %v1593 = vpop.f32.mrb[0].mxu0
  %v1594 = vadd.f32 0.0, %v1593
  %v1595 = vpop.f32.mrb[0].mxu0
  %1596 = vmatprep.mubr.f32.mxu0 0.0
  %1597 = vmatmul.mubr.f32.gmra.mrb[0].mxu0 %v1470
  %v1598 = vpop.f32.mrb[0].mxu0
  %v1599 = vadd.f32 0.0, %v1598
  %v1600 = vpop.f32.mrb[0].mxu0
  %1601 = vmatprep.mubr.f32.mxu0 0.0
  %1602 = vmatmul.mubr.f32.gmra.mrb[0].mxu0 %v1473
  %v1603 = vpop.f32.mrb[0].mxu0
  %v1604 = vadd.f32 0.0, %v1603
  %v1605 = vpop.f32.mrb[0].mxu0
  %1606 = vmatprep.mubr.f32.mxu0 0.0
  %1607 = vmatmul.mubr.f32.gmra.mrb[0].mxu0 %v1476
  %v1608 = vpop.f32.mrb[0].mxu0
  %v1609 = vadd.f32 0.0, %v1608
  %v1610 = vpop.f32.mrb[0].mxu0
  %1611 = vmatprep.mubr.f32.mxu0 0.0
  %1612 = vmatmul.mubr.f32.gmra.mrb[0].mxu0 %v1479
  %v1613 = vpop.f32.mrb[0].mxu0
  %v1614 = vadd.f32 0.0, %v1613
  %v1615 = vpop.f32.mrb[0].mxu0
  %1616 = vmatprep.mubr.f32.mxu0 0.0
  %1617 = vmatmul.mubr.f32.gmra.mrb[0].mxu0 %v1482
  %v1618 = vpop.f32.mrb[0].mxu0
  %v1619 = vadd.f32 0.0, %v1618
  %v1620 = vpop.f32.mrb[0].mxu0
  %1621 = vmatprep.mubr.f32.mxu0 0.0
  %1622 = vmatmul.mubr.f32.gmra.mrb[0].mxu0 %v1485
  %v1623 = vpop.f32.mrb[0].mxu0
  %v1624 = vadd.f32 0.0, %v1623
  %v1625 = vpop.f32.mrb[0].mxu0
  %1626 = vmatprep.mubr.f32.mxu0 0.0
  %1627 = vmatmul.mubr.f32.gmra.mrb[0].mxu0 %v1488
  %v1628 = vpop.f32.mrb[0].mxu0
  %v1629 = vadd.f32 0.0, %v1628
  %v1630 = vpop.f32.mrb[0].mxu0
  %1631 = vmatprep.mubr.f32.mxu0 0.0
  %1632 = vmatmul.mubr.f32.gmra.mrb[0].mxu0 %v1491
  %v1633 = vpop.f32.mrb[0].mxu0
  %v1634 = vadd.f32 0.0, %v1633
  %v1635 = vpop.f32.mrb[0].mxu0
  %1636 = vmatprep.mubr.f32.mxu0 0.0
  %1637 = vmatmul.mubr.f32.gmra.mrb[0].mxu0 %v1494
  %v1638 = vpop.f32.mrb[0].mxu0
  %v1639 = vadd.f32 0.0, %v1638
  %v1640 = vpop.f32.mrb[0].mxu0
  %1641 = vmatprep.mubr.f32.mxu0 0.0
  %1642 = vmatmul.mubr.f32.gmra.mrb[0].mxu0 %v1497
  %v1643 = vpop.f32.mrb[0].mxu0
  %v1644 = vadd.f32 0.0, %v1643
  %v1645 = vpop.f32.mrb[0].mxu0
  %1646 = vdwg.mxu0
  %v1647 = vadd.f32 %v1337, %v1569
  %v1648 = vadd.f32 %v1338, %v1574
  %v1649 = vadd.f32 %v1339, %v1579
  %v1650 = vadd.f32 %v1340, %v1584
  %v1651 = vadd.f32 %v1341, %v1589
  %v1652 = vadd.f32 %v1342, %v1594
  %v1653 = vadd.f32 %v1343, %v1599
  %v1654 = vadd.f32 %v1344, %v1604
  %v1655 = vadd.f32 %v1345, %v1609
  %v1656 = vadd.f32 %v1346, %v1614
  %v1657 = vadd.f32 %v1347, %v1619
  %v1658 = vadd.f32 %v1348, %v1624
  %v1659 = vadd.f32 %v1349, %v1629
  %v1660 = vadd.f32 %v1350, %v1634
  %v1661 = vadd.f32 %v1351, %v1639
  %v1662 = vadd.f32 %v1352, %v1644
  %s1663 = scalar_lea.vmem %s5, 16
  %v1664 = vld [vmem:[%s1663] sm:$0xf]
  %v1666 = vsel %vm62, %v260, 0
  %v1669 = vsel %vm62, %v261, 0
  %v1672 = vsel %vm62, %v262, 0
  %v1675 = vsel %vm62, %v263, 0
  %v1678 = vsel %vm62, %v264, 0
  %v1681 = vsel %vm62, %v265, 0
  %v1684 = vsel %vm62, %v266, 0
  %v1687 = vsel %vm62, %v267, 0
  %v1690 = vsel %vm62, %v268, 0
  %v1693 = vsel %vm62, %v269, 0
  %v1696 = vsel %vm62, %v270, 0
  %v1699 = vsel %vm62, %v271, 0
  %v1702 = vsel %vm62, %v272, 0
  %v1705 = vsel %vm62, %v273, 0
  %v1708 = vsel %vm62, %v274, 0
  %v1711 = vsel %vm62, %v275, 0
  %v1714 = vsel %vm111, %v1664, 0
  %1716 = vmatprep.subr.mxu0 0.0
  %1717 = vmatpush1.msra.mxu0 %v1714
  %1718 = vmatprep.subr.mxu0 0.0
  %1719 = vmatpush1.msra.mxu0 0.0
  %1720 = vmatprep.subr.mxu0 0.0
  %1721 = vmatpush1.msra.mxu0 0.0
  %1722 = vmatprep.subr.mxu0 0.0
  %1723 = vmatpush1.msra.mxu0 0.0
  %1724 = vmatprep.subr.mxu0 0.0
  %1725 = vmatpush1.msra.mxu0 0.0
  %1726 = vmatprep.subr.mxu0 0.0
  %1727 = vmatpush1.msra.mxu0 0.0
  %1728 = vmatprep.subr.mxu0 0.0
  %1729 = vmatpush1.msra.mxu0 0.0
  %1730 = vmatprep.subr.mxu0 0.0
  %1731 = vmatpush1.msra.mxu0 0.0
  %1732 = vmatprep.subr.mxu0 0.0
  %1733 = vmatpush1.msra.mxu0 0.0
  %1734 = vmatprep.subr.mxu0 0.0
  %1735 = vmatpush1.msra.mxu0 0.0
  %1736 = vmatprep.subr.mxu0 0.0
  %1737 = vmatpush1.msra.mxu0 0.0
  %1738 = vmatprep.subr.mxu0 0.0
  %1739 = vmatpush1.msra.mxu0 0.0
  %1740 = vmatprep.subr.mxu0 0.0
  %1741 = vmatpush1.msra.mxu0 0.0
  %1742 = vmatprep.subr.mxu0 0.0
  %1743 = vmatpush1.msra.mxu0 0.0
  %1744 = vmatprep.subr.mxu0 0.0
  %1745 = vmatpush1.msra.mxu0 0.0
  %1746 = vmatprep.subr.mxu0 0.0
  %1747 = vmatpush1.msra.mxu0 0.0
  %1748 = vmatprep.subr.mxu0 0.0
  %1749 = vmatpush1.msra.mxu0 0.0
  %1750 = vmatprep.subr.mxu0 0.0
  %1751 = vmatpush1.msra.mxu0 0.0
  %1752 = vmatprep.subr.mxu0 0.0
  %1753 = vmatpush1.msra.mxu0 0.0
  %1754 = vmatprep.subr.mxu0 0.0
  %1755 = vmatpush1.msra.mxu0 0.0
  %1756 = vmatprep.subr.mxu0 0.0
  %1757 = vmatpush1.msra.mxu0 0.0
  %1758 = vmatprep.subr.mxu0 0.0
  %1759 = vmatpush1.msra.mxu0 0.0
  %1760 = vmatprep.subr.mxu0 0.0
  %1761 = vmatpush1.msra.mxu0 0.0
  %1762 = vmatprep.subr.mxu0 0.0
  %1763 = vmatpush1.msra.mxu0 0.0
  %1764 = vmatprep.subr.mxu0 0.0
  %1765 = vmatpush1.msra.mxu0 0.0
  %1766 = vmatprep.subr.mxu0 0.0
  %1767 = vmatpush1.msra.mxu0 0.0
  %1768 = vmatprep.subr.mxu0 0.0
  %1769 = vmatpush1.msra.mxu0 0.0
  %1770 = vmatprep.subr.mxu0 0.0
  %1771 = vmatpush1.msra.mxu0 0.0
  %1772 = vmatprep.subr.mxu0 0.0
  %1773 = vmatpush1.msra.mxu0 0.0
  %1774 = vmatprep.subr.mxu0 0.0
  %1775 = vmatpush1.msra.mxu0 0.0
  %1776 = vmatprep.subr.mxu0 0.0
  %1777 = vmatpush1.msra.mxu0 0.0
  %1778 = vmatprep.subr.mxu0 0.0
  %1779 = vmatpush1.msra.mxu0 0.0
  %1780 = vmatprep.mubr.f32.mxu0 0.0
  %1781 = vmatmul.mubr.f32.gmra.mrb[0].mxu0 %v1666
  %v1782 = vpop.f32.mrb[0].mxu0
  %v1783 = vadd.f32 0.0, %v1782
  %v1784 = vpop.f32.mrb[0].mxu0
  %1785 = vmatprep.mubr.f32.mxu0 0.0
  %1786 = vmatmul.mubr.f32.gmra.mrb[0].mxu0 %v1669
  %v1787 = vpop.f32.mrb[0].mxu0
  %v1788 = vadd.f32 0.0, %v1787
  %v1789 = vpop.f32.mrb[0].mxu0
  %1790 = vmatprep.mubr.f32.mxu0 0.0
  %1791 = vmatmul.mubr.f32.gmra.mrb[0].mxu0 %v1672
  %v1792 = vpop.f32.mrb[0].mxu0
  %v1793 = vadd.f32 0.0, %v1792
  %v1794 = vpop.f32.mrb[0].mxu0
  %1795 = vmatprep.mubr.f32.mxu0 0.0
  %1796 = vmatmul.mubr.f32.gmra.mrb[0].mxu0 %v1675
  %v1797 = vpop.f32.mrb[0].mxu0
  %v1798 = vadd.f32 0.0, %v1797
  %v1799 = vpop.f32.mrb[0].mxu0
  %1800 = vmatprep.mubr.f32.mxu0 0.0
  %1801 = vmatmul.mubr.f32.gmra.mrb[0].mxu0 %v1678
  %v1802 = vpop.f32.mrb[0].mxu0
  %v1803 = vadd.f32 0.0, %v1802
  %v1804 = vpop.f32.mrb[0].mxu0
  %1805 = vmatprep.mubr.f32.mxu0 0.0
  %1806 = vmatmul.mubr.f32.gmra.mrb[0].mxu0 %v1681
  %v1807 = vpop.f32.mrb[0].mxu0
  %v1808 = vadd.f32 0.0, %v1807
  %v1809 = vpop.f32.mrb[0].mxu0
  %1810 = vmatprep.mubr.f32.mxu0 0.0
  %1811 = vmatmul.mubr.f32.gmra.mrb[0].mxu0 %v1684
  %v1812 = vpop.f32.mrb[0].mxu0
  %v1813 = vadd.f32 0.0, %v1812
  %v1814 = vpop.f32.mrb[0].mxu0
  %1815 = vmatprep.mubr.f32.mxu0 0.0
  %1816 = vmatmul.mubr.f32.gmra.mrb[0].mxu0 %v1687
  %v1817 = vpop.f32.mrb[0].mxu0
  %v1818 = vadd.f32 0.0, %v1817
  %v1819 = vpop.f32.mrb[0].mxu0
  %1820 = vmatprep.mubr.f32.mxu0 0.0
  %1821 = vmatmul.mubr.f32.gmra.mrb[0].mxu0 %v1690
  %v1822 = vpop.f32.mrb[0].mxu0
  %v1823 = vadd.f32 0.0, %v1822
  %v1824 = vpop.f32.mrb[0].mxu0
  %1825 = vmatprep.mubr.f32.mxu0 0.0
  %1826 = vmatmul.mubr.f32.gmra.mrb[0].mxu0 %v1693
  %v1827 = vpop.f32.mrb[0].mxu0
  %v1828 = vadd.f32 0.0, %v1827
  %v1829 = vpop.f32.mrb[0].mxu0
  %1830 = vmatprep.mubr.f32.mxu0 0.0
  %1831 = vmatmul.mubr.f32.gmra.mrb[0].mxu0 %v1696
  %v1832 = vpop.f32.mrb[0].mxu0
  %v1833 = vadd.f32 0.0, %v1832
  %v1834 = vpop.f32.mrb[0].mxu0
  %1835 = vmatprep.mubr.f32.mxu0 0.0
  %1836 = vmatmul.mubr.f32.gmra.mrb[0].mxu0 %v1699
  %v1837 = vpop.f32.mrb[0].mxu0
  %v1838 = vadd.f32 0.0, %v1837
  %v1839 = vpop.f32.mrb[0].mxu0
  %1840 = vmatprep.mubr.f32.mxu0 0.0
  %1841 = vmatmul.mubr.f32.gmra.mrb[0].mxu0 %v1702
  %v1842 = vpop.f32.mrb[0].mxu0
  %v1843 = vadd.f32 0.0, %v1842
  %v1844 = vpop.f32.mrb[0].mxu0
  %1845 = vmatprep.mubr.f32.mxu0 0.0
  %1846 = vmatmul.mubr.f32.gmra.mrb[0].mxu0 %v1705
  %v1847 = vpop.f32.mrb[0].mxu0
  %v1848 = vadd.f32 0.0, %v1847
  %v1849 = vpop.f32.mrb[0].mxu0
  %1850 = vmatprep.mubr.f32.mxu0 0.0
  %1851 = vmatmul.mubr.f32.gmra.mrb[0].mxu0 %v1708
  %v1852 = vpop.f32.mrb[0].mxu0
  %v1853 = vadd.f32 0.0, %v1852
  %v1854 = vpop.f32.mrb[0].mxu0
  %1855 = vmatprep.mubr.f32.mxu0 0.0
  %1856 = vmatmul.mubr.f32.gmra.mrb[0].mxu0 %v1711
  %v1857 = vpop.f32.mrb[0].mxu0
  %v1858 = vadd.f32 0.0, %v1857
  %v1859 = vpop.f32.mrb[0].mxu0
  %1860 = vdwg.mxu0
  %v1861 = vadd.f32 %v1647, %v1783
  %v1862 = vadd.f32 %v1648, %v1788
  %v1863 = vadd.f32 %v1649, %v1793
  %v1864 = vadd.f32 %v1650, %v1798
  %v1865 = vadd.f32 %v1651, %v1803
  %v1866 = vadd.f32 %v1652, %v1808
  %v1867 = vadd.f32 %v1653, %v1813
  %v1868 = vadd.f32 %v1654, %v1818
  %v1869 = vadd.f32 %v1655, %v1823
  %v1870 = vadd.f32 %v1656, %v1828
  %v1871 = vadd.f32 %v1657, %v1833
  %v1872 = vadd.f32 %v1658, %v1838
  %v1873 = vadd.f32 %v1659, %v1843
  %v1874 = vadd.f32 %v1660, %v1848
  %v1875 = vadd.f32 %v1661, %v1853
  %v1876 = vadd.f32 %v1662, %v1858
  %v1877 = vsel %vm1011, 1, 0
  %v1878 = vsel %vm1012, 1, 0
  %v1879 = vsel %vm1013, 1, 0
  %v1880 = vsel %vm1014, 1, 0
  %v1881 = vsel %vm1015, 1, 0
  %v1882 = vsel %vm1016, 1, 0
  %v1883 = vsel %vm1017, 1, 0
  %v1884 = vsel %vm1018, 1, 0
  %v1885 = vsel %vm1019, 1, 0
  %v1886 = vsel %vm1020, 1, 0
  %v1887 = vsel %vm1021, 1, 0
  %v1888 = vsel %vm1022, 1, 0
  %v1889 = vsel %vm1023, 1, 0
  %v1890 = vsel %vm1024, 1, 0
  %v1891 = vsel %vm1025, 1, 0
  %v1892 = vsel %vm1026, 1, 0
  %1893 = vset.pattern.permute.xlu0 0
  %1894 = vperm.xlu0 %1893, %v1877
  %v1895 = vpop.permute.xlu0 %1894
  %1896 = vset.pattern.permute.xlu0 0
  %1897 = vperm.xlu0 %1896, %v1878
  %v1898 = vpop.permute.xlu0 %1897
  %1899 = vset.pattern.permute.xlu0 0
  %1900 = vperm.xlu0 %1899, %v1879
  %v1901 = vpop.permute.xlu0 %1900
  %1902 = vset.pattern.permute.xlu0 0
  %1903 = vperm.xlu0 %1902, %v1880
  %v1904 = vpop.permute.xlu0 %1903
  %1905 = vset.pattern.permute.xlu0 0
  %1906 = vperm.xlu0 %1905, %v1881
  %v1907 = vpop.permute.xlu0 %1906
  %1908 = vset.pattern.permute.xlu0 0
  %1909 = vperm.xlu0 %1908, %v1882
  %v1910 = vpop.permute.xlu0 %1909
  %1911 = vset.pattern.permute.xlu0 0
  %1912 = vperm.xlu0 %1911, %v1883
  %v1913 = vpop.permute.xlu0 %1912
  %1914 = vset.pattern.permute.xlu0 0
  %1915 = vperm.xlu0 %1914, %v1884
  %v1916 = vpop.permute.xlu0 %1915
  %1917 = vset.pattern.permute.xlu0 0
  %1918 = vperm.xlu0 %1917, %v1885
  %v1919 = vpop.permute.xlu0 %1918
  %1920 = vset.pattern.permute.xlu0 0
  %1921 = vperm.xlu0 %1920, %v1886
  %v1922 = vpop.permute.xlu0 %1921
  %1923 = vset.pattern.permute.xlu0 0
  %1924 = vperm.xlu0 %1923, %v1887
  %v1925 = vpop.permute.xlu0 %1924
  %1926 = vset.pattern.permute.xlu0 0
  %1927 = vperm.xlu0 %1926, %v1888
  %v1928 = vpop.permute.xlu0 %1927
  %1929 = vset.pattern.permute.xlu0 0
  %1930 = vperm.xlu0 %1929, %v1889
  %v1931 = vpop.permute.xlu0 %1930
  %1932 = vset.pattern.permute.xlu0 0
  %1933 = vperm.xlu0 %1932, %v1890
  %v1934 = vpop.permute.xlu0 %1933
  %1935 = vset.pattern.permute.xlu0 0
  %1936 = vperm.xlu0 %1935, %v1891
  %v1937 = vpop.permute.xlu0 %1936
  %1938 = vset.pattern.permute.xlu0 0
  %1939 = vperm.xlu0 %1938, %v1892
  %v1940 = vpop.permute.xlu0 %1939
  %vm1941 = vcmp.eq.s32.totalorder %v1895, 1
  %vm1942 = vcmp.eq.s32.totalorder %v1898, 1
  %vm1943 = vcmp.eq.s32.totalorder %v1901, 1
  %vm1944 = vcmp.eq.s32.totalorder %v1904, 1
  %vm1945 = vcmp.eq.s32.totalorder %v1907, 1
  %vm1946 = vcmp.eq.s32.totalorder %v1910, 1
  %vm1947 = vcmp.eq.s32.totalorder %v1913, 1
  %vm1948 = vcmp.eq.s32.totalorder %v1916, 1
  %vm1949 = vcmp.eq.s32.totalorder %v1919, 1
  %vm1950 = vcmp.eq.s32.totalorder %v1922, 1
  %vm1951 = vcmp.eq.s32.totalorder %v1925, 1
  %vm1952 = vcmp.eq.s32.totalorder %v1928, 1
  %vm1953 = vcmp.eq.s32.totalorder %v1931, 1
  %vm1954 = vcmp.eq.s32.totalorder %v1934, 1
  %vm1955 = vcmp.eq.s32.totalorder %v1937, 1
  %vm1956 = vcmp.eq.s32.totalorder %v1940, 1
  %v1957 = vsel %vm1941, %v1009, 0.0
  %v1958 = vsel %vm1942, %v1008, 0.0
  %v1959 = vsel %vm1943, %v1007, 0.0
  %v1960 = vsel %vm1944, %v1006, 0.0
  %v1961 = vsel %vm1945, %v1005, 0.0
  %v1962 = vsel %vm1946, %v1004, 0.0
  %v1963 = vsel %vm1947, %v1003, 0.0
  %v1964 = vsel %vm1948, %v1002, 0.0
  %v1965 = vsel %vm1949, %v1001, 0.0
  %v1966 = vsel %vm1950, %v1000, 0.0
  %v1967 = vsel %vm1951, %v999, 0.0
  %v1968 = vsel %vm1952, %v998, 0.0
  %v1969 = vsel %vm1953, %v997, 0.0
  %v1970 = vsel %vm1954, %v996, 0.0
  %v1971 = vsel %vm1955, %v995, 0.0
  %v1972 = vsel %vm1956, %v1010, 0.0
  %s1973 = scalar_lea.vmem %s5, 20
  %v1974 = vld [vmem:[%s1973] sm:$0xf]
  %v1976 = vsel %vm62, %v1957, 0
  %v1979 = vsel %vm62, %v1958, 0
  %v1982 = vsel %vm62, %v1959, 0
  %v1985 = vsel %vm62, %v1960, 0
  %v1988 = vsel %vm62, %v1961, 0
  %v1991 = vsel %vm62, %v1962, 0
  %v1994 = vsel %vm62, %v1963, 0
  %v1997 = vsel %vm62, %v1964, 0
  %v2000 = vsel %vm62, %v1965, 0
  %v2003 = vsel %vm62, %v1966, 0
  %v2006 = vsel %vm62, %v1967, 0
  %v2009 = vsel %vm62, %v1968, 0
  %v2012 = vsel %vm62, %v1969, 0
  %v2015 = vsel %vm62, %v1970, 0
  %v2018 = vsel %vm62, %v1971, 0
  %v2021 = vsel %vm62, %v1972, 0
  %v2024 = vsel %vm111, %v1974, 0
  %2026 = vmatprep.subr.mxu0 0.0
  %2027 = vmatpush1.msra.mxu0 %v2024
  %2028 = vmatprep.subr.mxu0 0.0
  %2029 = vmatpush1.msra.mxu0 0.0
  %2030 = vmatprep.subr.mxu0 0.0
  %2031 = vmatpush1.msra.mxu0 0.0
  %2032 = vmatprep.subr.mxu0 0.0
  %2033 = vmatpush1.msra.mxu0 0.0
  %2034 = vmatprep.subr.mxu0 0.0
  %2035 = vmatpush1.msra.mxu0 0.0
  %2036 = vmatprep.subr.mxu0 0.0
  %2037 = vmatpush1.msra.mxu0 0.0
  %2038 = vmatprep.subr.mxu0 0.0
  %2039 = vmatpush1.msra.mxu0 0.0
  %2040 = vmatprep.subr.mxu0 0.0
  %2041 = vmatpush1.msra.mxu0 0.0
  %2042 = vmatprep.subr.mxu0 0.0
  %2043 = vmatpush1.msra.mxu0 0.0
  %2044 = vmatprep.subr.mxu0 0.0
  %2045 = vmatpush1.msra.mxu0 0.0
  %2046 = vmatprep.subr.mxu0 0.0
  %2047 = vmatpush1.msra.mxu0 0.0
  %2048 = vmatprep.subr.mxu0 0.0
  %2049 = vmatpush1.msra.mxu0 0.0
  %2050 = vmatprep.subr.mxu0 0.0
  %2051 = vmatpush1.msra.mxu0 0.0
  %2052 = vmatprep.subr.mxu0 0.0
  %2053 = vmatpush1.msra.mxu0 0.0
  %2054 = vmatprep.subr.mxu0 0.0
  %2055 = vmatpush1.msra.mxu0 0.0
  %2056 = vmatprep.subr.mxu0 0.0
  %2057 = vmatpush1.msra.mxu0 0.0
  %2058 = vmatprep.subr.mxu0 0.0
  %2059 = vmatpush1.msra.mxu0 0.0
  %2060 = vmatprep.subr.mxu0 0.0
  %2061 = vmatpush1.msra.mxu0 0.0
  %2062 = vmatprep.subr.mxu0 0.0
  %2063 = vmatpush1.msra.mxu0 0.0
  %2064 = vmatprep.subr.mxu0 0.0
  %2065 = vmatpush1.msra.mxu0 0.0
  %2066 = vmatprep.subr.mxu0 0.0
  %2067 = vmatpush1.msra.mxu0 0.0
  %2068 = vmatprep.subr.mxu0 0.0
  %2069 = vmatpush1.msra.mxu0 0.0
  %2070 = vmatprep.subr.mxu0 0.0
  %2071 = vmatpush1.msra.mxu0 0.0
  %2072 = vmatprep.subr.mxu0 0.0
  %2073 = vmatpush1.msra.mxu0 0.0
  %2074 = vmatprep.subr.mxu0 0.0
  %2075 = vmatpush1.msra.mxu0 0.0
  %2076 = vmatprep.subr.mxu0 0.0
  %2077 = vmatpush1.msra.mxu0 0.0
  %2078 = vmatprep.subr.mxu0 0.0
  %2079 = vmatpush1.msra.mxu0 0.0
  %2080 = vmatprep.subr.mxu0 0.0
  %2081 = vmatpush1.msra.mxu0 0.0
  %2082 = vmatprep.subr.mxu0 0.0
  %2083 = vmatpush1.msra.mxu0 0.0
  %2084 = vmatprep.subr.mxu0 0.0
  %2085 = vmatpush1.msra.mxu0 0.0
  %2086 = vmatprep.subr.mxu0 0.0
  %2087 = vmatpush1.msra.mxu0 0.0
  %2088 = vmatprep.subr.mxu0 0.0
  %2089 = vmatpush1.msra.mxu0 0.0
  %2090 = vmatprep.mubr.f32.mxu0 0.0
  %2091 = vmatmul.mubr.f32.gmra.mrb[0].mxu0 %v1976
  %v2092 = vpop.f32.mrb[0].mxu0
  %v2093 = vadd.f32 0.0, %v2092
  %v2094 = vpop.f32.mrb[0].mxu0
  %2095 = vmatprep.mubr.f32.mxu0 0.0
  %2096 = vmatmul.mubr.f32.gmra.mrb[0].mxu0 %v1979
  %v2097 = vpop.f32.mrb[0].mxu0
  %v2098 = vadd.f32 0.0, %v2097
  %v2099 = vpop.f32.mrb[0].mxu0
  %2100 = vmatprep.mubr.f32.mxu0 0.0
  %2101 = vmatmul.mubr.f32.gmra.mrb[0].mxu0 %v1982
  %v2102 = vpop.f32.mrb[0].mxu0
  %v2103 = vadd.f32 0.0, %v2102
  %v2104 = vpop.f32.mrb[0].mxu0
  %2105 = vmatprep.mubr.f32.mxu0 0.0
  %2106 = vmatmul.mubr.f32.gmra.mrb[0].mxu0 %v1985
  %v2107 = vpop.f32.mrb[0].mxu0
  %v2108 = vadd.f32 0.0, %v2107
  %v2109 = vpop.f32.mrb[0].mxu0
  %2110 = vmatprep.mubr.f32.mxu0 0.0
  %2111 = vmatmul.mubr.f32.gmra.mrb[0].mxu0 %v1988
  %v2112 = vpop.f32.mrb[0].mxu0
  %v2113 = vadd.f32 0.0, %v2112
  %v2114 = vpop.f32.mrb[0].mxu0
  %2115 = vmatprep.mubr.f32.mxu0 0.0
  %2116 = vmatmul.mubr.f32.gmra.mrb[0].mxu0 %v1991
  %v2117 = vpop.f32.mrb[0].mxu0
  %v2118 = vadd.f32 0.0, %v2117
  %v2119 = vpop.f32.mrb[0].mxu0
  %2120 = vmatprep.mubr.f32.mxu0 0.0
  %2121 = vmatmul.mubr.f32.gmra.mrb[0].mxu0 %v1994
  %v2122 = vpop.f32.mrb[0].mxu0
  %v2123 = vadd.f32 0.0, %v2122
  %v2124 = vpop.f32.mrb[0].mxu0
  %2125 = vmatprep.mubr.f32.mxu0 0.0
  %2126 = vmatmul.mubr.f32.gmra.mrb[0].mxu0 %v1997
  %v2127 = vpop.f32.mrb[0].mxu0
  %v2128 = vadd.f32 0.0, %v2127
  %v2129 = vpop.f32.mrb[0].mxu0
  %2130 = vmatprep.mubr.f32.mxu0 0.0
  %2131 = vmatmul.mubr.f32.gmra.mrb[0].mxu0 %v2000
  %v2132 = vpop.f32.mrb[0].mxu0
  %v2133 = vadd.f32 0.0, %v2132
  %v2134 = vpop.f32.mrb[0].mxu0
  %2135 = vmatprep.mubr.f32.mxu0 0.0
  %2136 = vmatmul.mubr.f32.gmra.mrb[0].mxu0 %v2003
  %v2137 = vpop.f32.mrb[0].mxu0
  %v2138 = vadd.f32 0.0, %v2137
  %v2139 = vpop.f32.mrb[0].mxu0
  %2140 = vmatprep.mubr.f32.mxu0 0.0
  %2141 = vmatmul.mubr.f32.gmra.mrb[0].mxu0 %v2006
  %v2142 = vpop.f32.mrb[0].mxu0
  %v2143 = vadd.f32 0.0, %v2142
  %v2144 = vpop.f32.mrb[0].mxu0
  %2145 = vmatprep.mubr.f32.mxu0 0.0
  %2146 = vmatmul.mubr.f32.gmra.mrb[0].mxu0 %v2009
  %v2147 = vpop.f32.mrb[0].mxu0
  %v2148 = vadd.f32 0.0, %v2147
  %v2149 = vpop.f32.mrb[0].mxu0
  %2150 = vmatprep.mubr.f32.mxu0 0.0
  %2151 = vmatmul.mubr.f32.gmra.mrb[0].mxu0 %v2012
  %v2152 = vpop.f32.mrb[0].mxu0
  %v2153 = vadd.f32 0.0, %v2152
  %v2154 = vpop.f32.mrb[0].mxu0
  %2155 = vmatprep.mubr.f32.mxu0 0.0
  %2156 = vmatmul.mubr.f32.gmra.mrb[0].mxu0 %v2015
  %v2157 = vpop.f32.mrb[0].mxu0
  %v2158 = vadd.f32 0.0, %v2157
  %v2159 = vpop.f32.mrb[0].mxu0
  %2160 = vmatprep.mubr.f32.mxu0 0.0
  %2161 = vmatmul.mubr.f32.gmra.mrb[0].mxu0 %v2018
  %v2162 = vpop.f32.mrb[0].mxu0
  %v2163 = vadd.f32 0.0, %v2162
  %v2164 = vpop.f32.mrb[0].mxu0
  %2165 = vmatprep.mubr.f32.mxu0 0.0
  %2166 = vmatmul.mubr.f32.gmra.mrb[0].mxu0 %v2021
  %v2167 = vpop.f32.mrb[0].mxu0
  %v2168 = vadd.f32 0.0, %v2167
  %v2169 = vpop.f32.mrb[0].mxu0
  %2170 = vdwg.mxu0
  %v2171 = vadd.f32 %v1861, %v2093
  %v2172 = vadd.f32 %v1862, %v2098
  %v2173 = vadd.f32 %v1863, %v2103
  %v2174 = vadd.f32 %v1864, %v2108
  %v2175 = vadd.f32 %v1865, %v2113
  %v2176 = vadd.f32 %v1866, %v2118
  %v2177 = vadd.f32 %v1867, %v2123
  %v2178 = vadd.f32 %v1868, %v2128
  %v2179 = vadd.f32 %v1869, %v2133
  %v2180 = vadd.f32 %v1870, %v2138
  %v2181 = vadd.f32 %v1871, %v2143
  %v2182 = vadd.f32 %v1872, %v2148
  %v2183 = vadd.f32 %v1873, %v2153
  %v2184 = vadd.f32 %v1874, %v2158
  %v2185 = vadd.f32 %v1875, %v2163
  %v2186 = vadd.f32 %v1876, %v2168
  %vm2187 = vcmp.lt.s32.totalorder %v276, 7
  %vm2188 = vcmp.lt.s32.totalorder %v277, 7
  %vm2189 = vcmp.lt.s32.totalorder %v278, 7
  %vm2190 = vcmp.lt.s32.totalorder %v279, 7
  %vm2191 = vcmp.lt.s32.totalorder %v280, 7
  %vm2192 = vcmp.lt.s32.totalorder %v281, 7
  %vm2193 = vcmp.lt.s32.totalorder %v282, 7
  %vm2194 = vcmp.lt.s32.totalorder %v283, 7
  %vm2195 = vcmp.lt.s32.totalorder %v284, 7
  %vm2196 = vcmp.lt.s32.totalorder %v285, 7
  %vm2197 = vcmp.lt.s32.totalorder %v286, 7
  %vm2198 = vcmp.lt.s32.totalorder %v287, 7
  %vm2199 = vcmp.lt.s32.totalorder %v288, 7
  %vm2200 = vcmp.lt.s32.totalorder %v289, 7
  %vm2201 = vcmp.lt.s32.totalorder %v290, 7
  %vm2202 = vcmp.lt.s32.totalorder %v291, 7
  %vm2203 = vmand %vm2187, %vm359
  %vm2204 = vmand %vm2188, %vm360
  %vm2205 = vmand %vm2189, %vm361
  %vm2206 = vmand %vm2190, %vm362
  %vm2207 = vmand %vm2191, %vm363
  %vm2208 = vmand %vm2192, %vm364
  %vm2209 = vmand %vm2193, %vm365
  %vm2210 = vmand %vm2194, %vm366
  %vm2211 = vmand %vm2195, %vm367
  %vm2212 = vmand %vm2196, %vm368
  %vm2213 = vmand %vm2197, %vm369
  %vm2214 = vmand %vm2198, %vm370
  %vm2215 = vmand %vm2199, %vm371
  %vm2216 = vmand %vm2200, %vm372
  %vm2217 = vmand %vm2201, %vm373
  %vm2218 = vmand %vm2202, %vm374
  %v2219 = vsel %vm2203, 1, 0
  %v2220 = vsel %vm2204, 1, 0
  %v2221 = vsel %vm2205, 1, 0
  %v2222 = vsel %vm2206, 1, 0
  %v2223 = vsel %vm2207, 1, 0
  %v2224 = vsel %vm2208, 1, 0
  %v2225 = vsel %vm2209, 1, 0
  %v2226 = vsel %vm2210, 1, 0
  %v2227 = vsel %vm2211, 1, 0
  %v2228 = vsel %vm2212, 1, 0
  %v2229 = vsel %vm2213, 1, 0
  %v2230 = vsel %vm2214, 1, 0
  %v2231 = vsel %vm2215, 1, 0
  %v2232 = vsel %vm2216, 1, 0
  %v2233 = vsel %vm2217, 1, 0
  %v2234 = vsel %vm2218, 1, 0
  %2235 = vset.pattern.permute.xlu0 0
  %2236 = vperm.xlu0 %2235, %v2219
  %v2237 = vpop.permute.xlu0 %2236
  %2238 = vset.pattern.permute.xlu0 0
  %2239 = vperm.xlu0 %2238, %v2220
  %v2240 = vpop.permute.xlu0 %2239
  %2241 = vset.pattern.permute.xlu0 0
  %2242 = vperm.xlu0 %2241, %v2221
  %v2243 = vpop.permute.xlu0 %2242
  %2244 = vset.pattern.permute.xlu0 0
  %2245 = vperm.xlu0 %2244, %v2222
  %v2246 = vpop.permute.xlu0 %2245
  %2247 = vset.pattern.permute.xlu0 0
  %2248 = vperm.xlu0 %2247, %v2223
  %v2249 = vpop.permute.xlu0 %2248
  %2250 = vset.pattern.permute.xlu0 0
  %2251 = vperm.xlu0 %2250, %v2224
  %v2252 = vpop.permute.xlu0 %2251
  %2253 = vset.pattern.permute.xlu0 0
  %2254 = vperm.xlu0 %2253, %v2225
  %v2255 = vpop.permute.xlu0 %2254
  %2256 = vset.pattern.permute.xlu0 0
  %2257 = vperm.xlu0 %2256, %v2226
  %v2258 = vpop.permute.xlu0 %2257
  %2259 = vset.pattern.permute.xlu0 0
  %2260 = vperm.xlu0 %2259, %v2227
  %v2261 = vpop.permute.xlu0 %2260
  %2262 = vset.pattern.permute.xlu0 0
  %2263 = vperm.xlu0 %2262, %v2228
  %v2264 = vpop.permute.xlu0 %2263
  %2265 = vset.pattern.permute.xlu0 0
  %2266 = vperm.xlu0 %2265, %v2229
  %v2267 = vpop.permute.xlu0 %2266
  %2268 = vset.pattern.permute.xlu0 0
  %2269 = vperm.xlu0 %2268, %v2230
  %v2270 = vpop.permute.xlu0 %2269
  %2271 = vset.pattern.permute.xlu0 0
  %2272 = vperm.xlu0 %2271, %v2231
  %v2273 = vpop.permute.xlu0 %2272
  %2274 = vset.pattern.permute.xlu0 0
  %2275 = vperm.xlu0 %2274, %v2232
  %v2276 = vpop.permute.xlu0 %2275
  %2277 = vset.pattern.permute.xlu0 0
  %2278 = vperm.xlu0 %2277, %v2233
  %v2279 = vpop.permute.xlu0 %2278
  %2280 = vset.pattern.permute.xlu0 0
  %2281 = vperm.xlu0 %2280, %v2234
  %v2282 = vpop.permute.xlu0 %2281
  %vm2283 = vcmp.eq.s32.totalorder %v2237, 1
  %vm2284 = vcmp.eq.s32.totalorder %v2240, 1
  %vm2285 = vcmp.eq.s32.totalorder %v2243, 1
  %vm2286 = vcmp.eq.s32.totalorder %v2246, 1
  %vm2287 = vcmp.eq.s32.totalorder %v2249, 1
  %vm2288 = vcmp.eq.s32.totalorder %v2252, 1
  %vm2289 = vcmp.eq.s32.totalorder %v2255, 1
  %vm2290 = vcmp.eq.s32.totalorder %v2258, 1
  %vm2291 = vcmp.eq.s32.totalorder %v2261, 1
  %vm2292 = vcmp.eq.s32.totalorder %v2264, 1
  %vm2293 = vcmp.eq.s32.totalorder %v2267, 1
  %vm2294 = vcmp.eq.s32.totalorder %v2270, 1
  %vm2295 = vcmp.eq.s32.totalorder %v2273, 1
  %vm2296 = vcmp.eq.s32.totalorder %v2276, 1
  %vm2297 = vcmp.eq.s32.totalorder %v2279, 1
  %vm2298 = vcmp.eq.s32.totalorder %v2282, 1
  %v2299 = vsel %vm2283, %v341, 0.0
  %v2300 = vsel %vm2284, %v340, 0.0
  %v2301 = vsel %vm2285, %v339, 0.0
  %v2302 = vsel %vm2286, %v338, 0.0
  %v2303 = vsel %vm2287, %v337, 0.0
  %v2304 = vsel %vm2288, %v336, 0.0
  %v2305 = vsel %vm2289, %v335, 0.0
  %v2306 = vsel %vm2290, %v334, 0.0
  %v2307 = vsel %vm2291, %v333, 0.0
  %v2308 = vsel %vm2292, %v332, 0.0
  %v2309 = vsel %vm2293, %v331, 0.0
  %v2310 = vsel %vm2294, %v330, 0.0
  %v2311 = vsel %vm2295, %v329, 0.0
  %v2312 = vsel %vm2296, %v328, 0.0
  %v2313 = vsel %vm2297, %v327, 0.0
  %v2314 = vsel %vm2298, %v342, 0.0
  %s2315 = scalar_lea.vmem %s5, 24
  %v2316 = vld [vmem:[%s2315] sm:$0xf]
  %v2318 = vsel %vm62, %v2299, 0
  %v2321 = vsel %vm62, %v2300, 0
  %v2324 = vsel %vm62, %v2301, 0
  %v2327 = vsel %vm62, %v2302, 0
  %v2330 = vsel %vm62, %v2303, 0
  %v2333 = vsel %vm62, %v2304, 0
  %v2336 = vsel %vm62, %v2305, 0
  %v2339 = vsel %vm62, %v2306, 0
  %v2342 = vsel %vm62, %v2307, 0
  %v2345 = vsel %vm62, %v2308, 0
  %v2348 = vsel %vm62, %v2309, 0
  %v2351 = vsel %vm62, %v2310, 0
  %v2354 = vsel %vm62, %v2311, 0
  %v2357 = vsel %vm62, %v2312, 0
  %v2360 = vsel %vm62, %v2313, 0
  %v2363 = vsel %vm62, %v2314, 0
  %v2366 = vsel %vm111, %v2316, 0
  %2368 = vmatprep.subr.mxu0 0.0
  %2369 = vmatpush1.msra.mxu0 %v2366
  %2370 = vmatprep.subr.mxu0 0.0
  %2371 = vmatpush1.msra.mxu0 0.0
  %2372 = vmatprep.subr.mxu0 0.0
  %2373 = vmatpush1.msra.mxu0 0.0
  %2374 = vmatprep.subr.mxu0 0.0
  %2375 = vmatpush1.msra.mxu0 0.0
  %2376 = vmatprep.subr.mxu0 0.0
  %2377 = vmatpush1.msra.mxu0 0.0
  %2378 = vmatprep.subr.mxu0 0.0
  %2379 = vmatpush1.msra.mxu0 0.0
  %2380 = vmatprep.subr.mxu0 0.0
  %2381 = vmatpush1.msra.mxu0 0.0
  %2382 = vmatprep.subr.mxu0 0.0
  %2383 = vmatpush1.msra.mxu0 0.0
  %2384 = vmatprep.subr.mxu0 0.0
  %2385 = vmatpush1.msra.mxu0 0.0
  %2386 = vmatprep.subr.mxu0 0.0
  %2387 = vmatpush1.msra.mxu0 0.0
  %2388 = vmatprep.subr.mxu0 0.0
  %2389 = vmatpush1.msra.mxu0 0.0
  %2390 = vmatprep.subr.mxu0 0.0
  %2391 = vmatpush1.msra.mxu0 0.0
  %2392 = vmatprep.subr.mxu0 0.0
  %2393 = vmatpush1.msra.mxu0 0.0
  %2394 = vmatprep.subr.mxu0 0.0
  %2395 = vmatpush1.msra.mxu0 0.0
  %2396 = vmatprep.subr.mxu0 0.0
  %2397 = vmatpush1.msra.mxu0 0.0
  %2398 = vmatprep.subr.mxu0 0.0
  %2399 = vmatpush1.msra.mxu0 0.0
  %2400 = vmatprep.subr.mxu0 0.0
  %2401 = vmatpush1.msra.mxu0 0.0
  %2402 = vmatprep.subr.mxu0 0.0
  %2403 = vmatpush1.msra.mxu0 0.0
  %2404 = vmatprep.subr.mxu0 0.0
  %2405 = vmatpush1.msra.mxu0 0.0
  %2406 = vmatprep.subr.mxu0 0.0
  %2407 = vmatpush1.msra.mxu0 0.0
  %2408 = vmatprep.subr.mxu0 0.0
  %2409 = vmatpush1.msra.mxu0 0.0
  %2410 = vmatprep.subr.mxu0 0.0
  %2411 = vmatpush1.msra.mxu0 0.0
  %2412 = vmatprep.subr.mxu0 0.0
  %2413 = vmatpush1.msra.mxu0 0.0
  %2414 = vmatprep.subr.mxu0 0.0
  %2415 = vmatpush1.msra.mxu0 0.0
  %2416 = vmatprep.subr.mxu0 0.0
  %2417 = vmatpush1.msra.mxu0 0.0
  %2418 = vmatprep.subr.mxu0 0.0
  %2419 = vmatpush1.msra.mxu0 0.0
  %2420 = vmatprep.subr.mxu0 0.0
  %2421 = vmatpush1.msra.mxu0 0.0
  %2422 = vmatprep.subr.mxu0 0.0
  %2423 = vmatpush1.msra.mxu0 0.0
  %2424 = vmatprep.subr.mxu0 0.0
  %2425 = vmatpush1.msra.mxu0 0.0
  %2426 = vmatprep.subr.mxu0 0.0
  %2427 = vmatpush1.msra.mxu0 0.0
  %2428 = vmatprep.subr.mxu0 0.0
  %2429 = vmatpush1.msra.mxu0 0.0
  %2430 = vmatprep.subr.mxu0 0.0
  %2431 = vmatpush1.msra.mxu0 0.0
  %2432 = vmatprep.mubr.f32.mxu0 0.0
  %2433 = vmatmul.mubr.f32.gmra.mrb[0].mxu0 %v2318
  %v2434 = vpop.f32.mrb[0].mxu0
  %v2435 = vadd.f32 0.0, %v2434
  %v2436 = vpop.f32.mrb[0].mxu0
  %2437 = vmatprep.mubr.f32.mxu0 0.0
  %2438 = vmatmul.mubr.f32.gmra.mrb[0].mxu0 %v2321
  %v2439 = vpop.f32.mrb[0].mxu0
  %v2440 = vadd.f32 0.0, %v2439
  %v2441 = vpop.f32.mrb[0].mxu0
  %2442 = vmatprep.mubr.f32.mxu0 0.0
  %2443 = vmatmul.mubr.f32.gmra.mrb[0].mxu0 %v2324
  %v2444 = vpop.f32.mrb[0].mxu0
  %v2445 = vadd.f32 0.0, %v2444
  %v2446 = vpop.f32.mrb[0].mxu0
  %2447 = vmatprep.mubr.f32.mxu0 0.0
  %2448 = vmatmul.mubr.f32.gmra.mrb[0].mxu0 %v2327
  %v2449 = vpop.f32.mrb[0].mxu0
  %v2450 = vadd.f32 0.0, %v2449
  %v2451 = vpop.f32.mrb[0].mxu0
  %2452 = vmatprep.mubr.f32.mxu0 0.0
  %2453 = vmatmul.mubr.f32.gmra.mrb[0].mxu0 %v2330
  %v2454 = vpop.f32.mrb[0].mxu0
  %v2455 = vadd.f32 0.0, %v2454
  %v2456 = vpop.f32.mrb[0].mxu0
  %2457 = vmatprep.mubr.f32.mxu0 0.0
  %2458 = vmatmul.mubr.f32.gmra.mrb[0].mxu0 %v2333
  %v2459 = vpop.f32.mrb[0].mxu0
  %v2460 = vadd.f32 0.0, %v2459
  %v2461 = vpop.f32.mrb[0].mxu0
  %2462 = vmatprep.mubr.f32.mxu0 0.0
  %2463 = vmatmul.mubr.f32.gmra.mrb[0].mxu0 %v2336
  %v2464 = vpop.f32.mrb[0].mxu0
  %v2465 = vadd.f32 0.0, %v2464
  %v2466 = vpop.f32.mrb[0].mxu0
  %2467 = vmatprep.mubr.f32.mxu0 0.0
  %2468 = vmatmul.mubr.f32.gmra.mrb[0].mxu0 %v2339
  %v2469 = vpop.f32.mrb[0].mxu0
  %v2470 = vadd.f32 0.0, %v2469
  %v2471 = vpop.f32.mrb[0].mxu0
  %2472 = vmatprep.mubr.f32.mxu0 0.0
  %2473 = vmatmul.mubr.f32.gmra.mrb[0].mxu0 %v2342
  %v2474 = vpop.f32.mrb[0].mxu0
  %v2475 = vadd.f32 0.0, %v2474
  %v2476 = vpop.f32.mrb[0].mxu0
  %2477 = vmatprep.mubr.f32.mxu0 0.0
  %2478 = vmatmul.mubr.f32.gmra.mrb[0].mxu0 %v2345
  %v2479 = vpop.f32.mrb[0].mxu0
  %v2480 = vadd.f32 0.0, %v2479
  %v2481 = vpop.f32.mrb[0].mxu0
  %2482 = vmatprep.mubr.f32.mxu0 0.0
  %2483 = vmatmul.mubr.f32.gmra.mrb[0].mxu0 %v2348
  %v2484 = vpop.f32.mrb[0].mxu0
  %v2485 = vadd.f32 0.0, %v2484
  %v2486 = vpop.f32.mrb[0].mxu0
  %2487 = vmatprep.mubr.f32.mxu0 0.0
  %2488 = vmatmul.mubr.f32.gmra.mrb[0].mxu0 %v2351
  %v2489 = vpop.f32.mrb[0].mxu0
  %v2490 = vadd.f32 0.0, %v2489
  %v2491 = vpop.f32.mrb[0].mxu0
  %2492 = vmatprep.mubr.f32.mxu0 0.0
  %2493 = vmatmul.mubr.f32.gmra.mrb[0].mxu0 %v2354
  %v2494 = vpop.f32.mrb[0].mxu0
  %v2495 = vadd.f32 0.0, %v2494
  %v2496 = vpop.f32.mrb[0].mxu0
  %2497 = vmatprep.mubr.f32.mxu0 0.0
  %2498 = vmatmul.mubr.f32.gmra.mrb[0].mxu0 %v2357
  %v2499 = vpop.f32.mrb[0].mxu0
  %v2500 = vadd.f32 0.0, %v2499
  %v2501 = vpop.f32.mrb[0].mxu0
  %2502 = vmatprep.mubr.f32.mxu0 0.0
  %2503 = vmatmul.mubr.f32.gmra.mrb[0].mxu0 %v2360
  %v2504 = vpop.f32.mrb[0].mxu0
  %v2505 = vadd.f32 0.0, %v2504
  %v2506 = vpop.f32.mrb[0].mxu0
  %2507 = vmatprep.mubr.f32.mxu0 0.0
  %2508 = vmatmul.mubr.f32.gmra.mrb[0].mxu0 %v2363
  %v2509 = vpop.f32.mrb[0].mxu0
  %v2510 = vadd.f32 0.0, %v2509
  %v2511 = vpop.f32.mrb[0].mxu0
  %2512 = vdwg.mxu0
  %v2513 = vadd.f32 %v2171, %v2435
  %v2514 = vadd.f32 %v2172, %v2440
  %v2515 = vadd.f32 %v2173, %v2445
  %v2516 = vadd.f32 %v2174, %v2450
  %v2517 = vadd.f32 %v2175, %v2455
  %v2518 = vadd.f32 %v2176, %v2460
  %v2519 = vadd.f32 %v2177, %v2465
  %v2520 = vadd.f32 %v2178, %v2470
  %v2521 = vadd.f32 %v2179, %v2475
  %v2522 = vadd.f32 %v2180, %v2480
  %v2523 = vadd.f32 %v2181, %v2485
  %v2524 = vadd.f32 %v2182, %v2490
  %v2525 = vadd.f32 %v2183, %v2495
  %v2526 = vadd.f32 %v2184, %v2500
  %v2527 = vadd.f32 %v2185, %v2505
  %v2528 = vadd.f32 %v2186, %v2510
  %v2529 = vsel %vm2187, 1, 0
  %v2530 = vsel %vm2188, 1, 0
  %v2531 = vsel %vm2189, 1, 0
  %v2532 = vsel %vm2190, 1, 0
  %v2533 = vsel %vm2191, 1, 0
  %v2534 = vsel %vm2192, 1, 0
  %v2535 = vsel %vm2193, 1, 0
  %v2536 = vsel %vm2194, 1, 0
  %v2537 = vsel %vm2195, 1, 0
  %v2538 = vsel %vm2196, 1, 0
  %v2539 = vsel %vm2197, 1, 0
  %v2540 = vsel %vm2198, 1, 0
  %v2541 = vsel %vm2199, 1, 0
  %v2542 = vsel %vm2200, 1, 0
  %v2543 = vsel %vm2201, 1, 0
  %v2544 = vsel %vm2202, 1, 0
  %2545 = vset.pattern.permute.xlu0 0
  %2546 = vperm.xlu0 %2545, %v2529
  %v2547 = vpop.permute.xlu0 %2546
  %2548 = vset.pattern.permute.xlu0 0
  %2549 = vperm.xlu0 %2548, %v2530
  %v2550 = vpop.permute.xlu0 %2549
  %2551 = vset.pattern.permute.xlu0 0
  %2552 = vperm.xlu0 %2551, %v2531
  %v2553 = vpop.permute.xlu0 %2552
  %2554 = vset.pattern.permute.xlu0 0
  %2555 = vperm.xlu0 %2554, %v2532
  %v2556 = vpop.permute.xlu0 %2555
  %2557 = vset.pattern.permute.xlu0 0
  %2558 = vperm.xlu0 %2557, %v2533
  %v2559 = vpop.permute.xlu0 %2558
  %2560 = vset.pattern.permute.xlu0 0
  %2561 = vperm.xlu0 %2560, %v2534
  %v2562 = vpop.permute.xlu0 %2561
  %2563 = vset.pattern.permute.xlu0 0
  %2564 = vperm.xlu0 %2563, %v2535
  %v2565 = vpop.permute.xlu0 %2564
  %2566 = vset.pattern.permute.xlu0 0
  %2567 = vperm.xlu0 %2566, %v2536
  %v2568 = vpop.permute.xlu0 %2567
  %2569 = vset.pattern.permute.xlu0 0
  %2570 = vperm.xlu0 %2569, %v2537
  %v2571 = vpop.permute.xlu0 %2570
  %2572 = vset.pattern.permute.xlu0 0
  %2573 = vperm.xlu0 %2572, %v2538
  %v2574 = vpop.permute.xlu0 %2573
  %2575 = vset.pattern.permute.xlu0 0
  %2576 = vperm.xlu0 %2575, %v2539
  %v2577 = vpop.permute.xlu0 %2576
  %2578 = vset.pattern.permute.xlu0 0
  %2579 = vperm.xlu0 %2578, %v2540
  %v2580 = vpop.permute.xlu0 %2579
  %2581 = vset.pattern.permute.xlu0 0
  %2582 = vperm.xlu0 %2581, %v2541
  %v2583 = vpop.permute.xlu0 %2582
  %2584 = vset.pattern.permute.xlu0 0
  %2585 = vperm.xlu0 %2584, %v2542
  %v2586 = vpop.permute.xlu0 %2585
  %2587 = vset.pattern.permute.xlu0 0
  %2588 = vperm.xlu0 %2587, %v2543
  %v2589 = vpop.permute.xlu0 %2588
  %2590 = vset.pattern.permute.xlu0 0
  %2591 = vperm.xlu0 %2590, %v2544
  %v2592 = vpop.permute.xlu0 %2591
  %vm2593 = vcmp.eq.s32.totalorder %v2547, 1
  %vm2594 = vcmp.eq.s32.totalorder %v2550, 1
  %vm2595 = vcmp.eq.s32.totalorder %v2553, 1
  %vm2596 = vcmp.eq.s32.totalorder %v2556, 1
  %vm2597 = vcmp.eq.s32.totalorder %v2559, 1
  %vm2598 = vcmp.eq.s32.totalorder %v2562, 1
  %vm2599 = vcmp.eq.s32.totalorder %v2565, 1
  %vm2600 = vcmp.eq.s32.totalorder %v2568, 1
  %vm2601 = vcmp.eq.s32.totalorder %v2571, 1
  %vm2602 = vcmp.eq.s32.totalorder %v2574, 1
  %vm2603 = vcmp.eq.s32.totalorder %v2577, 1
  %vm2604 = vcmp.eq.s32.totalorder %v2580, 1
  %vm2605 = vcmp.eq.s32.totalorder %v2583, 1
  %vm2606 = vcmp.eq.s32.totalorder %v2586, 1
  %vm2607 = vcmp.eq.s32.totalorder %v2589, 1
  %vm2608 = vcmp.eq.s32.totalorder %v2592, 1
  %v2609 = vsel %vm2593, %v261, 0.0
  %v2610 = vsel %vm2594, %v262, 0.0
  %v2611 = vsel %vm2595, %v263, 0.0
  %v2612 = vsel %vm2596, %v264, 0.0
  %v2613 = vsel %vm2597, %v265, 0.0
  %v2614 = vsel %vm2598, %v266, 0.0
  %v2615 = vsel %vm2599, %v267, 0.0
  %v2616 = vsel %vm2600, %v268, 0.0
  %v2617 = vsel %vm2601, %v269, 0.0
  %v2618 = vsel %vm2602, %v270, 0.0
  %v2619 = vsel %vm2603, %v271, 0.0
  %v2620 = vsel %vm2604, %v272, 0.0
  %v2621 = vsel %vm2605, %v273, 0.0
  %v2622 = vsel %vm2606, %v274, 0.0
  %v2623 = vsel %vm2607, %v275, 0.0
  %v2624 = vsel %vm2608, %v260, 0.0
  %s2625 = scalar_lea.vmem %s5, 28
  %v2626 = vld [vmem:[%s2625] sm:$0xf]
  %v2628 = vsel %vm62, %v2609, 0
  %v2631 = vsel %vm62, %v2610, 0
  %v2634 = vsel %vm62, %v2611, 0
  %v2637 = vsel %vm62, %v2612, 0
  %v2640 = vsel %vm62, %v2613, 0
  %v2643 = vsel %vm62, %v2614, 0
  %v2646 = vsel %vm62, %v2615, 0
  %v2649 = vsel %vm62, %v2616, 0
  %v2652 = vsel %vm62, %v2617, 0
  %v2655 = vsel %vm62, %v2618, 0
  %v2658 = vsel %vm62, %v2619, 0
  %v2661 = vsel %vm62, %v2620, 0
  %v2664 = vsel %vm62, %v2621, 0
  %v2667 = vsel %vm62, %v2622, 0
  %v2670 = vsel %vm62, %v2623, 0
  %v2673 = vsel %vm62, %v2624, 0
  %v2676 = vsel %vm111, %v2626, 0
  %2678 = vmatprep.subr.mxu0 0.0
  %2679 = vmatpush1.msra.mxu0 %v2676
  %2680 = vmatprep.subr.mxu0 0.0
  %2681 = vmatpush1.msra.mxu0 0.0
  %2682 = vmatprep.subr.mxu0 0.0
  %2683 = vmatpush1.msra.mxu0 0.0
  %2684 = vmatprep.subr.mxu0 0.0
  %2685 = vmatpush1.msra.mxu0 0.0
  %2686 = vmatprep.subr.mxu0 0.0
  %2687 = vmatpush1.msra.mxu0 0.0
  %2688 = vmatprep.subr.mxu0 0.0
  %2689 = vmatpush1.msra.mxu0 0.0
  %2690 = vmatprep.subr.mxu0 0.0
  %2691 = vmatpush1.msra.mxu0 0.0
  %2692 = vmatprep.subr.mxu0 0.0
  %2693 = vmatpush1.msra.mxu0 0.0
  %2694 = vmatprep.subr.mxu0 0.0
  %2695 = vmatpush1.msra.mxu0 0.0
  %2696 = vmatprep.subr.mxu0 0.0
  %2697 = vmatpush1.msra.mxu0 0.0
  %2698 = vmatprep.subr.mxu0 0.0
  %2699 = vmatpush1.msra.mxu0 0.0
  %2700 = vmatprep.subr.mxu0 0.0
  %2701 = vmatpush1.msra.mxu0 0.0
  %2702 = vmatprep.subr.mxu0 0.0
  %2703 = vmatpush1.msra.mxu0 0.0
  %2704 = vmatprep.subr.mxu0 0.0
  %2705 = vmatpush1.msra.mxu0 0.0
  %2706 = vmatprep.subr.mxu0 0.0
  %2707 = vmatpush1.msra.mxu0 0.0
  %2708 = vmatprep.subr.mxu0 0.0
  %2709 = vmatpush1.msra.mxu0 0.0
  %2710 = vmatprep.subr.mxu0 0.0
  %2711 = vmatpush1.msra.mxu0 0.0
  %2712 = vmatprep.subr.mxu0 0.0
  %2713 = vmatpush1.msra.mxu0 0.0
  %2714 = vmatprep.subr.mxu0 0.0
  %2715 = vmatpush1.msra.mxu0 0.0
  %2716 = vmatprep.subr.mxu0 0.0
  %2717 = vmatpush1.msra.mxu0 0.0
  %2718 = vmatprep.subr.mxu0 0.0
  %2719 = vmatpush1.msra.mxu0 0.0
  %2720 = vmatprep.subr.mxu0 0.0
  %2721 = vmatpush1.msra.mxu0 0.0
  %2722 = vmatprep.subr.mxu0 0.0
  %2723 = vmatpush1.msra.mxu0 0.0
  %2724 = vmatprep.subr.mxu0 0.0
  %2725 = vmatpush1.msra.mxu0 0.0
  %2726 = vmatprep.subr.mxu0 0.0
  %2727 = vmatpush1.msra.mxu0 0.0
  %2728 = vmatprep.subr.mxu0 0.0
  %2729 = vmatpush1.msra.mxu0 0.0
  %2730 = vmatprep.subr.mxu0 0.0
  %2731 = vmatpush1.msra.mxu0 0.0
  %2732 = vmatprep.subr.mxu0 0.0
  %2733 = vmatpush1.msra.mxu0 0.0
  %2734 = vmatprep.subr.mxu0 0.0
  %2735 = vmatpush1.msra.mxu0 0.0
  %2736 = vmatprep.subr.mxu0 0.0
  %2737 = vmatpush1.msra.mxu0 0.0
  %2738 = vmatprep.subr.mxu0 0.0
  %2739 = vmatpush1.msra.mxu0 0.0
  %2740 = vmatprep.subr.mxu0 0.0
  %2741 = vmatpush1.msra.mxu0 0.0
  %2742 = vmatprep.mubr.f32.mxu0 0.0
  %2743 = vmatmul.mubr.f32.gmra.mrb[0].mxu0 %v2628
  %v2744 = vpop.f32.mrb[0].mxu0
  %v2745 = vadd.f32 0.0, %v2744
  %v2746 = vpop.f32.mrb[0].mxu0
  %2747 = vmatprep.mubr.f32.mxu0 0.0
  %2748 = vmatmul.mubr.f32.gmra.mrb[0].mxu0 %v2631
  %v2749 = vpop.f32.mrb[0].mxu0
  %v2750 = vadd.f32 0.0, %v2749
  %v2751 = vpop.f32.mrb[0].mxu0
  %2752 = vmatprep.mubr.f32.mxu0 0.0
  %2753 = vmatmul.mubr.f32.gmra.mrb[0].mxu0 %v2634
  %v2754 = vpop.f32.mrb[0].mxu0
  %v2755 = vadd.f32 0.0, %v2754
  %v2756 = vpop.f32.mrb[0].mxu0
  %2757 = vmatprep.mubr.f32.mxu0 0.0
  %2758 = vmatmul.mubr.f32.gmra.mrb[0].mxu0 %v2637
  %v2759 = vpop.f32.mrb[0].mxu0
  %v2760 = vadd.f32 0.0, %v2759
  %v2761 = vpop.f32.mrb[0].mxu0
  %2762 = vmatprep.mubr.f32.mxu0 0.0
  %2763 = vmatmul.mubr.f32.gmra.mrb[0].mxu0 %v2640
  %v2764 = vpop.f32.mrb[0].mxu0
  %v2765 = vadd.f32 0.0, %v2764
  %v2766 = vpop.f32.mrb[0].mxu0
  %2767 = vmatprep.mubr.f32.mxu0 0.0
  %2768 = vmatmul.mubr.f32.gmra.mrb[0].mxu0 %v2643
  %v2769 = vpop.f32.mrb[0].mxu0
  %v2770 = vadd.f32 0.0, %v2769
  %v2771 = vpop.f32.mrb[0].mxu0
  %2772 = vmatprep.mubr.f32.mxu0 0.0
  %2773 = vmatmul.mubr.f32.gmra.mrb[0].mxu0 %v2646
  %v2774 = vpop.f32.mrb[0].mxu0
  %v2775 = vadd.f32 0.0, %v2774
  %v2776 = vpop.f32.mrb[0].mxu0
  %2777 = vmatprep.mubr.f32.mxu0 0.0
  %2778 = vmatmul.mubr.f32.gmra.mrb[0].mxu0 %v2649
  %v2779 = vpop.f32.mrb[0].mxu0
  %v2780 = vadd.f32 0.0, %v2779
  %v2781 = vpop.f32.mrb[0].mxu0
  %2782 = vmatprep.mubr.f32.mxu0 0.0
  %2783 = vmatmul.mubr.f32.gmra.mrb[0].mxu0 %v2652
  %v2784 = vpop.f32.mrb[0].mxu0
  %v2785 = vadd.f32 0.0, %v2784
  %v2786 = vpop.f32.mrb[0].mxu0
  %2787 = vmatprep.mubr.f32.mxu0 0.0
  %2788 = vmatmul.mubr.f32.gmra.mrb[0].mxu0 %v2655
  %v2789 = vpop.f32.mrb[0].mxu0
  %v2790 = vadd.f32 0.0, %v2789
  %v2791 = vpop.f32.mrb[0].mxu0
  %2792 = vmatprep.mubr.f32.mxu0 0.0
  %2793 = vmatmul.mubr.f32.gmra.mrb[0].mxu0 %v2658
  %v2794 = vpop.f32.mrb[0].mxu0
  %v2795 = vadd.f32 0.0, %v2794
  %v2796 = vpop.f32.mrb[0].mxu0
  %2797 = vmatprep.mubr.f32.mxu0 0.0
  %2798 = vmatmul.mubr.f32.gmra.mrb[0].mxu0 %v2661
  %v2799 = vpop.f32.mrb[0].mxu0
  %v2800 = vadd.f32 0.0, %v2799
  %v2801 = vpop.f32.mrb[0].mxu0
  %2802 = vmatprep.mubr.f32.mxu0 0.0
  %2803 = vmatmul.mubr.f32.gmra.mrb[0].mxu0 %v2664
  %v2804 = vpop.f32.mrb[0].mxu0
  %v2805 = vadd.f32 0.0, %v2804
  %v2806 = vpop.f32.mrb[0].mxu0
  %2807 = vmatprep.mubr.f32.mxu0 0.0
  %2808 = vmatmul.mubr.f32.gmra.mrb[0].mxu0 %v2667
  %v2809 = vpop.f32.mrb[0].mxu0
  %v2810 = vadd.f32 0.0, %v2809
  %v2811 = vpop.f32.mrb[0].mxu0
  %2812 = vmatprep.mubr.f32.mxu0 0.0
  %2813 = vmatmul.mubr.f32.gmra.mrb[0].mxu0 %v2670
  %v2814 = vpop.f32.mrb[0].mxu0
  %v2815 = vadd.f32 0.0, %v2814
  %v2816 = vpop.f32.mrb[0].mxu0
  %2817 = vmatprep.mubr.f32.mxu0 0.0
  %2818 = vmatmul.mubr.f32.gmra.mrb[0].mxu0 %v2673
  %v2819 = vpop.f32.mrb[0].mxu0
  %v2820 = vadd.f32 0.0, %v2819
  %v2821 = vpop.f32.mrb[0].mxu0
  %2822 = vdwg.mxu0
  %v2823 = vadd.f32 %v2513, %v2745
  %v2824 = vadd.f32 %v2514, %v2750
  %v2825 = vadd.f32 %v2515, %v2755
  %v2826 = vadd.f32 %v2516, %v2760
  %v2827 = vadd.f32 %v2517, %v2765
  %v2828 = vadd.f32 %v2518, %v2770
  %v2829 = vadd.f32 %v2519, %v2775
  %v2830 = vadd.f32 %v2520, %v2780
  %v2831 = vadd.f32 %v2521, %v2785
  %v2832 = vadd.f32 %v2522, %v2790
  %v2833 = vadd.f32 %v2523, %v2795
  %v2834 = vadd.f32 %v2524, %v2800
  %v2835 = vadd.f32 %v2525, %v2805
  %v2836 = vadd.f32 %v2526, %v2810
  %v2837 = vadd.f32 %v2527, %v2815
  %v2838 = vadd.f32 %v2528, %v2820
  %vm2839 = vmand %vm2187, %vm1011
  %vm2840 = vmand %vm2188, %vm1012
  %vm2841 = vmand %vm2189, %vm1013
  %vm2842 = vmand %vm2190, %vm1014
  %vm2843 = vmand %vm2191, %vm1015
  %vm2844 = vmand %vm2192, %vm1016
  %vm2845 = vmand %vm2193, %vm1017
  %vm2846 = vmand %vm2194, %vm1018
  %vm2847 = vmand %vm2195, %vm1019
  %vm2848 = vmand %vm2196, %vm1020
  %vm2849 = vmand %vm2197, %vm1021
  %vm2850 = vmand %vm2198, %vm1022
  %vm2851 = vmand %vm2199, %vm1023
  %vm2852 = vmand %vm2200, %vm1024
  %vm2853 = vmand %vm2201, %vm1025
  %vm2854 = vmand %vm2202, %vm1026
  %v2855 = vsel %vm2839, 1, 0
  %v2856 = vsel %vm2840, 1, 0
  %v2857 = vsel %vm2841, 1, 0
  %v2858 = vsel %vm2842, 1, 0
  %v2859 = vsel %vm2843, 1, 0
  %v2860 = vsel %vm2844, 1, 0
  %v2861 = vsel %vm2845, 1, 0
  %v2862 = vsel %vm2846, 1, 0
  %v2863 = vsel %vm2847, 1, 0
  %v2864 = vsel %vm2848, 1, 0
  %v2865 = vsel %vm2849, 1, 0
  %v2866 = vsel %vm2850, 1, 0
  %v2867 = vsel %vm2851, 1, 0
  %v2868 = vsel %vm2852, 1, 0
  %v2869 = vsel %vm2853, 1, 0
  %v2870 = vsel %vm2854, 1, 0
  %2871 = vset.pattern.permute.xlu0 0
  %2872 = vperm.xlu0 %2871, %v2855
  %v2873 = vpop.permute.xlu0 %2872
  %2874 = vset.pattern.permute.xlu0 0
  %2875 = vperm.xlu0 %2874, %v2856
  %v2876 = vpop.permute.xlu0 %2875
  %2877 = vset.pattern.permute.xlu0 0
  %2878 = vperm.xlu0 %2877, %v2857
  %v2879 = vpop.permute.xlu0 %2878
  %2880 = vset.pattern.permute.xlu0 0
  %2881 = vperm.xlu0 %2880, %v2858
  %v2882 = vpop.permute.xlu0 %2881
  %2883 = vset.pattern.permute.xlu0 0
  %2884 = vperm.xlu0 %2883, %v2859
  %v2885 = vpop.permute.xlu0 %2884
  %2886 = vset.pattern.permute.xlu0 0
  %2887 = vperm.xlu0 %2886, %v2860
  %v2888 = vpop.permute.xlu0 %2887
  %2889 = vset.pattern.permute.xlu0 0
  %2890 = vperm.xlu0 %2889, %v2861
  %v2891 = vpop.permute.xlu0 %2890
  %2892 = vset.pattern.permute.xlu0 0
  %2893 = vperm.xlu0 %2892, %v2862
  %v2894 = vpop.permute.xlu0 %2893
  %2895 = vset.pattern.permute.xlu0 0
  %2896 = vperm.xlu0 %2895, %v2863
  %v2897 = vpop.permute.xlu0 %2896
  %2898 = vset.pattern.permute.xlu0 0
  %2899 = vperm.xlu0 %2898, %v2864
  %v2900 = vpop.permute.xlu0 %2899
  %2901 = vset.pattern.permute.xlu0 0
  %2902 = vperm.xlu0 %2901, %v2865
  %v2903 = vpop.permute.xlu0 %2902
  %2904 = vset.pattern.permute.xlu0 0
  %2905 = vperm.xlu0 %2904, %v2866
  %v2906 = vpop.permute.xlu0 %2905
  %2907 = vset.pattern.permute.xlu0 0
  %2908 = vperm.xlu0 %2907, %v2867
  %v2909 = vpop.permute.xlu0 %2908
  %2910 = vset.pattern.permute.xlu0 0
  %2911 = vperm.xlu0 %2910, %v2868
  %v2912 = vpop.permute.xlu0 %2911
  %2913 = vset.pattern.permute.xlu0 0
  %2914 = vperm.xlu0 %2913, %v2869
  %v2915 = vpop.permute.xlu0 %2914
  %2916 = vset.pattern.permute.xlu0 0
  %2917 = vperm.xlu0 %2916, %v2870
  %v2918 = vpop.permute.xlu0 %2917
  %vm2919 = vcmp.eq.s32.totalorder %v2873, 1
  %vm2920 = vcmp.eq.s32.totalorder %v2876, 1
  %vm2921 = vcmp.eq.s32.totalorder %v2879, 1
  %vm2922 = vcmp.eq.s32.totalorder %v2882, 1
  %vm2923 = vcmp.eq.s32.totalorder %v2885, 1
  %vm2924 = vcmp.eq.s32.totalorder %v2888, 1
  %vm2925 = vcmp.eq.s32.totalorder %v2891, 1
  %vm2926 = vcmp.eq.s32.totalorder %v2894, 1
  %vm2927 = vcmp.eq.s32.totalorder %v2897, 1
  %vm2928 = vcmp.eq.s32.totalorder %v2900, 1
  %vm2929 = vcmp.eq.s32.totalorder %v2903, 1
  %vm2930 = vcmp.eq.s32.totalorder %v2906, 1
  %vm2931 = vcmp.eq.s32.totalorder %v2909, 1
  %vm2932 = vcmp.eq.s32.totalorder %v2912, 1
  %vm2933 = vcmp.eq.s32.totalorder %v2915, 1
  %vm2934 = vcmp.eq.s32.totalorder %v2918, 1
  %v2935 = vsel %vm2919, %v1008, 0.0
  %v2936 = vsel %vm2920, %v1007, 0.0
  %v2937 = vsel %vm2921, %v1006, 0.0
  %v2938 = vsel %vm2922, %v1005, 0.0
  %v2939 = vsel %vm2923, %v1004, 0.0
  %v2940 = vsel %vm2924, %v1003, 0.0
  %v2941 = vsel %vm2925, %v1002, 0.0
  %v2942 = vsel %vm2926, %v1001, 0.0
  %v2943 = vsel %vm2927, %v1000, 0.0
  %v2944 = vsel %vm2928, %v999, 0.0
  %v2945 = vsel %vm2929, %v998, 0.0
  %v2946 = vsel %vm2930, %v997, 0.0
  %v2947 = vsel %vm2931, %v996, 0.0
  %v2948 = vsel %vm2932, %v995, 0.0
  %v2949 = vsel %vm2933, %v1010, 0.0
  %v2950 = vsel %vm2934, %v1009, 0.0
  %s2951 = scalar_lea.vmem %s5, 32
  %v2952 = vld [vmem:[%s2951] sm:$0xf]
  %v2954 = vsel %vm62, %v2935, 0
  %v2957 = vsel %vm62, %v2936, 0
  %v2960 = vsel %vm62, %v2937, 0
  %v2963 = vsel %vm62, %v2938, 0
  %v2966 = vsel %vm62, %v2939, 0
  %v2969 = vsel %vm62, %v2940, 0
  %v2972 = vsel %vm62, %v2941, 0
  %v2975 = vsel %vm62, %v2942, 0
  %v2978 = vsel %vm62, %v2943, 0
  %v2981 = vsel %vm62, %v2944, 0
  %v2984 = vsel %vm62, %v2945, 0
  %v2987 = vsel %vm62, %v2946, 0
  %v2990 = vsel %vm62, %v2947, 0
  %v2993 = vsel %vm62, %v2948, 0
  %v2996 = vsel %vm62, %v2949, 0
  %v2999 = vsel %vm62, %v2950, 0
  %v3002 = vsel %vm111, %v2952, 0
  %3004 = vmatprep.subr.mxu0 0.0
  %3005 = vmatpush1.msra.mxu0 %v3002
  %3006 = vmatprep.subr.mxu0 0.0
  %3007 = vmatpush1.msra.mxu0 0.0
  %3008 = vmatprep.subr.mxu0 0.0
  %3009 = vmatpush1.msra.mxu0 0.0
  %3010 = vmatprep.subr.mxu0 0.0
  %3011 = vmatpush1.msra.mxu0 0.0
  %3012 = vmatprep.subr.mxu0 0.0
  %3013 = vmatpush1.msra.mxu0 0.0
  %3014 = vmatprep.subr.mxu0 0.0
  %3015 = vmatpush1.msra.mxu0 0.0
  %3016 = vmatprep.subr.mxu0 0.0
  %3017 = vmatpush1.msra.mxu0 0.0
  %3018 = vmatprep.subr.mxu0 0.0
  %3019 = vmatpush1.msra.mxu0 0.0
  %3020 = vmatprep.subr.mxu0 0.0
  %3021 = vmatpush1.msra.mxu0 0.0
  %3022 = vmatprep.subr.mxu0 0.0
  %3023 = vmatpush1.msra.mxu0 0.0
  %3024 = vmatprep.subr.mxu0 0.0
  %3025 = vmatpush1.msra.mxu0 0.0
  %3026 = vmatprep.subr.mxu0 0.0
  %3027 = vmatpush1.msra.mxu0 0.0
  %3028 = vmatprep.subr.mxu0 0.0
  %3029 = vmatpush1.msra.mxu0 0.0
  %3030 = vmatprep.subr.mxu0 0.0
  %3031 = vmatpush1.msra.mxu0 0.0
  %3032 = vmatprep.subr.mxu0 0.0
  %3033 = vmatpush1.msra.mxu0 0.0
  %3034 = vmatprep.subr.mxu0 0.0
  %3035 = vmatpush1.msra.mxu0 0.0
  %3036 = vmatprep.subr.mxu0 0.0
  %3037 = vmatpush1.msra.mxu0 0.0
  %3038 = vmatprep.subr.mxu0 0.0
  %3039 = vmatpush1.msra.mxu0 0.0
  %3040 = vmatprep.subr.mxu0 0.0
  %3041 = vmatpush1.msra.mxu0 0.0
  %3042 = vmatprep.subr.mxu0 0.0
  %3043 = vmatpush1.msra.mxu0 0.0
  %3044 = vmatprep.subr.mxu0 0.0
  %3045 = vmatpush1.msra.mxu0 0.0
  %3046 = vmatprep.subr.mxu0 0.0
  %3047 = vmatpush1.msra.mxu0 0.0
  %3048 = vmatprep.subr.mxu0 0.0
  %3049 = vmatpush1.msra.mxu0 0.0
  %3050 = vmatprep.subr.mxu0 0.0
  %3051 = vmatpush1.msra.mxu0 0.0
  %3052 = vmatprep.subr.mxu0 0.0
  %3053 = vmatpush1.msra.mxu0 0.0
  %3054 = vmatprep.subr.mxu0 0.0
  %3055 = vmatpush1.msra.mxu0 0.0
  %3056 = vmatprep.subr.mxu0 0.0
  %3057 = vmatpush1.msra.mxu0 0.0
  %3058 = vmatprep.subr.mxu0 0.0
  %3059 = vmatpush1.msra.mxu0 0.0
  %3060 = vmatprep.subr.mxu0 0.0
  %3061 = vmatpush1.msra.mxu0 0.0
  %3062 = vmatprep.subr.mxu0 0.0
  %3063 = vmatpush1.msra.mxu0 0.0
  %3064 = vmatprep.subr.mxu0 0.0
  %3065 = vmatpush1.msra.mxu0 0.0
  %3066 = vmatprep.subr.mxu0 0.0
  %3067 = vmatpush1.msra.mxu0 0.0
  %3068 = vmatprep.mubr.f32.mxu0 0.0
  %3069 = vmatmul.mubr.f32.gmra.mrb[0].mxu0 %v2954
  %v3070 = vpop.f32.mrb[0].mxu0
  %v3071 = vadd.f32 0.0, %v3070
  %v3072 = vpop.f32.mrb[0].mxu0
  %3073 = vmatprep.mubr.f32.mxu0 0.0
  %3074 = vmatmul.mubr.f32.gmra.mrb[0].mxu0 %v2957
  %v3075 = vpop.f32.mrb[0].mxu0
  %v3076 = vadd.f32 0.0, %v3075
  %v3077 = vpop.f32.mrb[0].mxu0
  %3078 = vmatprep.mubr.f32.mxu0 0.0
  %3079 = vmatmul.mubr.f32.gmra.mrb[0].mxu0 %v2960
  %v3080 = vpop.f32.mrb[0].mxu0
  %v3081 = vadd.f32 0.0, %v3080
  %v3082 = vpop.f32.mrb[0].mxu0
  %3083 = vmatprep.mubr.f32.mxu0 0.0
  %3084 = vmatmul.mubr.f32.gmra.mrb[0].mxu0 %v2963
  %v3085 = vpop.f32.mrb[0].mxu0
  %v3086 = vadd.f32 0.0, %v3085
  %v3087 = vpop.f32.mrb[0].mxu0
  %3088 = vmatprep.mubr.f32.mxu0 0.0
  %3089 = vmatmul.mubr.f32.gmra.mrb[0].mxu0 %v2966
  %v3090 = vpop.f32.mrb[0].mxu0
  %v3091 = vadd.f32 0.0, %v3090
  %v3092 = vpop.f32.mrb[0].mxu0
  %3093 = vmatprep.mubr.f32.mxu0 0.0
  %3094 = vmatmul.mubr.f32.gmra.mrb[0].mxu0 %v2969
  %v3095 = vpop.f32.mrb[0].mxu0
  %v3096 = vadd.f32 0.0, %v3095
  %v3097 = vpop.f32.mrb[0].mxu0
  %3098 = vmatprep.mubr.f32.mxu0 0.0
  %3099 = vmatmul.mubr.f32.gmra.mrb[0].mxu0 %v2972
  %v3100 = vpop.f32.mrb[0].mxu0
  %v3101 = vadd.f32 0.0, %v3100
  %v3102 = vpop.f32.mrb[0].mxu0
  %3103 = vmatprep.mubr.f32.mxu0 0.0
  %3104 = vmatmul.mubr.f32.gmra.mrb[0].mxu0 %v2975
  %v3105 = vpop.f32.mrb[0].mxu0
  %v3106 = vadd.f32 0.0, %v3105
  %v3107 = vpop.f32.mrb[0].mxu0
  %3108 = vmatprep.mubr.f32.mxu0 0.0
  %3109 = vmatmul.mubr.f32.gmra.mrb[0].mxu0 %v2978
  %v3110 = vpop.f32.mrb[0].mxu0
  %v3111 = vadd.f32 0.0, %v3110
  %v3112 = vpop.f32.mrb[0].mxu0
  %3113 = vmatprep.mubr.f32.mxu0 0.0
  %3114 = vmatmul.mubr.f32.gmra.mrb[0].mxu0 %v2981
  %v3115 = vpop.f32.mrb[0].mxu0
  %v3116 = vadd.f32 0.0, %v3115
  %v3117 = vpop.f32.mrb[0].mxu0
  %3118 = vmatprep.mubr.f32.mxu0 0.0
  %3119 = vmatmul.mubr.f32.gmra.mrb[0].mxu0 %v2984
  %v3120 = vpop.f32.mrb[0].mxu0
  %v3121 = vadd.f32 0.0, %v3120
  %v3122 = vpop.f32.mrb[0].mxu0
  %3123 = vmatprep.mubr.f32.mxu0 0.0
  %3124 = vmatmul.mubr.f32.gmra.mrb[0].mxu0 %v2987
  %v3125 = vpop.f32.mrb[0].mxu0
  %v3126 = vadd.f32 0.0, %v3125
  %v3127 = vpop.f32.mrb[0].mxu0
  %3128 = vmatprep.mubr.f32.mxu0 0.0
  %3129 = vmatmul.mubr.f32.gmra.mrb[0].mxu0 %v2990
  %v3130 = vpop.f32.mrb[0].mxu0
  %v3131 = vadd.f32 0.0, %v3130
  %v3132 = vpop.f32.mrb[0].mxu0
  %3133 = vmatprep.mubr.f32.mxu0 0.0
  %3134 = vmatmul.mubr.f32.gmra.mrb[0].mxu0 %v2993
  %v3135 = vpop.f32.mrb[0].mxu0
  %v3136 = vadd.f32 0.0, %v3135
  %v3137 = vpop.f32.mrb[0].mxu0
  %3138 = vmatprep.mubr.f32.mxu0 0.0
  %3139 = vmatmul.mubr.f32.gmra.mrb[0].mxu0 %v2996
  %v3140 = vpop.f32.mrb[0].mxu0
  %v3141 = vadd.f32 0.0, %v3140
  %v3142 = vpop.f32.mrb[0].mxu0
  %3143 = vmatprep.mubr.f32.mxu0 0.0
  %3144 = vmatmul.mubr.f32.gmra.mrb[0].mxu0 %v2999
  %v3145 = vpop.f32.mrb[0].mxu0
  %v3146 = vadd.f32 0.0, %v3145
  %v3147 = vpop.f32.mrb[0].mxu0
  %3148 = vdwg.mxu0
  %v3149 = vadd.f32 %v2823, %v3071
  %v3150 = vadd.f32 %v2824, %v3076
  %v3151 = vadd.f32 %v2825, %v3081
  %v3152 = vadd.f32 %v2826, %v3086
  %v3153 = vadd.f32 %v2827, %v3091
  %v3154 = vadd.f32 %v2828, %v3096
  %v3155 = vadd.f32 %v2829, %v3101
  %v3156 = vadd.f32 %v2830, %v3106
  %v3157 = vadd.f32 %v2831, %v3111
  %v3158 = vadd.f32 %v2832, %v3116
  %v3159 = vadd.f32 %v2833, %v3121
  %v3160 = vadd.f32 %v2834, %v3126
  %v3161 = vadd.f32 %v2835, %v3131
  %v3162 = vadd.f32 %v2836, %v3136
  %v3163 = vadd.f32 %v2837, %v3141
  %v3164 = vadd.f32 %v2838, %v3146
  %v3165 = vld [vmem:[%s9] sm:$0x1]
  %v3167 = vlaneseq
  %v3168 = vshrl.u32 %v3167, 7
  %v3169 = vsub.s32 0, %v3168
  %v3170 = vrot.slane %v3165, %v3169
  %v3172 = vadd.f32 %v3149, %v3170
  %v3173 = vadd.f32 %v3150, %v3170
  %v3174 = vadd.f32 %v3151, %v3170
  %v3175 = vadd.f32 %v3152, %v3170
  %v3176 = vadd.f32 %v3153, %v3170
  %v3177 = vadd.f32 %v3154, %v3170
  %v3178 = vadd.f32 %v3155, %v3170
  %v3179 = vadd.f32 %v3156, %v3170
  %v3180 = vadd.f32 %v3157, %v3170
  %v3181 = vadd.f32 %v3158, %v3170
  %v3182 = vadd.f32 %v3159, %v3170
  %v3183 = vadd.f32 %v3160, %v3170
  %v3184 = vadd.f32 %v3161, %v3170
  %v3185 = vadd.f32 %v3162, %v3170
  %v3186 = vadd.f32 %v3163, %v3170
  %v3187 = vadd.f32 %v3164, %v3170
  %v3188 = vmax.f32 %v3172, 0.0
  %v3189 = vmax.f32 %v3173, 0.0
  %v3190 = vmax.f32 %v3174, 0.0
  %v3191 = vmax.f32 %v3175, 0.0
  %v3192 = vmax.f32 %v3176, 0.0
  %v3193 = vmax.f32 %v3177, 0.0
  %v3194 = vmax.f32 %v3178, 0.0
  %v3195 = vmax.f32 %v3179, 0.0
  %v3196 = vmax.f32 %v3180, 0.0
  %v3197 = vmax.f32 %v3181, 0.0
  %v3198 = vmax.f32 %v3182, 0.0
  %v3199 = vmax.f32 %v3183, 0.0
  %v3200 = vmax.f32 %v3184, 0.0
  %v3201 = vmax.f32 %v3185, 0.0
  %v3202 = vmax.f32 %v3186, 0.0
  %v3203 = vmax.f32 %v3187, 0.0
  %v3204 = vld [vmem:[%s6] sm:$0xf]
  %v3205 = vld [vmem:[%s4] sm:$0xf]
  %v3207 = vsel %vm111, %v3205, 0
  %3209 = vmatprep.subr.mxu0 0.0
  %3210 = vmatpush1.msra.mxu0 %v3207
  %3211 = vmatprep.subr.mxu0 0.0
  %3212 = vmatpush1.msra.mxu0 0.0
  %3213 = vmatprep.subr.mxu0 0.0
  %3214 = vmatpush1.msra.mxu0 0.0
  %3215 = vmatprep.subr.mxu0 0.0
  %3216 = vmatpush1.msra.mxu0 0.0
  %3217 = vmatprep.subr.mxu0 0.0
  %3218 = vmatpush1.msra.mxu0 0.0
  %3219 = vmatprep.subr.mxu0 0.0
  %3220 = vmatpush1.msra.mxu0 0.0
  %3221 = vmatprep.subr.mxu0 0.0
  %3222 = vmatpush1.msra.mxu0 0.0
  %3223 = vmatprep.subr.mxu0 0.0
  %3224 = vmatpush1.msra.mxu0 0.0
  %3225 = vmatprep.subr.mxu0 0.0
  %3226 = vmatpush1.msra.mxu0 0.0
  %3227 = vmatprep.subr.mxu0 0.0
  %3228 = vmatpush1.msra.mxu0 0.0
  %3229 = vmatprep.subr.mxu0 0.0
  %3230 = vmatpush1.msra.mxu0 0.0
  %3231 = vmatprep.subr.mxu0 0.0
  %3232 = vmatpush1.msra.mxu0 0.0
  %3233 = vmatprep.subr.mxu0 0.0
  %3234 = vmatpush1.msra.mxu0 0.0
  %3235 = vmatprep.subr.mxu0 0.0
  %3236 = vmatpush1.msra.mxu0 0.0
  %3237 = vmatprep.subr.mxu0 0.0
  %3238 = vmatpush1.msra.mxu0 0.0
  %3239 = vmatprep.subr.mxu0 0.0
  %3240 = vmatpush1.msra.mxu0 0.0
  %3241 = vmatprep.subr.mxu0 0.0
  %3242 = vmatpush1.msra.mxu0 0.0
  %3243 = vmatprep.subr.mxu0 0.0
  %3244 = vmatpush1.msra.mxu0 0.0
  %3245 = vmatprep.subr.mxu0 0.0
  %3246 = vmatpush1.msra.mxu0 0.0
  %3247 = vmatprep.subr.mxu0 0.0
  %3248 = vmatpush1.msra.mxu0 0.0
  %3249 = vmatprep.subr.mxu0 0.0
  %3250 = vmatpush1.msra.mxu0 0.0
  %3251 = vmatprep.subr.mxu0 0.0
  %3252 = vmatpush1.msra.mxu0 0.0
  %3253 = vmatprep.subr.mxu0 0.0
  %3254 = vmatpush1.msra.mxu0 0.0
  %3255 = vmatprep.subr.mxu0 0.0
  %3256 = vmatpush1.msra.mxu0 0.0
  %3257 = vmatprep.subr.mxu0 0.0
  %3258 = vmatpush1.msra.mxu0 0.0
  %3259 = vmatprep.subr.mxu0 0.0
  %3260 = vmatpush1.msra.mxu0 0.0
  %3261 = vmatprep.subr.mxu0 0.0
  %3262 = vmatpush1.msra.mxu0 0.0
  %3263 = vmatprep.subr.mxu0 0.0
  %3264 = vmatpush1.msra.mxu0 0.0
  %3265 = vmatprep.subr.mxu0 0.0
  %3266 = vmatpush1.msra.mxu0 0.0
  %3267 = vmatprep.subr.mxu0 0.0
  %3268 = vmatpush1.msra.mxu0 0.0
  %3269 = vmatprep.subr.mxu0 0.0
  %3270 = vmatpush1.msra.mxu0 0.0
  %3271 = vmatprep.subr.mxu0 0.0
  %3272 = vmatpush1.msra.mxu0 0.0
  %3273 = vmatprep.mubr.f32.mxu0 0.0
  %3274 = vmatmul.mubr.f32.gmra.mrb[0].mxu0 %v64
  %v3275 = vpop.f32.mrb[0].mxu0
  %v3276 = vadd.f32 0.0, %v3275
  %v3277 = vpop.f32.mrb[0].mxu0
  %3278 = vmatprep.mubr.f32.mxu0 0.0
  %3279 = vmatmul.mubr.f32.gmra.mrb[0].mxu0 %v67
  %v3280 = vpop.f32.mrb[0].mxu0
  %v3281 = vadd.f32 0.0, %v3280
  %v3282 = vpop.f32.mrb[0].mxu0
  %3283 = vmatprep.mubr.f32.mxu0 0.0
  %3284 = vmatmul.mubr.f32.gmra.mrb[0].mxu0 %v70
  %v3285 = vpop.f32.mrb[0].mxu0
  %v3286 = vadd.f32 0.0, %v3285
  %v3287 = vpop.f32.mrb[0].mxu0
  %3288 = vmatprep.mubr.f32.mxu0 0.0
  %3289 = vmatmul.mubr.f32.gmra.mrb[0].mxu0 %v73
  %v3290 = vpop.f32.mrb[0].mxu0
  %v3291 = vadd.f32 0.0, %v3290
  %v3292 = vpop.f32.mrb[0].mxu0
  %3293 = vmatprep.mubr.f32.mxu0 0.0
  %3294 = vmatmul.mubr.f32.gmra.mrb[0].mxu0 %v76
  %v3295 = vpop.f32.mrb[0].mxu0
  %v3296 = vadd.f32 0.0, %v3295
  %v3297 = vpop.f32.mrb[0].mxu0
  %3298 = vmatprep.mubr.f32.mxu0 0.0
  %3299 = vmatmul.mubr.f32.gmra.mrb[0].mxu0 %v79
  %v3300 = vpop.f32.mrb[0].mxu0
  %v3301 = vadd.f32 0.0, %v3300
  %v3302 = vpop.f32.mrb[0].mxu0
  %3303 = vmatprep.mubr.f32.mxu0 0.0
  %3304 = vmatmul.mubr.f32.gmra.mrb[0].mxu0 %v82
  %v3305 = vpop.f32.mrb[0].mxu0
  %v3306 = vadd.f32 0.0, %v3305
  %v3307 = vpop.f32.mrb[0].mxu0
  %3308 = vmatprep.mubr.f32.mxu0 0.0
  %3309 = vmatmul.mubr.f32.gmra.mrb[0].mxu0 %v85
  %v3310 = vpop.f32.mrb[0].mxu0
  %v3311 = vadd.f32 0.0, %v3310
  %v3312 = vpop.f32.mrb[0].mxu0
  %3313 = vmatprep.mubr.f32.mxu0 0.0
  %3314 = vmatmul.mubr.f32.gmra.mrb[0].mxu0 %v88
  %v3315 = vpop.f32.mrb[0].mxu0
  %v3316 = vadd.f32 0.0, %v3315
  %v3317 = vpop.f32.mrb[0].mxu0
  %3318 = vmatprep.mubr.f32.mxu0 0.0
  %3319 = vmatmul.mubr.f32.gmra.mrb[0].mxu0 %v91
  %v3320 = vpop.f32.mrb[0].mxu0
  %v3321 = vadd.f32 0.0, %v3320
  %v3322 = vpop.f32.mrb[0].mxu0
  %3323 = vmatprep.mubr.f32.mxu0 0.0
  %3324 = vmatmul.mubr.f32.gmra.mrb[0].mxu0 %v94
  %v3325 = vpop.f32.mrb[0].mxu0
  %v3326 = vadd.f32 0.0, %v3325
  %v3327 = vpop.f32.mrb[0].mxu0
  %3328 = vmatprep.mubr.f32.mxu0 0.0
  %3329 = vmatmul.mubr.f32.gmra.mrb[0].mxu0 %v97
  %v3330 = vpop.f32.mrb[0].mxu0
  %v3331 = vadd.f32 0.0, %v3330
  %v3332 = vpop.f32.mrb[0].mxu0
  %3333 = vmatprep.mubr.f32.mxu0 0.0
  %3334 = vmatmul.mubr.f32.gmra.mrb[0].mxu0 %v100
  %v3335 = vpop.f32.mrb[0].mxu0
  %v3336 = vadd.f32 0.0, %v3335
  %v3337 = vpop.f32.mrb[0].mxu0
  %3338 = vmatprep.mubr.f32.mxu0 0.0
  %3339 = vmatmul.mubr.f32.gmra.mrb[0].mxu0 %v103
  %v3340 = vpop.f32.mrb[0].mxu0
  %v3341 = vadd.f32 0.0, %v3340
  %v3342 = vpop.f32.mrb[0].mxu0
  %3343 = vmatprep.mubr.f32.mxu0 0.0
  %3344 = vmatmul.mubr.f32.gmra.mrb[0].mxu0 %v106
  %v3345 = vpop.f32.mrb[0].mxu0
  %v3346 = vadd.f32 0.0, %v3345
  %v3347 = vpop.f32.mrb[0].mxu0
  %3348 = vmatprep.mubr.f32.mxu0 0.0
  %3349 = vmatmul.mubr.f32.gmra.mrb[0].mxu0 %v109
  %v3350 = vpop.f32.mrb[0].mxu0
  %v3351 = vadd.f32 0.0, %v3350
  %v3352 = vpop.f32.mrb[0].mxu0
  %3353 = vdwg.mxu0
  %v3354 = vld [vmem:[%s10] sm:$0x1]
  %v3356 = vlaneseq
  %v3357 = vshrl.u32 %v3356, 7
  %v3358 = vsub.s32 0, %v3357
  %v3359 = vrot.slane %v3354, %v3358
  %v3362 = vsel %vm62, %v3188, 0
  %v3365 = vsel %vm62, %v3189, 0
  %v3368 = vsel %vm62, %v3190, 0
  %v3371 = vsel %vm62, %v3191, 0
  %v3374 = vsel %vm62, %v3192, 0
  %v3377 = vsel %vm62, %v3193, 0
  %v3380 = vsel %vm62, %v3194, 0
  %v3383 = vsel %vm62, %v3195, 0
  %v3386 = vsel %vm62, %v3196, 0
  %v3389 = vsel %vm62, %v3197, 0
  %v3392 = vsel %vm62, %v3198, 0
  %v3395 = vsel %vm62, %v3199, 0
  %v3398 = vsel %vm62, %v3200, 0
  %v3401 = vsel %vm62, %v3201, 0
  %v3404 = vsel %vm62, %v3202, 0
  %v3407 = vsel %vm62, %v3203, 0
  %v3410 = vsel %vm111, %v3204, 0
  %3412 = vmatprep.subr.mxu0 0.0
  %3413 = vmatpush1.msra.mxu0 %v3410
  %3414 = vmatprep.subr.mxu0 0.0
  %3415 = vmatpush1.msra.mxu0 0.0
  %3416 = vmatprep.subr.mxu0 0.0
  %3417 = vmatpush1.msra.mxu0 0.0
  %3418 = vmatprep.subr.mxu0 0.0
  %3419 = vmatpush1.msra.mxu0 0.0
  %3420 = vmatprep.subr.mxu0 0.0
  %3421 = vmatpush1.msra.mxu0 0.0
  %3422 = vmatprep.subr.mxu0 0.0
  %3423 = vmatpush1.msra.mxu0 0.0
  %3424 = vmatprep.subr.mxu0 0.0
  %3425 = vmatpush1.msra.mxu0 0.0
  %3426 = vmatprep.subr.mxu0 0.0
  %3427 = vmatpush1.msra.mxu0 0.0
  %3428 = vmatprep.subr.mxu0 0.0
  %3429 = vmatpush1.msra.mxu0 0.0
  %3430 = vmatprep.subr.mxu0 0.0
  %3431 = vmatpush1.msra.mxu0 0.0
  %3432 = vmatprep.subr.mxu0 0.0
  %3433 = vmatpush1.msra.mxu0 0.0
  %3434 = vmatprep.subr.mxu0 0.0
  %3435 = vmatpush1.msra.mxu0 0.0
  %3436 = vmatprep.subr.mxu0 0.0
  %3437 = vmatpush1.msra.mxu0 0.0
  %3438 = vmatprep.subr.mxu0 0.0
  %3439 = vmatpush1.msra.mxu0 0.0
  %3440 = vmatprep.subr.mxu0 0.0
  %3441 = vmatpush1.msra.mxu0 0.0
  %3442 = vmatprep.subr.mxu0 0.0
  %3443 = vmatpush1.msra.mxu0 0.0
  %3444 = vmatprep.subr.mxu0 0.0
  %3445 = vmatpush1.msra.mxu0 0.0
  %3446 = vmatprep.subr.mxu0 0.0
  %3447 = vmatpush1.msra.mxu0 0.0
  %3448 = vmatprep.subr.mxu0 0.0
  %3449 = vmatpush1.msra.mxu0 0.0
  %3450 = vmatprep.subr.mxu0 0.0
  %3451 = vmatpush1.msra.mxu0 0.0
  %3452 = vmatprep.subr.mxu0 0.0
  %3453 = vmatpush1.msra.mxu0 0.0
  %3454 = vmatprep.subr.mxu0 0.0
  %3455 = vmatpush1.msra.mxu0 0.0
  %3456 = vmatprep.subr.mxu0 0.0
  %3457 = vmatpush1.msra.mxu0 0.0
  %3458 = vmatprep.subr.mxu0 0.0
  %3459 = vmatpush1.msra.mxu0 0.0
  %3460 = vmatprep.subr.mxu0 0.0
  %3461 = vmatpush1.msra.mxu0 0.0
  %3462 = vmatprep.subr.mxu0 0.0
  %3463 = vmatpush1.msra.mxu0 0.0
  %3464 = vmatprep.subr.mxu0 0.0
  %3465 = vmatpush1.msra.mxu0 0.0
  %3466 = vmatprep.subr.mxu0 0.0
  %3467 = vmatpush1.msra.mxu0 0.0
  %3468 = vmatprep.subr.mxu0 0.0
  %3469 = vmatpush1.msra.mxu0 0.0
  %3470 = vmatprep.subr.mxu0 0.0
  %3471 = vmatpush1.msra.mxu0 0.0
  %3472 = vmatprep.subr.mxu0 0.0
  %3473 = vmatpush1.msra.mxu0 0.0
  %3474 = vmatprep.subr.mxu0 0.0
  %3475 = vmatpush1.msra.mxu0 0.0
  %3476 = vmatprep.mubr.f32.mxu0 0.0
  %3477 = vmatmul.mubr.f32.gmra.mrb[0].mxu0 %v3362
  %v3478 = vpop.f32.mrb[0].mxu0
  %v3479 = vadd.f32 %v3359, %v3478
  %v3480 = vpop.f32.mrb[0].mxu0
  %3481 = vmatprep.mubr.f32.mxu0 0.0
  %3482 = vmatmul.mubr.f32.gmra.mrb[0].mxu0 %v3365
  %v3483 = vpop.f32.mrb[0].mxu0
  %v3484 = vadd.f32 %v3359, %v3483
  %v3485 = vpop.f32.mrb[0].mxu0
  %3486 = vmatprep.mubr.f32.mxu0 0.0
  %3487 = vmatmul.mubr.f32.gmra.mrb[0].mxu0 %v3368
  %v3488 = vpop.f32.mrb[0].mxu0
  %v3489 = vadd.f32 %v3359, %v3488
  %v3490 = vpop.f32.mrb[0].mxu0
  %3491 = vmatprep.mubr.f32.mxu0 0.0
  %3492 = vmatmul.mubr.f32.gmra.mrb[0].mxu0 %v3371
  %v3493 = vpop.f32.mrb[0].mxu0
  %v3494 = vadd.f32 %v3359, %v3493
  %v3495 = vpop.f32.mrb[0].mxu0
  %3496 = vmatprep.mubr.f32.mxu0 0.0
  %3497 = vmatmul.mubr.f32.gmra.mrb[0].mxu0 %v3374
  %v3498 = vpop.f32.mrb[0].mxu0
  %v3499 = vadd.f32 %v3359, %v3498
  %v3500 = vpop.f32.mrb[0].mxu0
  %3501 = vmatprep.mubr.f32.mxu0 0.0
  %3502 = vmatmul.mubr.f32.gmra.mrb[0].mxu0 %v3377
  %v3503 = vpop.f32.mrb[0].mxu0
  %v3504 = vadd.f32 %v3359, %v3503
  %v3505 = vpop.f32.mrb[0].mxu0
  %3506 = vmatprep.mubr.f32.mxu0 0.0
  %3507 = vmatmul.mubr.f32.gmra.mrb[0].mxu0 %v3380
  %v3508 = vpop.f32.mrb[0].mxu0
  %v3509 = vadd.f32 %v3359, %v3508
  %v3510 = vpop.f32.mrb[0].mxu0
  %3511 = vmatprep.mubr.f32.mxu0 0.0
  %3512 = vmatmul.mubr.f32.gmra.mrb[0].mxu0 %v3383
  %v3513 = vpop.f32.mrb[0].mxu0
  %v3514 = vadd.f32 %v3359, %v3513
  %v3515 = vpop.f32.mrb[0].mxu0
  %3516 = vmatprep.mubr.f32.mxu0 0.0
  %3517 = vmatmul.mubr.f32.gmra.mrb[0].mxu0 %v3386
  %v3518 = vpop.f32.mrb[0].mxu0
  %v3519 = vadd.f32 %v3359, %v3518
  %v3520 = vpop.f32.mrb[0].mxu0
  %3521 = vmatprep.mubr.f32.mxu0 0.0
  %3522 = vmatmul.mubr.f32.gmra.mrb[0].mxu0 %v3389
  %v3523 = vpop.f32.mrb[0].mxu0
  %v3524 = vadd.f32 %v3359, %v3523
  %v3525 = vpop.f32.mrb[0].mxu0
  %3526 = vmatprep.mubr.f32.mxu0 0.0
  %3527 = vmatmul.mubr.f32.gmra.mrb[0].mxu0 %v3392
  %v3528 = vpop.f32.mrb[0].mxu0
  %v3529 = vadd.f32 %v3359, %v3528
  %v3530 = vpop.f32.mrb[0].mxu0
  %3531 = vmatprep.mubr.f32.mxu0 0.0
  %3532 = vmatmul.mubr.f32.gmra.mrb[0].mxu0 %v3395
  %v3533 = vpop.f32.mrb[0].mxu0
  %v3534 = vadd.f32 %v3359, %v3533
  %v3535 = vpop.f32.mrb[0].mxu0
  %3536 = vmatprep.mubr.f32.mxu0 0.0
  %3537 = vmatmul.mubr.f32.gmra.mrb[0].mxu0 %v3398
  %v3538 = vpop.f32.mrb[0].mxu0
  %v3539 = vadd.f32 %v3359, %v3538
  %v3540 = vpop.f32.mrb[0].mxu0
  %3541 = vmatprep.mubr.f32.mxu0 0.0
  %3542 = vmatmul.mubr.f32.gmra.mrb[0].mxu0 %v3401
  %v3543 = vpop.f32.mrb[0].mxu0
  %v3544 = vadd.f32 %v3359, %v3543
  %v3545 = vpop.f32.mrb[0].mxu0
  %3546 = vmatprep.mubr.f32.mxu0 0.0
  %3547 = vmatmul.mubr.f32.gmra.mrb[0].mxu0 %v3404
  %v3548 = vpop.f32.mrb[0].mxu0
  %v3549 = vadd.f32 %v3359, %v3548
  %v3550 = vpop.f32.mrb[0].mxu0
  %3551 = vmatprep.mubr.f32.mxu0 0.0
  %3552 = vmatmul.mubr.f32.gmra.mrb[0].mxu0 %v3407
  %v3553 = vpop.f32.mrb[0].mxu0
  %v3554 = vadd.f32 %v3359, %v3553
  %v3555 = vpop.f32.mrb[0].mxu0
  %3556 = vdwg.mxu0
  %v3557 = vadd.f32 %v3479, %v3276
  %v3558 = vadd.f32 %v3484, %v3281
  %v3559 = vadd.f32 %v3489, %v3286
  %v3560 = vadd.f32 %v3494, %v3291
  %v3561 = vadd.f32 %v3499, %v3296
  %v3562 = vadd.f32 %v3504, %v3301
  %v3563 = vadd.f32 %v3509, %v3306
  %v3564 = vadd.f32 %v3514, %v3311
  %v3565 = vadd.f32 %v3519, %v3316
  %v3566 = vadd.f32 %v3524, %v3321
  %v3567 = vadd.f32 %v3529, %v3326
  %v3568 = vadd.f32 %v3534, %v3331
  %v3569 = vadd.f32 %v3539, %v3336
  %v3570 = vadd.f32 %v3544, %v3341
  %v3571 = vadd.f32 %v3549, %v3346
  %v3572 = vadd.f32 %v3554, %v3351
  %v3573 = vld [vmem:[%s8] sm:$0x1]
  %v3575 = vlaneseq
  %v3576 = vshrl.u32 %v3575, 7
  %v3577 = vsub.s32 0, %v3576
  %v3578 = vrot.slane %v3573, %v3577
  %v3580 = vadd.f32 %v3557, %v3578
  %v3581 = vadd.f32 %v3558, %v3578
  %v3582 = vadd.f32 %v3559, %v3578
  %v3583 = vadd.f32 %v3560, %v3578
  %v3584 = vadd.f32 %v3561, %v3578
  %v3585 = vadd.f32 %v3562, %v3578
  %v3586 = vadd.f32 %v3563, %v3578
  %v3587 = vadd.f32 %v3564, %v3578
  %v3588 = vadd.f32 %v3565, %v3578
  %v3589 = vadd.f32 %v3566, %v3578
  %v3590 = vadd.f32 %v3567, %v3578
  %v3591 = vadd.f32 %v3568, %v3578
  %v3592 = vadd.f32 %v3569, %v3578
  %v3593 = vadd.f32 %v3570, %v3578
  %v3594 = vadd.f32 %v3571, %v3578
  %v3595 = vadd.f32 %v3572, %v3578
  %v3596 = vmax.f32 %v3580, 0.0
  %v3597 = vmax.f32 %v3581, 0.0
  %v3598 = vmax.f32 %v3582, 0.0
  %v3599 = vmax.f32 %v3583, 0.0
  %v3600 = vmax.f32 %v3584, 0.0
  %v3601 = vmax.f32 %v3585, 0.0
  %v3602 = vmax.f32 %v3586, 0.0
  %v3603 = vmax.f32 %v3587, 0.0
  %v3604 = vmax.f32 %v3588, 0.0
  %v3605 = vmax.f32 %v3589, 0.0
  %v3606 = vmax.f32 %v3590, 0.0
  %v3607 = vmax.f32 %v3591, 0.0
  %v3608 = vmax.f32 %v3592, 0.0
  %v3609 = vmax.f32 %v3593, 0.0
  %v3610 = vmax.f32 %v3594, 0.0
  %v3611 = vmax.f32 %v3595, 0.0
  %vm3612 = vcmask 64512
  %3613 = vst.msk [vmem:[%s11] sm:$0xff] %vm3612, %v3596
  %3614 = vst.msk [vmem:[%s11 + $0x8] sm:$0xff] %vm3612, %v3597
  %3615 = vst.msk [vmem:[%s11 + $0x10] sm:$0xff] %vm3612, %v3598
  %3616 = vst.msk [vmem:[%s11 + $0x18] sm:$0xff] %vm3612, %v3599
  %3617 = vst.msk [vmem:[%s11 + $0x20] sm:$0xff] %vm3612, %v3600
  %3618 = vst.msk [vmem:[%s11 + $0x28] sm:$0xff] %vm3612, %v3601
  %3619 = vst.msk [vmem:[%s11 + $0x30] sm:$0xff] %vm3612, %v3602
  %3620 = vst.msk [vmem:[%s11 + $0x38] sm:$0xff] %vm3612, %v3603
  %3621 = vst.msk [vmem:[%s11 + $0x40] sm:$0xff] %vm3612, %v3604
  %3622 = vst.msk [vmem:[%s11 + $0x48] sm:$0xff] %vm3612, %v3605
  %3623 = vst.msk [vmem:[%s11 + $0x50] sm:$0xff] %vm3612, %v3606
  %3624 = vst.msk [vmem:[%s11 + $0x58] sm:$0xff] %vm3612, %v3607
  %3625 = vst.msk [vmem:[%s11 + $0x60] sm:$0xff] %vm3612, %v3608
  %3626 = vst.msk [vmem:[%s11 + $0x68] sm:$0xff] %vm3612, %v3609
  %3627 = vst.msk [vmem:[%s11 + $0x70] sm:$0xff] %vm3612, %v3610
  %3628 = vst.msk [vmem:[%s11 + $0x78] sm:$0xff] %vm3612, %v3611
  // Predicated region
  $region46: #{tpu_custom_call.1} parent=0 // pred_check
    _
  $region47: #{tpu_custom_call.1} parent=0 // pred_check_branch
    %3630 = sbr.rel (0) target = $region49
  $region48: #{tpu_custom_call.1} parent=0 // pred_region
    _
  $region49: #{tpu_custom_call.1} parent=0 // pred_fallthru
    _
  // Predicated region
  $region50: #{tpu_custom_call.1} parent=0 // pred_check
    _
  $region51: #{tpu_custom_call.1} parent=0 // pred_check_branch
    %3632 = sbr.rel (0) target = $region53
  $region52: #{tpu_custom_call.1} parent=0 // pred_region
    _
  $region53: #{tpu_custom_call.1} parent=0 // pred_fallthru
    _

</llo_original>
